<compile_context>
chip_gen: v7x
topology: tpu7x:2x2x1
jax: 0.10.0
libtpu: 0.0.40
codegen_flags: <defaults>
</compile_context>

<pallas_src>
import functools

import jax
import jax.numpy as jnp
from jax.experimental import pallas as pl
from jax.experimental.pallas import tpu as pltpu


# ------------------------------ tuning --------------------------------------

def _round_up(x, m):
    return (x + m - 1) // m * m


def _tuning():
    """Per-generation tile sizes / scoped-VMEM budget (sweep for production)."""
    kind = jax.devices()[0].device_kind.lower()
    if "v5" in kind or "v6" in kind:
        # 128 MiB physical VMEM: larger edge tiles, higher scoped limit.
        return dict(node_tile=256, edge_tile=1024, vmem_limit=100 * 1024 * 1024)
    # v7x has only 64 MiB per TC -> leave headroom; also the safe default for
    # unknown backends / interpret mode.
    return dict(node_tile=256, edge_tile=512, vmem_limit=48 * 1024 * 1024)


def _choose_node_tile(n, pref):
    if n <= pref:
        t = _round_up(max(n, 1), 8)
        return t, t
    return pref, _round_up(n, pref)


def _choose_edge_tile(e, pref):
    # The edge axis lands in the lane position of the scatter operand and the
    # scorer output -> keep it 128-aligned even for tiny graphs.
    if e <= pref:
        t = _round_up(max(e, 1), 128)
        return t, t
    return pref, _round_up(e, pref)


# ----------------------------- Pallas kernels -------------------------------

def _edge_msg_kernel(x_src_ref, rel_sel_ref, w_rel_cat_ref, msg_ref, *, n_rel, d_out):
    """Per-edge messages: msg[e] = edge_norm[e] * (x_src[e] @ w_rel[ety[e]]).

    One block matmul against all relations, then a lane-aligned per-relation
    select with the pre-scaled one-hot (rel_sel = one_hot(ety) * edge_norm).
    Computed ONCE per forward (independent of node tiles).
    """
    proj = jnp.dot(x_src_ref[...], w_rel_cat_ref[...],
                   preferred_element_type=jnp.float32)            # (te, R*Dout) f32
    msg = rel_sel_ref[:, 0:1] * proj[:, 0:d_out]
    for ridx in range(1, n_rel):
        msg += rel_sel_ref[:, ridx:ridx + 1] * proj[:, ridx * d_out:(ridx + 1) * d_out]
    msg_ref[...] = msg
    # TODO(synk): for large relation counts, replace this with a relation-grouped
    # matmul (edges sorted by relation + scalar-prefetched group offsets).


def _rgcn_agg_kernel(x_ref, w_root_ref, bias_ref, dst_onehot_ref, msg_ref,
                     x_out_ref, acc_ref, *, apply_tanh):
    """Node aggregation: out = x @ w_root + bias + scatter_add(dst, msg).

    Grid = (node tiles [parallel], edge tiles [arbitrary]); VMEM accumulator.
    """
    j = pl.program_id(1)

    @pl.when(j == 0)
    def _():
        acc_ref[...] = (jnp.dot(x_ref[...], w_root_ref[...],
                                preferred_element_type=jnp.float32)
                        + bias_ref[...])

    # Scatter-add as a one-hot matmul; dst_onehot streamed bf16, dot in f32.
    acc_ref[...] += jnp.dot(dst_onehot_ref[...].astype(jnp.float32), msg_ref[...],
                            preferred_element_type=jnp.float32)

    @pl.when(j == pl.num_programs(1) - 1)
    def _():
        out = acc_ref[...]
        if apply_tanh:
            out = jnp.tanh(out)
        x_out_ref[...] = out


def _mlp_score_kernel(h_ref, r_ref, t_ref, w0h_ref, w0r_ref, w0t_ref,
                      b0_ref, w1_ref, b1_ref, out_ref):
    """sigmoid(lin1(relu(lin0(normalize(cat[h,r,t]))))) with lane-dense output."""
    h = h_ref[...].astype(jnp.float32)
    r = r_ref[...].astype(jnp.float32)
    t = t_ref[...].astype(jnp.float32)
    # F.normalize(cat([h, r, t], dim=1)): row L2 norm from three partial sums.
    sumsq = (jnp.sum(h * h, axis=1, keepdims=True)
             + jnp.sum(r * r, axis=1, keepdims=True)
             + jnp.sum(t * t, axis=1, keepdims=True))
    inv_norm = jax.lax.rsqrt(jnp.maximum(sumsq, 1e-24))           # eps matches F.normalize
    # normalize(cat) @ W0 == inv_norm * (h @ W0h + r @ W0r + t @ W0t)
    pre = (jnp.dot(h, w0h_ref[...], preferred_element_type=jnp.float32)
           + jnp.dot(r, w0r_ref[...], preferred_element_type=jnp.float32)
           + jnp.dot(t, w0t_ref[...], preferred_element_type=jnp.float32))
    h1 = jnp.maximum(pre * inv_norm + b0_ref[...], 0.0)           # relu(lin0)
    # Final D -> 1 projection as a VPU reduction; store as a lane-dense row.
    logits = jnp.sum(h1 * w1_ref[...], axis=1) + b1_ref[0, 0]     # (te,)
    out_ref[0, :] = jax.nn.sigmoid(logits)


# ------------------------------ wrappers -------------------------------------

def _edge_messages(x_src, rel_sel, w_rel_cat, *, te, d_out, n_rel, vmem_limit):
    e_pad, din = x_src.shape
    kernel = functools.partial(_edge_msg_kernel, n_rel=n_rel, d_out=d_out)
    return pl.pallas_call(
        kernel,
        out_shape=jax.ShapeDtypeStruct((e_pad, d_out), jnp.float32),
        grid_spec=pltpu.PrefetchScalarGridSpec(
            num_scalar_prefetch=0,
            grid=(e_pad // te,),
            in_specs=[
                pl.BlockSpec((te, din), lambda i: (i, 0)),            # x_src (f32)
                pl.BlockSpec((te, n_rel), lambda i: (i, 0)),          # rel one-hot * norm
                pl.BlockSpec((din, n_rel * d_out), lambda i: (0, 0)), # all relation weights
            ],
            out_specs=pl.BlockSpec((te, d_out), lambda i: (i, 0)),
        ),
        compiler_params=pltpu.CompilerParams(
            dimension_semantics=("parallel",),
            vmem_limit_bytes=vmem_limit),
    )(x_src, rel_sel, w_rel_cat)


def _rgcn_aggregate(x_pad, w_root, bias, dst_onehot, msg, *, tn, te,
                    apply_tanh, vmem_limit):
    n_pad, din = x_pad.shape
    e_pad, dout = msg.shape
    grid = (n_pad // tn, e_pad // te)
    kernel = functools.partial(_rgcn_agg_kernel, apply_tanh=apply_tanh)
    return pl.pallas_call(
        kernel,
        out_shape=jax.ShapeDtypeStruct((n_pad, dout), jnp.float32),
        grid_spec=pltpu.PrefetchScalarGridSpec(
            num_scalar_prefetch=0,
            grid=grid,
            in_specs=[
                pl.BlockSpec((tn, din), lambda i, j: (i, 0)),    # x (f32)
                pl.BlockSpec((din, dout), lambda i, j: (0, 0)),  # w_root (f32)
                pl.BlockSpec((1, dout), lambda i, j: (0, 0)),    # bias (f32)
                pl.BlockSpec((tn, te), lambda i, j: (i, j)),     # dst one-hot (bf16)
                pl.BlockSpec((te, dout), lambda i, j: (j, 0)),   # precomputed msg (f32)
            ],
            out_specs=pl.BlockSpec((tn, dout), lambda i, j: (i, 0)),
            scratch_shapes=[pltpu.VMEM((tn, dout), jnp.float32)],
        ),
        compiler_params=pltpu.CompilerParams(
            dimension_semantics=("parallel", "arbitrary"),
            vmem_limit_bytes=vmem_limit),
    )(x_pad, w_root, bias, dst_onehot, msg)


def rgcn_model_forward(p, edge_index, edge_type, edge_norm=None):
    """Encoder/decoder: single RGCNConv layer (gcn_layer=1 -> act=None) + r @ w_rel."""
    x0 = p["init_embed"]                       # (N, Din) f32
    w_rel = p["conv_w_rel"]                    # (R2, Din, Dout)
    n, din = x0.shape
    r2, _, dout = w_rel.shape
    e = edge_index.shape[1]

    cfg = _tuning()
    tn, n_pad = _choose_node_tile(n, cfg["node_tile"])
    te, e_pad = _choose_edge_tile(e, cfg["edge_tile"])

    src = jnp.zeros((e_pad,), jnp.int32).at[:e].set(edge_index[0])
    dst = jnp.full((e_pad,), -1, jnp.int32).at[:e].set(edge_index[1])
    ety = jnp.full((e_pad,), -1, jnp.int32).at[:e].set(edge_type)
    if edge_norm is None:
        edge_norm = jnp.ones((e, 1), jnp.float32)
    enorm = jnp.zeros((e_pad, 1), jnp.float32).at[:e].set(edge_norm)

    # XLA glue: source-row gather, relation selector, destination one-hot.
    # TODO(synk): for large graphs, gather source rows via in-pipeline DMA and
    # replace the dense O(N*E) one-hot scatter with edges sorted by destination
    # plus scalar-prefetched per-node-tile edge offsets.
    x_src = x0[src]                                                   # (E_pad, Din) f32
    rel_sel = jax.nn.one_hot(ety, r2, dtype=jnp.float32) * enorm      # padded rows -> 0
    dst_onehot = (jnp.arange(n_pad, dtype=jnp.int32)[:, None] == dst[None, :]
                  ).astype(jnp.bfloat16)                              # (N_pad, E_pad), no transpose

    x_pad = jnp.zeros((n_pad, din), jnp.float32).at[:n].set(x0)
    # (R2, Din, Dout) -> (Din, R2*Dout): one edge-block matmul covers all relations.
    w_rel_cat = jnp.transpose(w_rel, (1, 0, 2)).reshape(din, r2 * dout)

    # 1) Per-edge messages, computed once (independent of node tiling).
    msg = _edge_messages(x_src, rel_sel, w_rel_cat, te=te, d_out=dout,
                         n_rel=r2, vmem_limit=cfg["vmem_limit"])
    # 2) Node aggregation: root transform + bias + scatter-add of messages.
    x_out = _rgcn_aggregate(x_pad, p["conv_w_root"], p["conv_bias"], dst_onehot, msg,
                            tn=tn, te=te, apply_tanh=False,   # gcn_layer == 1 -> act None
                            vmem_limit=cfg["vmem_limit"])
    # Dropout(hid_drop=0.0) is the identity in this deterministic setup.
    # Tiny relation projection: plain XLA matmul, off the conv critical path.
    r_out = jnp.dot(p["init_rel"], p["w_rel"])
    return x_out[:n], r_out


def mlp_score(x, r, edge_index, edge_type, lins):
    e = edge_index.shape[1]
    d = x.shape[1]
    cfg = _tuning()
    te, e_pad = _choose_edge_tile(e, cfg["edge_tile"])
    n_et = e_pad // te

    src = jnp.zeros((e_pad,), jnp.int32).at[:e].set(edge_index[0])
    dst = jnp.zeros((e_pad,), jnp.int32).at[:e].set(edge_index[1])
    ety = jnp.zeros((e_pad,), jnp.int32).at[:e].set(edge_type)

    # The scorer is HBM-bandwidth bound: stream h/r/t as bf16, upcast in-kernel.
    # TODO(synk): at large E these gathers should be DMA'd inside the pipeline.
    h = x[src].astype(jnp.bfloat16)             # (E_pad, D)
    t = x[dst].astype(jnp.bfloat16)
    re = r[ety].astype(jnp.bfloat16)

    w0 = lins["w0"]                             # (3D, D) split into three (D, D) blocks
    w0h, w0r, w0t = w0[:d], w0[d:2 * d], w0[2 * d:]
    w1_row = lins["w1"].reshape(1, d)           # (D, 1) -> (1, D) row for VPU reduction

    score_tiles = pl.pallas_call(
        _mlp_score_kernel,
        out_shape=jax.ShapeDtypeStruct((n_et, te), jnp.float32),   # lane-dense output
        grid_spec=pltpu.PrefetchScalarGridSpec(
            num_scalar_prefetch=0,
            grid=(n_et,),
            in_specs=[
                pl.BlockSpec((te, d), lambda i: (i, 0)),            # h (bf16)
                pl.BlockSpec((te, d), lambda i: (i, 0)),            # r (bf16)
                pl.BlockSpec((te, d), lambda i: (i, 0)),            # t (bf16)
                pl.BlockSpec((d, d), lambda i: (0, 0)),             # w0h (f32)
                pl.BlockSpec((d, d), lambda i: (0, 0)),             # w0r (f32)
                pl.BlockSpec((d, d), lambda i: (0, 0)),             # w0t (f32)
                pl.BlockSpec((1, d), lambda i: (0, 0)),             # b0 (f32)
                pl.BlockSpec((1, d), lambda i: (0, 0)),             # w1 row (f32)
                pl.BlockSpec(memory_space=pltpu.MemorySpace.SMEM),  # b1 scalar
            ],
            out_specs=pl.BlockSpec((1, te), lambda i: (i, 0)),
        ),
        compiler_params=pltpu.CompilerParams(
            dimension_semantics=("parallel",),
            vmem_limit_bytes=cfg["vmem_limit"]),
    )(h, re, t, w0h, w0r, w0t, lins["b0"], w1_row, lins["b1"])
    return score_tiles.reshape(e_pad, 1)[:e]


def gumbel_softmax_hard(key, score, tau=0.1):
    # Forward value of hard gumbel-softmax over dim 0 of stack([score, 1-score]), comp 0.
    # TODO(synk): straight-through gradient estimator not modeled (forward-only).
    logits = jnp.stack([score, 1.0 - score], axis=0)            # (2, E, 1)
    g = jax.random.gumbel(key, logits.shape, dtype=jnp.float32)
    y = (logits + g) / tau
    return (jnp.argmax(y, axis=0) == 0).astype(jnp.float32)     # (E, 1)


def rgcn_ae_forward(params, edge_index, edge_type, gumbel_key, no_gumbel=False):
    x, r = rgcn_model_forward(params["encoder"], edge_index, edge_type, None)
    score = mlp_score(x, r, edge_index, edge_type, params["enc_lins"])
    gsm_score = gumbel_softmax_hard(gumbel_key, score)
    edge_norm = score if no_gumbel else gsm_score
    x_, r_ = rgcn_model_forward(params["decoder"], edge_index, edge_type, edge_norm)
    return x_, r_, gsm_score, score


# ------------------------------ init ----------------------------------------

def init_rgcn_model_params(key, n_ent, dim, n_rel2):
    ks = jax.random.split(key, 5)
    s = 0.1
    return dict(
        init_embed=jax.random.normal(ks[0], (n_ent, dim), jnp.float32) * s,
        init_rel=jax.random.normal(ks[1], (n_rel2, dim), jnp.float32) * s,
        w_rel=jax.random.normal(ks[2], (dim, dim), jnp.float32) * s,
        conv_w_rel=jax.random.normal(ks[3], (n_rel2, dim, dim), jnp.float32) * s,
        conv_w_root=jax.random.normal(ks[4], (dim, dim), jnp.float32) * s,
        conv_bias=jnp.zeros((1, dim), jnp.float32),
    )


def init_params(key, n_ent, dim, n_rel):
    n_rel2 = 2 * n_rel  # edge types cover forward + inverse relations
    k_enc, k_dec, k0, k1 = jax.random.split(key, 4)
    enc_lins = dict(
        w0=jax.random.normal(k0, (3 * dim, dim), jnp.float32) * 0.05,
        b0=jnp.ones((1, dim), jnp.float32),     # enc_lins[0].bias = ones(embed_dim)
        w1=jax.random.normal(k1, (dim, 1), jnp.float32) * 0.05,
        b1=jnp.ones((1, 1), jnp.float32),       # enc_lins[1].bias = ones(1)
    )
    # dec_lins exist in the module but are never used in forward() -> omitted.
    return dict(
        encoder=init_rgcn_model_params(k_enc, n_ent, dim, n_rel2),
        decoder=init_rgcn_model_params(k_dec, n_ent, dim, n_rel2),
        enc_lins=enc_lins,
    )


# ------------------------------- main ----------------------------------------

if __name__ == "__main__":
    NUM_ENT = 64        # num_ent
    EMBED_DIM = 128     # init_dim = gcn_dim = embed_dim (gcn_layer = 1)
    NUM_REL = 4         # num_rel  (2*num_rel relation embeddings / weights)
    NUM_EDGES = 32

    root = jax.random.PRNGKey(0)
    k_param, k_src, k_dst, k_rel, k_gumbel = jax.random.split(root, 5)

    params = init_params(k_param, NUM_ENT, EMBED_DIM, NUM_REL)

    src = jax.random.randint(k_src, (NUM_EDGES,), 0, NUM_ENT)
    dst = jax.random.randint(k_dst, (NUM_EDGES,), 0, NUM_ENT)
    edge_index = jnp.stack([src, dst], axis=0).astype(jnp.int32)        # (2, E)
    edge_type = jax.random.randint(k_rel, (NUM_EDGES,), 0, 2 * NUM_REL).astype(jnp.int32)

    fwd = jax.jit(functools.partial(rgcn_ae_forward, no_gumbel=False))
    x_, r_, gsm_score, score = fwd(params, edge_index, edge_type, k_gumbel)
    jax.block_until_ready((x_, r_, gsm_score, score))

    assert x_.shape == (NUM_ENT, EMBED_DIM)
    assert r_.shape == (2 * NUM_REL, EMBED_DIM)
    assert gsm_score.shape == (NUM_EDGES, 1)
    assert score.shape == (NUM_EDGES, 1)
    assert bool(jnp.all(jnp.isfinite(x_)))
    assert bool(jnp.all(jnp.isfinite(r_)))
    assert bool(jnp.all(jnp.isfinite(score)))
    print("KERNEL_OK")
</pallas_src>

<mosaic_0001>
module attributes {stable_mosaic.version = 11 : i64} {
  func.func @_edge_msg_kernel(%arg0: i32, %arg1: memref<128x128xf32, #tpu.memory_space<vmem>>, %arg2: memref<128x8xf32, #tpu.memory_space<vmem>>, %arg3: memref<128x1024xf32, #tpu.memory_space<vmem>>, %arg4: memref<128x128xf32, #tpu.memory_space<vmem>>) attributes {dimension_semantics = [#tpu.dimension_semantics<parallel>], iteration_bounds = array<i64: 1>, scalar_prefetch = 0 : i64, scratch_operands = 0 : i64, tpu.core_type = #tpu.core_type<tc>, window_params = [{transform_indices = @transform_0, window_bounds = array<i64: 128, 128>}, {transform_indices = @transform_1, window_bounds = array<i64: 128, 8>}, {pipeline_mode = #tpu.pipeline_mode<synchronous>, transform_indices = @transform_2, window_bounds = array<i64: 128, 1024>}, {transform_indices = @transform_3, window_bounds = array<i64: 128, 128>}]} {
    %c0 = arith.constant 0 : index
    %c0_0 = arith.constant 0 : index
    %0 = vector.load %arg1[%c0, %c0_0] : memref<128x128xf32, #tpu.memory_space<vmem>>, vector<128x128xf32>
    %c0_1 = arith.constant 0 : index
    %c0_2 = arith.constant 0 : index
    %1 = vector.load %arg3[%c0_1, %c0_2] : memref<128x1024xf32, #tpu.memory_space<vmem>>, vector<128x1024xf32>
    %cst = arith.constant dense<0.000000e+00> : vector<128x1024xf32>
    %2 = tpu.matmul %0, %1, %cst {dimension_numbers = #tpu.dot_dimension_numbers<[1], [0], [0], [1], [0, 0, 1, 1], [], []>} : vector<128x128xf32>, vector<128x1024xf32>, vector<128x1024xf32> -> vector<128x1024xf32>
    %c0_3 = arith.constant 0 : index
    %c0_4 = arith.constant 0 : index
    %3 = vector.load %arg2[%c0_3, %c0_4] : memref<128x8xf32, #tpu.memory_space<vmem>>, vector<128x1xf32>
    %4 = vector.extract_strided_slice %2 {offsets = [0, 0], sizes = [128, 128], strides = [1, 1]} : vector<128x1024xf32> to vector<128x128xf32>
    %5 = vector.broadcast %3 : vector<128x1xf32> to vector<128x128xf32>
    %6 = arith.mulf %5, %4 : vector<128x128xf32>
    %c0_5 = arith.constant 0 : index
    %c1 = arith.constant 1 : index
    %7 = vector.load %arg2[%c0_5, %c1] : memref<128x8xf32, #tpu.memory_space<vmem>>, vector<128x1xf32>
    %8 = vector.extract_strided_slice %2 {offsets = [0, 128], sizes = [128, 128], strides = [1, 1]} : vector<128x1024xf32> to vector<128x128xf32>
    %9 = vector.broadcast %7 : vector<128x1xf32> to vector<128x128xf32>
    %10 = arith.mulf %9, %8 : vector<128x128xf32>
    %11 = arith.addf %6, %10 : vector<128x128xf32>
    %c0_6 = arith.constant 0 : index
    %c2 = arith.constant 2 : index
    %12 = vector.load %arg2[%c0_6, %c2] : memref<128x8xf32, #tpu.memory_space<vmem>>, vector<128x1xf32>
    %13 = vector.extract_strided_slice %2 {offsets = [0, 256], sizes = [128, 128], strides = [1, 1]} : vector<128x1024xf32> to vector<128x128xf32>
    %14 = vector.broadcast %12 : vector<128x1xf32> to vector<128x128xf32>
    %15 = arith.mulf %14, %13 : vector<128x128xf32>
    %16 = arith.addf %11, %15 : vector<128x128xf32>
    %c0_7 = arith.constant 0 : index
    %c3 = arith.constant 3 : index
    %17 = vector.load %arg2[%c0_7, %c3] : memref<128x8xf32, #tpu.memory_space<vmem>>, vector<128x1xf32>
    %18 = vector.extract_strided_slice %2 {offsets = [0, 384], sizes = [128, 128], strides = [1, 1]} : vector<128x1024xf32> to vector<128x128xf32>
    %19 = vector.broadcast %17 : vector<128x1xf32> to vector<128x128xf32>
    %20 = arith.mulf %19, %18 : vector<128x128xf32>
    %21 = arith.addf %16, %20 : vector<128x128xf32>
    %c0_8 = arith.constant 0 : index
    %c4 = arith.constant 4 : index
    %22 = vector.load %arg2[%c0_8, %c4] : memref<128x8xf32, #tpu.memory_space<vmem>>, vector<128x1xf32>
    %23 = vector.extract_strided_slice %2 {offsets = [0, 512], sizes = [128, 128], strides = [1, 1]} : vector<128x1024xf32> to vector<128x128xf32>
    %24 = vector.broadcast %22 : vector<128x1xf32> to vector<128x128xf32>
    %25 = arith.mulf %24, %23 : vector<128x128xf32>
    %26 = arith.addf %21, %25 : vector<128x128xf32>
    %c0_9 = arith.constant 0 : index
    %c5 = arith.constant 5 : index
    %27 = vector.load %arg2[%c0_9, %c5] : memref<128x8xf32, #tpu.memory_space<vmem>>, vector<128x1xf32>
    %28 = vector.extract_strided_slice %2 {offsets = [0, 640], sizes = [128, 128], strides = [1, 1]} : vector<128x1024xf32> to vector<128x128xf32>
    %29 = vector.broadcast %27 : vector<128x1xf32> to vector<128x128xf32>
    %30 = arith.mulf %29, %28 : vector<128x128xf32>
    %31 = arith.addf %26, %30 : vector<128x128xf32>
    %c0_10 = arith.constant 0 : index
    %c6 = arith.constant 6 : index
    %32 = vector.load %arg2[%c0_10, %c6] : memref<128x8xf32, #tpu.memory_space<vmem>>, vector<128x1xf32>
    %33 = vector.extract_strided_slice %2 {offsets = [0, 768], sizes = [128, 128], strides = [1, 1]} : vector<128x1024xf32> to vector<128x128xf32>
    %34 = vector.broadcast %32 : vector<128x1xf32> to vector<128x128xf32>
    %35 = arith.mulf %34, %33 : vector<128x128xf32>
    %36 = arith.addf %31, %35 : vector<128x128xf32>
    %c0_11 = arith.constant 0 : index
    %c7 = arith.constant 7 : index
    %37 = vector.load %arg2[%c0_11, %c7] : memref<128x8xf32, #tpu.memory_space<vmem>>, vector<128x1xf32>
    %38 = vector.extract_strided_slice %2 {offsets = [0, 896], sizes = [128, 128], strides = [1, 1]} : vector<128x1024xf32> to vector<128x128xf32>
    %39 = vector.broadcast %37 : vector<128x1xf32> to vector<128x128xf32>
    %40 = arith.mulf %39, %38 : vector<128x128xf32>
    %41 = arith.addf %36, %40 : vector<128x128xf32>
    %c0_12 = arith.constant 0 : index
    %c0_13 = arith.constant 0 : index
    %42 = vector.load %arg4[%c0_12, %c0_13] : memref<128x128xf32, #tpu.memory_space<vmem>>, vector<128x128xf32>
    tpu.vector_store %arg4[%c0_12, %c0_13], %41 {strides = array<i32>} : memref<128x128xf32, #tpu.memory_space<vmem>>, vector<128x128xf32>,
    return
  }
  func.func @transform_0(%arg0: i32) -> (i32, i32) {
    %c0_i32 = arith.constant 0 : i32
    %c0_i32_0 = arith.constant 0 : i32
    return %arg0, %c0_i32 : i32, i32
  }
  func.func @transform_1(%arg0: i32) -> (i32, i32) {
    %c0_i32 = arith.constant 0 : i32
    %c0_i32_0 = arith.constant 0 : i32
    return %arg0, %c0_i32 : i32, i32
  }
  func.func @transform_2(%arg0: i32) -> (i32, i32) {
    %c0_i32 = arith.constant 0 : i32
    %c0_i32_0 = arith.constant 0 : i32
    %c0_i32_1 = arith.constant 0 : i32
    return %c0_i32, %c0_i32_0 : i32, i32
  }
  func.func @transform_3(%arg0: i32) -> (i32, i32) {
    %c0_i32 = arith.constant 0 : i32
    %c0_i32_0 = arith.constant 0 : i32
    return %arg0, %c0_i32 : i32, i32
  }
}

module attributes {stable_mosaic.version = 11 : i64} {
  func.func @_rgcn_agg_kernel(%arg0: i32, %arg1: i32, %arg2: memref<64x128xf32, #tpu.memory_space<vmem>>, %arg3: memref<128x128xf32, #tpu.memory_space<vmem>>, %arg4: memref<1x128xf32, #tpu.memory_space<vmem>>, %arg5: memref<64x128xbf16, #tpu.memory_space<vmem>>, %arg6: memref<128x128xf32, #tpu.memory_space<vmem>>, %arg7: memref<64x128xf32, #tpu.memory_space<vmem>>, %arg8: memref<64x128xf32, #tpu.memory_space<vmem>>) attributes {dimension_semantics = [#tpu.dimension_semantics<parallel>, #tpu.dimension_semantics<arbitrary>], iteration_bounds = array<i64: 1, 1>, scalar_prefetch = 0 : i64, scratch_operands = 1 : i64, tpu.core_type = #tpu.core_type<tc>, window_params = [{transform_indices = @transform_0, window_bounds = array<i64: 64, 128>}, {pipeline_mode = #tpu.pipeline_mode<synchronous>, transform_indices = @transform_1, window_bounds = array<i64: 128, 128>}, {pipeline_mode = #tpu.pipeline_mode<synchronous>, transform_indices = @transform_2, window_bounds = array<i64: 1, 128>}, {transform_indices = @transform_3, window_bounds = array<i64: 64, 128>}, {transform_indices = @transform_4, window_bounds = array<i64: 128, 128>}, {transform_indices = @transform_5, window_bounds = array<i64: 64, 128>}]} {
    %c0_i32 = arith.constant 0 : i32
    %0 = arith.cmpi eq, %arg1, %c0_i32 : i32
    %1 = arith.extui %0 : i1 to i32
    %c0_i32_0 = arith.constant 0 : i32
    %2 = arith.cmpi ne, %1, %c0_i32_0 : i32
    scf.if %2 {
      %c0_10 = arith.constant 0 : index
      %c0_11 = arith.constant 0 : index
      %13 = vector.load %arg2[%c0_10, %c0_11] : memref<64x128xf32, #tpu.memory_space<vmem>>, vector<64x128xf32>
      %c0_12 = arith.constant 0 : index
      %c0_13 = arith.constant 0 : index
      %14 = vector.load %arg3[%c0_12, %c0_13] : memref<128x128xf32, #tpu.memory_space<vmem>>, vector<128x128xf32>
      %cst_14 = arith.constant dense<0.000000e+00> : vector<64x128xf32>
      %15 = tpu.matmul %13, %14, %cst_14 {dimension_numbers = #tpu.dot_dimension_numbers<[1], [0], [0], [1], [0, 0, 1, 1], [], []>} : vector<64x128xf32>, vector<128x128xf32>, vector<64x128xf32> -> vector<64x128xf32>
      %c0_15 = arith.constant 0 : index
      %c0_16 = arith.constant 0 : index
      %16 = vector.load %arg4[%c0_15, %c0_16] : memref<1x128xf32, #tpu.memory_space<vmem>>, vector<1x128xf32>
      %17 = vector.broadcast %16 : vector<1x128xf32> to vector<64x128xf32>
      %18 = arith.addf %15, %17 : vector<64x128xf32>
      %c0_17 = arith.constant 0 : index
      %c0_18 = arith.constant 0 : index
      %19 = vector.load %arg8[%c0_17, %c0_18] : memref<64x128xf32, #tpu.memory_space<vmem>>, vector<64x128xf32>
      tpu.vector_store %arg8[%c0_17, %c0_18], %18 {strides = array<i32>} : memref<64x128xf32, #tpu.memory_space<vmem>>, vector<64x128xf32>,
    } else {
    }
    %c0 = arith.constant 0 : index
    %c0_1 = arith.constant 0 : index
    %3 = vector.load %arg8[%c0, %c0_1] : memref<64x128xf32, #tpu.memory_space<vmem>>, vector<64x128xf32>
    %c0_2 = arith.constant 0 : index
    %c0_3 = arith.constant 0 : index
    %4 = vector.load %arg5[%c0_2, %c0_3] : memref<64x128xbf16, #tpu.memory_space<vmem>>, vector<64x128xbf16>
    %5 = arith.extf %4 : vector<64x128xbf16> to vector<64x128xf32>
    %c0_4 = arith.constant 0 : index
    %c0_5 = arith.constant 0 : index
    %6 = vector.load %arg6[%c0_4, %c0_5] : memref<128x128xf32, #tpu.memory_space<vmem>>, vector<128x128xf32>
    %cst = arith.constant dense<0.000000e+00> : vector<64x128xf32>
    %7 = tpu.matmul %5, %6, %cst {dimension_numbers = #tpu.dot_dimension_numbers<[1], [0], [0], [1], [0, 0, 1, 1], [], []>} : vector<64x128xf32>, vector<128x128xf32>, vector<64x128xf32> -> vector<64x128xf32>
    %8 = arith.addf %3, %7 : vector<64x128xf32>
    %c0_6 = arith.constant 0 : index
    %c0_7 = arith.constant 0 : index
    %9 = vector.load %arg8[%c0_6, %c0_7] : memref<64x128xf32, #tpu.memory_space<vmem>>, vector<64x128xf32>
    tpu.vector_store %arg8[%c0_6, %c0_7], %8 {strides = array<i32>} : memref<64x128xf32, #tpu.memory_space<vmem>>, vector<64x128xf32>,
    %c0_i32_8 = arith.constant 0 : i32
    %10 = arith.cmpi eq, %arg1, %c0_i32_8 : i32
    %11 = arith.extui %10 : i1 to i32
    %c0_i32_9 = arith.constant 0 : i32
    %12 = arith.cmpi ne, %11, %c0_i32_9 : i32
    scf.if %12 {
      %c0_10 = arith.constant 0 : index
      %c0_11 = arith.constant 0 : index
      %13 = vector.load %arg8[%c0_10, %c0_11] : memref<64x128xf32, #tpu.memory_space<vmem>>, vector<64x128xf32>
      %c0_12 = arith.constant 0 : index
      %c0_13 = arith.constant 0 : index
      %14 = vector.load %arg7[%c0_12, %c0_13] : memref<64x128xf32, #tpu.memory_space<vmem>>, vector<64x128xf32>
      tpu.vector_store %arg7[%c0_12, %c0_13], %13 {strides = array<i32>} : memref<64x128xf32, #tpu.memory_space<vmem>>, vector<64x128xf32>,
    } else {
    }
    return
  }
  func.func @transform_0(%arg0: i32, %arg1: i32) -> (i32, i32) {
    %c0_i32 = arith.constant 0 : i32
    %c0_i32_0 = arith.constant 0 : i32
    return %arg0, %c0_i32 : i32, i32
  }
  func.func @transform_1(%arg0: i32, %arg1: i32) -> (i32, i32) {
    %c0_i32 = arith.constant 0 : i32
    %c0_i32_0 = arith.constant 0 : i32
    %c0_i32_1 = arith.constant 0 : i32
    return %c0_i32, %c0_i32_0 : i32, i32
  }
  func.func @transform_2(%arg0: i32, %arg1: i32) -> (i32, i32) {
    %c0_i32 = arith.constant 0 : i32
    %c0_i32_0 = arith.constant 0 : i32
    %c0_i32_1 = arith.constant 0 : i32
    return %c0_i32, %c0_i32_0 : i32, i32
  }
  func.func @transform_3(%arg0: i32, %arg1: i32) -> (i32, i32) {
    %c0_i32 = arith.constant 0 : i32
    return %arg0, %arg1 : i32, i32
  }
  func.func @transform_4(%arg0: i32, %arg1: i32) -> (i32, i32) {
    %c0_i32 = arith.constant 0 : i32
    %c0_i32_0 = arith.constant 0 : i32
    return %arg1, %c0_i32 : i32, i32
  }
  func.func @transform_5(%arg0: i32, %arg1: i32) -> (i32, i32) {
    %c0_i32 = arith.constant 0 : i32
    %c0_i32_0 = arith.constant 0 : i32
    return %arg0, %c0_i32 : i32, i32
  }
}

module attributes {stable_mosaic.version = 11 : i64} {
  func.func @_mlp_score_kernel(%arg0: i32, %arg1: memref<128x128xbf16, #tpu.memory_space<vmem>>, %arg2: memref<128x128xbf16, #tpu.memory_space<vmem>>, %arg3: memref<128x128xbf16, #tpu.memory_space<vmem>>, %arg4: memref<128x128xf32, #tpu.memory_space<vmem>>, %arg5: memref<128x128xf32, #tpu.memory_space<vmem>>, %arg6: memref<128x128xf32, #tpu.memory_space<vmem>>, %arg7: memref<1x128xf32, #tpu.memory_space<vmem>>, %arg8: memref<1x128xf32, #tpu.memory_space<vmem>>, %arg9: memref<1x1xf32, #tpu.memory_space<smem>>, %arg10: memref<1x128xf32, #tpu.memory_space<vmem>>) attributes {dimension_semantics = [#tpu.dimension_semantics<parallel>], iteration_bounds = array<i64: 1>, scalar_prefetch = 0 : i64, scratch_operands = 0 : i64, tpu.core_type = #tpu.core_type<tc>, window_params = [{transform_indices = @transform_0, window_bounds = array<i64: 128, 128>}, {transform_indices = @transform_1, window_bounds = array<i64: 128, 128>}, {transform_indices = @transform_2, window_bounds = array<i64: 128, 128>}, {pipeline_mode = #tpu.pipeline_mode<synchronous>, transform_indices = @transform_3, window_bounds = array<i64: 128, 128>}, {pipeline_mode = #tpu.pipeline_mode<synchronous>, transform_indices = @transform_4, window_bounds = array<i64: 128, 128>}, {pipeline_mode = #tpu.pipeline_mode<synchronous>, transform_indices = @transform_5, window_bounds = array<i64: 128, 128>}, {pipeline_mode = #tpu.pipeline_mode<synchronous>, transform_indices = @transform_6, window_bounds = array<i64: 1, 128>}, {pipeline_mode = #tpu.pipeline_mode<synchronous>, transform_indices = @transform_7, window_bounds = array<i64: 1, 128>}, {transform_indices = @transform_8, window_bounds = array<i64: 1, 1>}, {transform_indices = @transform_9, window_bounds = array<i64: 1, 128>}]} {
    %c0 = arith.constant 0 : index
    %c0_0 = arith.constant 0 : index
    %0 = vector.load %arg1[%c0, %c0_0] : memref<128x128xbf16, #tpu.memory_space<vmem>>, vector<128x128xbf16>
    %1 = arith.extf %0 : vector<128x128xbf16> to vector<128x128xf32>
    %c0_1 = arith.constant 0 : index
    %c0_2 = arith.constant 0 : index
    %2 = vector.load %arg2[%c0_1, %c0_2] : memref<128x128xbf16, #tpu.memory_space<vmem>>, vector<128x128xbf16>
    %3 = arith.extf %2 : vector<128x128xbf16> to vector<128x128xf32>
    %c0_3 = arith.constant 0 : index
    %c0_4 = arith.constant 0 : index
    %4 = vector.load %arg3[%c0_3, %c0_4] : memref<128x128xbf16, #tpu.memory_space<vmem>>, vector<128x128xbf16>
    %5 = arith.extf %4 : vector<128x128xbf16> to vector<128x128xf32>
    %6 = arith.mulf %1, %1 : vector<128x128xf32>
    %cst = arith.constant dense<0.000000e+00> : vector<128xf32>
    %7 = vector.multi_reduction <add>, %6, %cst [1] : vector<128x128xf32> to vector<128xf32>
    %8 = vector.shape_cast %7 : vector<128xf32> to vector<128x1xf32>
    %9 = arith.mulf %3, %3 : vector<128x128xf32>
    %cst_5 = arith.constant dense<0.000000e+00> : vector<128xf32>
    %10 = vector.multi_reduction <add>, %9, %cst_5 [1] : vector<128x128xf32> to vector<128xf32>
    %11 = vector.shape_cast %10 : vector<128xf32> to vector<128x1xf32>
    %12 = arith.addf %8, %11 : vector<128x1xf32>
    %13 = arith.mulf %5, %5 : vector<128x128xf32>
    %cst_6 = arith.constant dense<0.000000e+00> : vector<128xf32>
    %14 = vector.multi_reduction <add>, %13, %cst_6 [1] : vector<128x128xf32> to vector<128xf32>
    %15 = vector.shape_cast %14 : vector<128xf32> to vector<128x1xf32>
    %16 = arith.addf %12, %15 : vector<128x1xf32>
    %cst_7 = arith.constant 1.000000e-24 : f32
    %17 = vector.broadcast %cst_7 : f32 to vector<128x1xf32>
    %18 = arith.maximumf %16, %17 : vector<128x1xf32>
    %19 = math.rsqrt %18 : vector<128x1xf32>
    %c0_8 = arith.constant 0 : index
    %c0_9 = arith.constant 0 : index
    %20 = vector.load %arg4[%c0_8, %c0_9] : memref<128x128xf32, #tpu.memory_space<vmem>>, vector<128x128xf32>
    %cst_10 = arith.constant dense<0.000000e+00> : vector<128x128xf32>
    %21 = tpu.matmul %1, %20, %cst_10 {dimension_numbers = #tpu.dot_dimension_numbers<[1], [0], [0], [1], [0, 0, 1, 1], [], []>} : vector<128x128xf32>, vector<128x128xf32>, vector<128x128xf32> -> vector<128x128xf32>
    %c0_11 = arith.constant 0 : index
    %c0_12 = arith.constant 0 : index
    %22 = vector.load %arg5[%c0_11, %c0_12] : memref<128x128xf32, #tpu.memory_space<vmem>>, vector<128x128xf32>
    %cst_13 = arith.constant dense<0.000000e+00> : vector<128x128xf32>
    %23 = tpu.matmul %3, %22, %cst_13 {dimension_numbers = #tpu.dot_dimension_numbers<[1], [0], [0], [1], [0, 0, 1, 1], [], []>} : vector<128x128xf32>, vector<128x128xf32>, vector<128x128xf32> -> vector<128x128xf32>
    %24 = arith.addf %21, %23 : vector<128x128xf32>
    %c0_14 = arith.constant 0 : index
    %c0_15 = arith.constant 0 : index
    %25 = vector.load %arg6[%c0_14, %c0_15] : memref<128x128xf32, #tpu.memory_space<vmem>>, vector<128x128xf32>
    %cst_16 = arith.constant dense<0.000000e+00> : vector<128x128xf32>
    %26 = tpu.matmul %5, %25, %cst_16 {dimension_numbers = #tpu.dot_dimension_numbers<[1], [0], [0], [1], [0, 0, 1, 1], [], []>} : vector<128x128xf32>, vector<128x128xf32>, vector<128x128xf32> -> vector<128x128xf32>
    %27 = arith.addf %24, %26 : vector<128x128xf32>
    %28 = vector.broadcast %19 : vector<128x1xf32> to vector<128x128xf32>
    %29 = arith.mulf %27, %28 : vector<128x128xf32>
    %c0_17 = arith.constant 0 : index
    %c0_18 = arith.constant 0 : index
    %30 = vector.load %arg7[%c0_17, %c0_18] : memref<1x128xf32, #tpu.memory_space<vmem>>, vector<1x128xf32>
    %31 = vector.broadcast %30 : vector<1x128xf32> to vector<128x128xf32>
    %32 = arith.addf %29, %31 : vector<128x128xf32>
    %cst_19 = arith.constant 0.000000e+00 : f32
    %33 = vector.broadcast %cst_19 : f32 to vector<128x128xf32>
    %34 = arith.maximumf %32, %33 : vector<128x128xf32>
    %c0_20 = arith.constant 0 : index
    %c0_21 = arith.constant 0 : index
    %35 = vector.load %arg8[%c0_20, %c0_21] : memref<1x128xf32, #tpu.memory_space<vmem>>, vector<1x128xf32>
    %36 = vector.broadcast %35 : vector<1x128xf32> to vector<128x128xf32>
    %37 = arith.mulf %34, %36 : vector<128x128xf32>
    %cst_22 = arith.constant dense<0.000000e+00> : vector<128xf32>
    %38 = vector.multi_reduction <add>, %37, %cst_22 [1] : vector<128x128xf32> to vector<128xf32>
    %c0_23 = arith.constant 0 : index
    %c0_24 = arith.constant 0 : index
    %39 = memref.load %arg9[%c0_23, %c0_24] : memref<1x1xf32, #tpu.memory_space<smem>>
    %40 = vector.broadcast %39 : f32 to vector<128xf32>
    %41 = arith.addf %38, %40 : vector<128xf32>
    %42 = arith.negf %41 : vector<128xf32>
    %43 = math.exp %42 : vector<128xf32>
    %cst_25 = arith.constant 1.000000e+00 : f32
    %44 = vector.broadcast %cst_25 : f32 to vector<128xf32>
    %45 = arith.addf %44, %43 : vector<128xf32>
    %46 = arith.divf %44, %45 : vector<128xf32>
    %c0_26 = arith.constant 0 : index
    %c0_27 = arith.constant 0 : index
    %47 = vector.load %arg10[%c0_26, %c0_27] : memref<1x128xf32, #tpu.memory_space<vmem>>, vector<1x128xf32>
    %48 = vector.shape_cast %47 : vector<1x128xf32> to vector<128xf32>
    %49 = vector.shape_cast %46 : vector<128xf32> to vector<1x128xf32>
    tpu.vector_store %arg10[%c0_26, %c0_27], %49 {strides = array<i32>} : memref<1x128xf32, #tpu.memory_space<vmem>>, vector<1x128xf32>,
    return
  }
  func.func @transform_0(%arg0: i32) -> (i32, i32) {
    %c0_i32 = arith.constant 0 : i32
    %c0_i32_0 = arith.constant 0 : i32
    return %arg0, %c0_i32 : i32, i32
  }
  func.func @transform_1(%arg0: i32) -> (i32, i32) {
    %c0_i32 = arith.constant 0 : i32
    %c0_i32_0 = arith.constant 0 : i32
    return %arg0, %c0_i32 : i32, i32
  }
  func.func @transform_2(%arg0: i32) -> (i32, i32) {
    %c0_i32 = arith.constant 0 : i32
    %c0_i32_0 = arith.constant 0 : i32
    return %arg0, %c0_i32 : i32, i32
  }
  func.func @transform_3(%arg0: i32) -> (i32, i32) {
    %c0_i32 = arith.constant 0 : i32
    %c0_i32_0 = arith.constant 0 : i32
    %c0_i32_1 = arith.constant 0 : i32
    return %c0_i32, %c0_i32_0 : i32, i32
  }
  func.func @transform_4(%arg0: i32) -> (i32, i32) {
    %c0_i32 = arith.constant 0 : i32
    %c0_i32_0 = arith.constant 0 : i32
    %c0_i32_1 = arith.constant 0 : i32
    return %c0_i32, %c0_i32_0 : i32, i32
  }
  func.func @transform_5(%arg0: i32) -> (i32, i32) {
    %c0_i32 = arith.constant 0 : i32
    %c0_i32_0 = arith.constant 0 : i32
    %c0_i32_1 = arith.constant 0 : i32
    return %c0_i32, %c0_i32_0 : i32, i32
  }
  func.func @transform_6(%arg0: i32) -> (i32, i32) {
    %c0_i32 = arith.constant 0 : i32
    %c0_i32_0 = arith.constant 0 : i32
    %c0_i32_1 = arith.constant 0 : i32
    return %c0_i32, %c0_i32_0 : i32, i32
  }
  func.func @transform_7(%arg0: i32) -> (i32, i32) {
    %c0_i32 = arith.constant 0 : i32
    %c0_i32_0 = arith.constant 0 : i32
    %c0_i32_1 = arith.constant 0 : i32
    return %c0_i32, %c0_i32_0 : i32, i32
  }
  func.func @transform_8(%arg0: i32) -> (i32, i32) {
    %c0_i32 = arith.constant 0 : i32
    %c0_i32_0 = arith.constant 0 : i32
    %c0_i32_1 = arith.constant 0 : i32
    return %c0_i32, %c0_i32_0 : i32, i32
  }
  func.func @transform_9(%arg0: i32) -> (i32, i32) {
    %c0_i32 = arith.constant 0 : i32
    %c0_i32_0 = arith.constant 0 : i32
    return %arg0, %c0_i32 : i32, i32
  }
}

module attributes {stable_mosaic.version = 11 : i64} {
  func.func @_rgcn_agg_kernel(%arg0: i32, %arg1: i32, %arg2: memref<64x128xf32, #tpu.memory_space<vmem>>, %arg3: memref<128x128xf32, #tpu.memory_space<vmem>>, %arg4: memref<1x128xf32, #tpu.memory_space<vmem>>, %arg5: memref<64x128xbf16, #tpu.memory_space<vmem>>, %arg6: memref<128x128xf32, #tpu.memory_space<vmem>>, %arg7: memref<64x128xf32, #tpu.memory_space<vmem>>, %arg8: memref<64x128xf32, #tpu.memory_space<vmem>>) attributes {dimension_semantics = [#tpu.dimension_semantics<parallel>, #tpu.dimension_semantics<arbitrary>], iteration_bounds = array<i64: 1, 1>, scalar_prefetch = 0 : i64, scratch_operands = 1 : i64, tpu.core_type = #tpu.core_type<tc>, window_params = [{transform_indices = @transform_0, window_bounds = array<i64: 64, 128>}, {pipeline_mode = #tpu.pipeline_mode<synchronous>, transform_indices = @transform_1, window_bounds = array<i64: 128, 128>}, {pipeline_mode = #tpu.pipeline_mode<synchronous>, transform_indices = @transform_2, window_bounds = array<i64: 1, 128>}, {transform_indices = @transform_3, window_bounds = array<i64: 64, 128>}, {transform_indices = @transform_4, window_bounds = array<i64: 128, 128>}, {transform_indices = @transform_5, window_bounds = array<i64: 64, 128>}]} {
    %c0_i32 = arith.constant 0 : i32
    %0 = arith.cmpi eq, %arg1, %c0_i32 : i32
    %1 = arith.extui %0 : i1 to i32
    %c0_i32_0 = arith.constant 0 : i32
    %2 = arith.cmpi ne, %1, %c0_i32_0 : i32
    scf.if %2 {
      %c0_10 = arith.constant 0 : index
      %c0_11 = arith.constant 0 : index
      %13 = vector.load %arg2[%c0_10, %c0_11] : memref<64x128xf32, #tpu.memory_space<vmem>>, vector<64x128xf32>
      %c0_12 = arith.constant 0 : index
      %c0_13 = arith.constant 0 : index
      %14 = vector.load %arg3[%c0_12, %c0_13] : memref<128x128xf32, #tpu.memory_space<vmem>>, vector<128x128xf32>
      %cst_14 = arith.constant dense<0.000000e+00> : vector<64x128xf32>
      %15 = tpu.matmul %13, %14, %cst_14 {dimension_numbers = #tpu.dot_dimension_numbers<[1], [0], [0], [1], [0, 0, 1, 1], [], []>} : vector<64x128xf32>, vector<128x128xf32>, vector<64x128xf32> -> vector<64x128xf32>
      %c0_15 = arith.constant 0 : index
      %c0_16 = arith.constant 0 : index
      %16 = vector.load %arg4[%c0_15, %c0_16] : memref<1x128xf32, #tpu.memory_space<vmem>>, vector<1x128xf32>
      %17 = vector.broadcast %16 : vector<1x128xf32> to vector<64x128xf32>
      %18 = arith.addf %15, %17 : vector<64x128xf32>
      %c0_17 = arith.constant 0 : index
      %c0_18 = arith.constant 0 : index
      %19 = vector.load %arg8[%c0_17, %c0_18] : memref<64x128xf32, #tpu.memory_space<vmem>>, vector<64x128xf32>
      tpu.vector_store %arg8[%c0_17, %c0_18], %18 {strides = array<i32>} : memref<64x128xf32, #tpu.memory_space<vmem>>, vector<64x128xf32>,
    } else {
    }
    %c0 = arith.constant 0 : index
    %c0_1 = arith.constant 0 : index
    %3 = vector.load %arg8[%c0, %c0_1] : memref<64x128xf32, #tpu.memory_space<vmem>>, vector<64x128xf32>
    %c0_2 = arith.constant 0 : index
    %c0_3 = arith.constant 0 : index
    %4 = vector.load %arg5[%c0_2, %c0_3] : memref<64x128xbf16, #tpu.memory_space<vmem>>, vector<64x128xbf16>
    %5 = arith.extf %4 : vector<64x128xbf16> to vector<64x128xf32>
    %c0_4 = arith.constant 0 : index
    %c0_5 = arith.constant 0 : index
    %6 = vector.load %arg6[%c0_4, %c0_5] : memref<128x128xf32, #tpu.memory_space<vmem>>, vector<128x128xf32>
    %cst = arith.constant dense<0.000000e+00> : vector<64x128xf32>
    %7 = tpu.matmul %5, %6, %cst {dimension_numbers = #tpu.dot_dimension_numbers<[1], [0], [0], [1], [0, 0, 1, 1], [], []>} : vector<64x128xf32>, vector<128x128xf32>, vector<64x128xf32> -> vector<64x128xf32>
    %8 = arith.addf %3, %7 : vector<64x128xf32>
    %c0_6 = arith.constant 0 : index
    %c0_7 = arith.constant 0 : index
    %9 = vector.load %arg8[%c0_6, %c0_7] : memref<64x128xf32, #tpu.memory_space<vmem>>, vector<64x128xf32>
    tpu.vector_store %arg8[%c0_6, %c0_7], %8 {strides = array<i32>} : memref<64x128xf32, #tpu.memory_space<vmem>>, vector<64x128xf32>,
    %c0_i32_8 = arith.constant 0 : i32
    %10 = arith.cmpi eq, %arg1, %c0_i32_8 : i32
    %11 = arith.extui %10 : i1 to i32
    %c0_i32_9 = arith.constant 0 : i32
    %12 = arith.cmpi ne, %11, %c0_i32_9 : i32
    scf.if %12 {
      %c0_10 = arith.constant 0 : index
      %c0_11 = arith.constant 0 : index
      %13 = vector.load %arg8[%c0_10, %c0_11] : memref<64x128xf32, #tpu.memory_space<vmem>>, vector<64x128xf32>
      %c0_12 = arith.constant 0 : index
      %c0_13 = arith.constant 0 : index
      %14 = vector.load %arg7[%c0_12, %c0_13] : memref<64x128xf32, #tpu.memory_space<vmem>>, vector<64x128xf32>
      tpu.vector_store %arg7[%c0_12, %c0_13], %13 {strides = array<i32>} : memref<64x128xf32, #tpu.memory_space<vmem>>, vector<64x128xf32>,
    } else {
    }
    return
  }
  func.func @transform_0(%arg0: i32, %arg1: i32) -> (i32, i32) {
    %c0_i32 = arith.constant 0 : i32
    %c0_i32_0 = arith.constant 0 : i32
    return %arg0, %c0_i32 : i32, i32
  }
  func.func @transform_1(%arg0: i32, %arg1: i32) -> (i32, i32) {
    %c0_i32 = arith.constant 0 : i32
    %c0_i32_0 = arith.constant 0 : i32
    %c0_i32_1 = arith.constant 0 : i32
    return %c0_i32, %c0_i32_0 : i32, i32
  }
  func.func @transform_2(%arg0: i32, %arg1: i32) -> (i32, i32) {
    %c0_i32 = arith.constant 0 : i32
    %c0_i32_0 = arith.constant 0 : i32
    %c0_i32_1 = arith.constant 0 : i32
    return %c0_i32, %c0_i32_0 : i32, i32
  }
  func.func @transform_3(%arg0: i32, %arg1: i32) -> (i32, i32) {
    %c0_i32 = arith.constant 0 : i32
    return %arg0, %arg1 : i32, i32
  }
  func.func @transform_4(%arg0: i32, %arg1: i32) -> (i32, i32) {
    %c0_i32 = arith.constant 0 : i32
    %c0_i32_0 = arith.constant 0 : i32
    return %arg1, %c0_i32 : i32, i32
  }
  func.func @transform_5(%arg0: i32, %arg1: i32) -> (i32, i32) {
    %c0_i32 = arith.constant 0 : i32
    %c0_i32_0 = arith.constant 0 : i32
    return %arg0, %c0_i32 : i32, i32
  }
}

</mosaic_0001>

<llo_original>
// kernel: rgcn_ae_forward.6
$region0: #{rgcn_ae_forward.6}
  #allocation0 [shape = 'u32[]', space=smem, size = 0x4, offset = 0x4, fixed_abs, tag = 'smem constant byte address 0x4 - core index']
  #allocation1 [shape = 'u32[144,128]{1,0:T(1,128)}', space=vmem, size = 0x12000, scoped, tag = 'internal scratch']
  #allocation2 [shape = 'f32[64,128]{1,0:T(8,128)}', space=vmem, size = 0x8000, scoped, tag = 'scratch operand']
  %s0 = inlined_call_operand.vmem [shape: f32[64,128], index: 0, kind: input, shape index: {}]
  %s1 = inlined_call_operand.vmem [shape: f32[128,128], index: 1, kind: input, shape index: {}]
  %s2 = inlined_call_operand.vmem [shape: f32[1,128], index: 2, kind: input, shape index: {}]
  %s3 = inlined_call_operand.vmem [shape: bf16[64,128], index: 3, kind: input, shape index: {}]
  %s4 = inlined_call_operand.vmem [shape: f32[128,128], index: 4, kind: input, shape index: {}]
  %s5 = inlined_call_operand.vmem [shape: f32[64,128], index: 5, kind: output, shape index: {}]
  %s6 = sld [smem:[#allocation0]]
  $region38: #{rgcn_ae_forward.6} parent=0
    _
  %s8 = ssub.s32 1, %s6
  %s9 = scalar_select 0, %s8, %s6
  // Predicated region
  $region2: #{rgcn_ae_forward.6} parent=0 // pred_check
    _
  $region3: #{rgcn_ae_forward.6} parent=0 // pred_check_branch
    %11 = sbr.rel (0) target = $region5
  $region4: #{rgcn_ae_forward.6} parent=0 // pred_region
    _
  $region5: #{rgcn_ae_forward.6} parent=0 // pred_fallthru
    _
  // Predicated region
  $region6: #{rgcn_ae_forward.6} parent=0 // pred_check
    _
  $region7: #{rgcn_ae_forward.6} parent=0 // pred_check_branch
    %13 = sbr.rel (0) target = $region9
  $region8: #{rgcn_ae_forward.6} parent=0 // pred_region
    _
  $region9: #{rgcn_ae_forward.6} parent=0 // pred_fallthru
    _
  // Predicated region
  $region10: #{rgcn_ae_forward.6} parent=0 // pred_check
    _
  $region11: #{rgcn_ae_forward.6} parent=0 // pred_check_branch
    %15 = sbr.rel (0) target = $region13
  $region12: #{rgcn_ae_forward.6} parent=0 // pred_region
    _
  $region13: #{rgcn_ae_forward.6} parent=0 // pred_fallthru
    _
  // Predicated region
  $region14: #{rgcn_ae_forward.6} parent=0 // pred_check
    _
  $region15: #{rgcn_ae_forward.6} parent=0 // pred_check_branch
    %17 = sbr.rel (0) target = $region17
  $region16: #{rgcn_ae_forward.6} parent=0 // pred_region
    _
  $region17: #{rgcn_ae_forward.6} parent=0 // pred_fallthru
    _
  // Predicated region
  $region18: #{rgcn_ae_forward.6} parent=0 // pred_check
    _
  $region19: #{rgcn_ae_forward.6} parent=0 // pred_check_branch
    %19 = sbr.rel (0) target = $region21
  $region20: #{rgcn_ae_forward.6} parent=0 // pred_region
    _
  $region21: #{rgcn_ae_forward.6} parent=0 // pred_fallthru
    _
  %p20 = scmp.eq.s32.totalorder 0, 0
  // Predicated region
  $region22: #{rgcn_ae_forward.6} parent=0 // pred_check
    %p21 = pneg %p20
  $region23: #{rgcn_ae_forward.6} parent=0 // pred_check_branch
    %23 = sbr.rel (%p21) target = $region25
  $region24: #{rgcn_ae_forward.6} parent=0 // pred_region
    %v24 = vld [vmem:[%s0] sm:$0xff]
    %v25 = vld [vmem:[%s0 + $0x8] sm:$0xff]
    %v26 = vld [vmem:[%s0 + $0x10] sm:$0xff]
    %v27 = vld [vmem:[%s0 + $0x18] sm:$0xff]
    %v28 = vld [vmem:[%s0 + $0x20] sm:$0xff]
    %v29 = vld [vmem:[%s0 + $0x28] sm:$0xff]
    %v30 = vld [vmem:[%s0 + $0x30] sm:$0xff]
    %v31 = vld [vmem:[%s0 + $0x38] sm:$0xff]
    %v32 = vld [vmem:[%s1] sm:$0xff]
    %v33 = vld [vmem:[%s1 + $0x8] sm:$0xff]
    %v34 = vld [vmem:[%s1 + $0x10] sm:$0xff]
    %v35 = vld [vmem:[%s1 + $0x18] sm:$0xff]
    %v36 = vld [vmem:[%s1 + $0x20] sm:$0xff]
    %v37 = vld [vmem:[%s1 + $0x28] sm:$0xff]
    %v38 = vld [vmem:[%s1 + $0x30] sm:$0xff]
    %v39 = vld [vmem:[%s1 + $0x38] sm:$0xff]
    %v40 = vld [vmem:[%s1 + $0x40] sm:$0xff]
    %v41 = vld [vmem:[%s1 + $0x48] sm:$0xff]
    %v42 = vld [vmem:[%s1 + $0x50] sm:$0xff]
    %v43 = vld [vmem:[%s1 + $0x58] sm:$0xff]
    %v44 = vld [vmem:[%s1 + $0x60] sm:$0xff]
    %v45 = vld [vmem:[%s1 + $0x68] sm:$0xff]
    %v46 = vld [vmem:[%s1 + $0x70] sm:$0xff]
    %v47 = vld [vmem:[%s1 + $0x78] sm:$0xff]
    %v48 = vld [vmem:[%s2] sm:$0x1]
    %v50 = vlaneseq
    %v51 = vshrl.u32 %v50, 7
    %v52 = vsub.s32 0, %v51
    %v53 = vrot.slane %v48, %v52
    %55 = vmatprep.subr.mxu0 0.0
    %56 = vmatpush1.msra.mxu0 %v32
    %57 = vmatprep.subr.mxu0 0.0
    %58 = vmatpush1.msra.mxu0 %v33
    %59 = vmatprep.subr.mxu0 0.0
    %60 = vmatpush1.msra.mxu0 %v34
    %61 = vmatprep.subr.mxu0 0.0
    %62 = vmatpush1.msra.mxu0 %v35
    %63 = vmatprep.subr.mxu0 0.0
    %64 = vmatpush1.msra.mxu0 %v36
    %65 = vmatprep.subr.mxu0 0.0
    %66 = vmatpush1.msra.mxu0 %v37
    %67 = vmatprep.subr.mxu0 0.0
    %68 = vmatpush1.msra.mxu0 %v38
    %69 = vmatprep.subr.mxu0 0.0
    %70 = vmatpush1.msra.mxu0 %v39
    %71 = vmatprep.subr.mxu0 0.0
    %72 = vmatpush1.msra.mxu0 %v40
    %73 = vmatprep.subr.mxu0 0.0
    %74 = vmatpush1.msra.mxu0 %v41
    %75 = vmatprep.subr.mxu0 0.0
    %76 = vmatpush1.msra.mxu0 %v42
    %77 = vmatprep.subr.mxu0 0.0
    %78 = vmatpush1.msra.mxu0 %v43
    %79 = vmatprep.subr.mxu0 0.0
    %80 = vmatpush1.msra.mxu0 %v44
    %81 = vmatprep.subr.mxu0 0.0
    %82 = vmatpush1.msra.mxu0 %v45
    %83 = vmatprep.subr.mxu0 0.0
    %84 = vmatpush1.msra.mxu0 %v46
    %85 = vmatprep.subr.mxu0 0.0
    %86 = vmatpush1.msra.mxu0 %v47
    %87 = vmatprep.subr.mxu0 0.0
    %88 = vmatpush1.msra.mxu0 0.0
    %89 = vmatprep.subr.mxu0 0.0
    %90 = vmatpush1.msra.mxu0 0.0
    %91 = vmatprep.subr.mxu0 0.0
    %92 = vmatpush1.msra.mxu0 0.0
    %93 = vmatprep.subr.mxu0 0.0
    %94 = vmatpush1.msra.mxu0 0.0
    %95 = vmatprep.subr.mxu0 0.0
    %96 = vmatpush1.msra.mxu0 0.0
    %97 = vmatprep.subr.mxu0 0.0
    %98 = vmatpush1.msra.mxu0 0.0
    %99 = vmatprep.subr.mxu0 0.0
    %100 = vmatpush1.msra.mxu0 0.0
    %101 = vmatprep.subr.mxu0 0.0
    %102 = vmatpush1.msra.mxu0 0.0
    %103 = vmatprep.subr.mxu0 0.0
    %104 = vmatpush1.msra.mxu0 0.0
    %105 = vmatprep.subr.mxu0 0.0
    %106 = vmatpush1.msra.mxu0 0.0
    %107 = vmatprep.subr.mxu0 0.0
    %108 = vmatpush1.msra.mxu0 0.0
    %109 = vmatprep.subr.mxu0 0.0
    %110 = vmatpush1.msra.mxu0 0.0
    %111 = vmatprep.subr.mxu0 0.0
    %112 = vmatpush1.msra.mxu0 0.0
    %113 = vmatprep.subr.mxu0 0.0
    %114 = vmatpush1.msra.mxu0 0.0
    %115 = vmatprep.subr.mxu0 0.0
    %116 = vmatpush1.msra.mxu0 0.0
    %117 = vmatprep.subr.mxu0 0.0
    %118 = vmatpush1.msra.mxu0 0.0
    %119 = vmatprep.mubr.f32.mxu0 0.0
    %120 = vmatmul.mubr.f32.gmra.mrb[0].mxu0 %v24
    %v121 = vpop.f32.mrb[0].mxu0
    %v122 = vadd.f32 %v53, %v121
    %v123 = vpop.f32.mrb[0].mxu0
    %124 = vmatprep.mubr.f32.mxu0 0.0
    %125 = vmatmul.mubr.f32.gmra.mrb[0].mxu0 %v25
    %v126 = vpop.f32.mrb[0].mxu0
    %v127 = vadd.f32 %v53, %v126
    %v128 = vpop.f32.mrb[0].mxu0
    %129 = vmatprep.mubr.f32.mxu0 0.0
    %130 = vmatmul.mubr.f32.gmra.mrb[0].mxu0 %v26
    %v131 = vpop.f32.mrb[0].mxu0
    %v132 = vadd.f32 %v53, %v131
    %v133 = vpop.f32.mrb[0].mxu0
    %134 = vmatprep.mubr.f32.mxu0 0.0
    %135 = vmatmul.mubr.f32.gmra.mrb[0].mxu0 %v27
    %v136 = vpop.f32.mrb[0].mxu0
    %v137 = vadd.f32 %v53, %v136
    %v138 = vpop.f32.mrb[0].mxu0
    %139 = vmatprep.mubr.f32.mxu0 0.0
    %140 = vmatmul.mubr.f32.gmra.mrb[0].mxu0 %v28
    %v141 = vpop.f32.mrb[0].mxu0
    %v142 = vadd.f32 %v53, %v141
    %v143 = vpop.f32.mrb[0].mxu0
    %144 = vmatprep.mubr.f32.mxu0 0.0
    %145 = vmatmul.mubr.f32.gmra.mrb[0].mxu0 %v29
    %v146 = vpop.f32.mrb[0].mxu0
    %v147 = vadd.f32 %v53, %v146
    %v148 = vpop.f32.mrb[0].mxu0
    %149 = vmatprep.mubr.f32.mxu0 0.0
    %150 = vmatmul.mubr.f32.gmra.mrb[0].mxu0 %v30
    %v151 = vpop.f32.mrb[0].mxu0
    %v152 = vadd.f32 %v53, %v151
    %v153 = vpop.f32.mrb[0].mxu0
    %154 = vmatprep.mubr.f32.mxu0 0.0
    %155 = vmatmul.mubr.f32.gmra.mrb[0].mxu0 %v31
    %v156 = vpop.f32.mrb[0].mxu0
    %v157 = vadd.f32 %v53, %v156
    %v158 = vpop.f32.mrb[0].mxu0
    %159 = vdwg.mxu0
    %160 = vst [vmem:[#allocation2] sm:$0xff] %v122
    %161 = vst [vmem:[#allocation2 + $0x8] sm:$0xff] %v127
    %162 = vst [vmem:[#allocation2 + $0x10] sm:$0xff] %v132
    %163 = vst [vmem:[#allocation2 + $0x18] sm:$0xff] %v137
    %164 = vst [vmem:[#allocation2 + $0x20] sm:$0xff] %v142
    %165 = vst [vmem:[#allocation2 + $0x28] sm:$0xff] %v147
    %166 = vst [vmem:[#allocation2 + $0x30] sm:$0xff] %v152
    %167 = vst [vmem:[#allocation2 + $0x38] sm:$0xff] %v157
  $region25: #{rgcn_ae_forward.6} parent=0 // pred_fallthru
    _
  %v168 = vld [vmem:[#allocation2] sm:$0xff]
  %v169 = vld [vmem:[#allocation2 + $0x8] sm:$0xff]
  %v170 = vld [vmem:[#allocation2 + $0x10] sm:$0xff]
  %v171 = vld [vmem:[#allocation2 + $0x18] sm:$0xff]
  %v172 = vld [vmem:[#allocation2 + $0x20] sm:$0xff]
  %v173 = vld [vmem:[#allocation2 + $0x28] sm:$0xff]
  %v174 = vld [vmem:[#allocation2 + $0x30] sm:$0xff]
  %v175 = vld [vmem:[#allocation2 + $0x38] sm:$0xff]
  %v176 = vld [vmem:[%s3] sm:$0xf]
  %v177 = vld [vmem:[%s3 + $0x4] sm:$0xf]
  %v178 = vld [vmem:[%s3 + $0x8] sm:$0xf]
  %v179 = vld [vmem:[%s3 + $0xc] sm:$0xf]
  %v180 = vld [vmem:[%s3 + $0x10] sm:$0xf]
  %v181 = vld [vmem:[%s3 + $0x14] sm:$0xf]
  %v182 = vld [vmem:[%s3 + $0x18] sm:$0xf]
  %v183 = vld [vmem:[%s3 + $0x1c] sm:$0xf]
  %v184 = vunpack.c.l.bf16 %v176
  %v185 = vunpack.c.l.bf16 %v177
  %v186 = vunpack.c.l.bf16 %v178
  %v187 = vunpack.c.l.bf16 %v179
  %v188 = vunpack.c.l.bf16 %v180
  %v189 = vunpack.c.l.bf16 %v181
  %v190 = vunpack.c.l.bf16 %v182
  %v191 = vunpack.c.l.bf16 %v183
  %v192 = vld [vmem:[%s4] sm:$0xff]
  %v193 = vld [vmem:[%s4 + $0x8] sm:$0xff]
  %v194 = vld [vmem:[%s4 + $0x10] sm:$0xff]
  %v195 = vld [vmem:[%s4 + $0x18] sm:$0xff]
  %v196 = vld [vmem:[%s4 + $0x20] sm:$0xff]
  %v197 = vld [vmem:[%s4 + $0x28] sm:$0xff]
  %v198 = vld [vmem:[%s4 + $0x30] sm:$0xff]
  %v199 = vld [vmem:[%s4 + $0x38] sm:$0xff]
  %v200 = vld [vmem:[%s4 + $0x40] sm:$0xff]
  %v201 = vld [vmem:[%s4 + $0x48] sm:$0xff]
  %v202 = vld [vmem:[%s4 + $0x50] sm:$0xff]
  %v203 = vld [vmem:[%s4 + $0x58] sm:$0xff]
  %v204 = vld [vmem:[%s4 + $0x60] sm:$0xff]
  %v205 = vld [vmem:[%s4 + $0x68] sm:$0xff]
  %v206 = vld [vmem:[%s4 + $0x70] sm:$0xff]
  %v207 = vld [vmem:[%s4 + $0x78] sm:$0xff]
  %208 = vmatprep.subr.mxu0 0.0
  %209 = vmatpush1.msra.mxu0 %v192
  %210 = vmatprep.subr.mxu0 0.0
  %211 = vmatpush1.msra.mxu0 %v193
  %212 = vmatprep.subr.mxu0 0.0
  %213 = vmatpush1.msra.mxu0 %v194
  %214 = vmatprep.subr.mxu0 0.0
  %215 = vmatpush1.msra.mxu0 %v195
  %216 = vmatprep.subr.mxu0 0.0
  %217 = vmatpush1.msra.mxu0 %v196
  %218 = vmatprep.subr.mxu0 0.0
  %219 = vmatpush1.msra.mxu0 %v197
  %220 = vmatprep.subr.mxu0 0.0
  %221 = vmatpush1.msra.mxu0 %v198
  %222 = vmatprep.subr.mxu0 0.0
  %223 = vmatpush1.msra.mxu0 %v199
  %224 = vmatprep.subr.mxu0 0.0
  %225 = vmatpush1.msra.mxu0 %v200
  %226 = vmatprep.subr.mxu0 0.0
  %227 = vmatpush1.msra.mxu0 %v201
  %228 = vmatprep.subr.mxu0 0.0
  %229 = vmatpush1.msra.mxu0 %v202
  %230 = vmatprep.subr.mxu0 0.0
  %231 = vmatpush1.msra.mxu0 %v203
  %232 = vmatprep.subr.mxu0 0.0
  %233 = vmatpush1.msra.mxu0 %v204
  %234 = vmatprep.subr.mxu0 0.0
  %235 = vmatpush1.msra.mxu0 %v205
  %236 = vmatprep.subr.mxu0 0.0
  %237 = vmatpush1.msra.mxu0 %v206
  %238 = vmatprep.subr.mxu0 0.0
  %239 = vmatpush1.msra.mxu0 %v207
  %240 = vmatprep.subr.mxu0 0.0
  %241 = vmatpush1.msra.mxu0 0.0
  %242 = vmatprep.subr.mxu0 0.0
  %243 = vmatpush1.msra.mxu0 0.0
  %244 = vmatprep.subr.mxu0 0.0
  %245 = vmatpush1.msra.mxu0 0.0
  %246 = vmatprep.subr.mxu0 0.0
  %247 = vmatpush1.msra.mxu0 0.0
  %248 = vmatprep.subr.mxu0 0.0
  %249 = vmatpush1.msra.mxu0 0.0
  %250 = vmatprep.subr.mxu0 0.0
  %251 = vmatpush1.msra.mxu0 0.0
  %252 = vmatprep.subr.mxu0 0.0
  %253 = vmatpush1.msra.mxu0 0.0
  %254 = vmatprep.subr.mxu0 0.0
  %255 = vmatpush1.msra.mxu0 0.0
  %256 = vmatprep.subr.mxu0 0.0
  %257 = vmatpush1.msra.mxu0 0.0
  %258 = vmatprep.subr.mxu0 0.0
  %259 = vmatpush1.msra.mxu0 0.0
  %260 = vmatprep.subr.mxu0 0.0
  %261 = vmatpush1.msra.mxu0 0.0
  %262 = vmatprep.subr.mxu0 0.0
  %263 = vmatpush1.msra.mxu0 0.0
  %264 = vmatprep.subr.mxu0 0.0
  %265 = vmatpush1.msra.mxu0 0.0
  %266 = vmatprep.subr.mxu0 0.0
  %267 = vmatpush1.msra.mxu0 0.0
  %268 = vmatprep.subr.mxu0 0.0
  %269 = vmatpush1.msra.mxu0 0.0
  %270 = vmatprep.subr.mxu0 0.0
  %271 = vmatpush1.msra.mxu0 0.0
  %272 = vmatprep.mubr.f32.mxu0 0.0
  %273 = vmatmul.mubr.f32.gmra.mrb[0].mxu0 %v184
  %v274 = vpop.f32.mrb[0].mxu0
  %v275 = vadd.f32 0.0, %v274
  %v276 = vpop.f32.mrb[0].mxu0
  %277 = vmatprep.mubr.f32.mxu0 0.0
  %278 = vmatmul.mubr.f32.gmra.mrb[0].mxu0 %v185
  %v279 = vpop.f32.mrb[0].mxu0
  %v280 = vadd.f32 0.0, %v279
  %v281 = vpop.f32.mrb[0].mxu0
  %282 = vmatprep.mubr.f32.mxu0 0.0
  %283 = vmatmul.mubr.f32.gmra.mrb[0].mxu0 %v186
  %v284 = vpop.f32.mrb[0].mxu0
  %v285 = vadd.f32 0.0, %v284
  %v286 = vpop.f32.mrb[0].mxu0
  %287 = vmatprep.mubr.f32.mxu0 0.0
  %288 = vmatmul.mubr.f32.gmra.mrb[0].mxu0 %v187
  %v289 = vpop.f32.mrb[0].mxu0
  %v290 = vadd.f32 0.0, %v289
  %v291 = vpop.f32.mrb[0].mxu0
  %292 = vmatprep.mubr.f32.mxu0 0.0
  %293 = vmatmul.mubr.f32.gmra.mrb[0].mxu0 %v188
  %v294 = vpop.f32.mrb[0].mxu0
  %v295 = vadd.f32 0.0, %v294
  %v296 = vpop.f32.mrb[0].mxu0
  %297 = vmatprep.mubr.f32.mxu0 0.0
  %298 = vmatmul.mubr.f32.gmra.mrb[0].mxu0 %v189
  %v299 = vpop.f32.mrb[0].mxu0
  %v300 = vadd.f32 0.0, %v299
  %v301 = vpop.f32.mrb[0].mxu0
  %302 = vmatprep.mubr.f32.mxu0 0.0
  %303 = vmatmul.mubr.f32.gmra.mrb[0].mxu0 %v190
  %v304 = vpop.f32.mrb[0].mxu0
  %v305 = vadd.f32 0.0, %v304
  %v306 = vpop.f32.mrb[0].mxu0
  %307 = vmatprep.mubr.f32.mxu0 0.0
  %308 = vmatmul.mubr.f32.gmra.mrb[0].mxu0 %v191
  %v309 = vpop.f32.mrb[0].mxu0
  %v310 = vadd.f32 0.0, %v309
  %v311 = vpop.f32.mrb[0].mxu0
  %312 = vdwg.mxu0
  %v313 = vadd.f32 %v168, %v275
  %v314 = vadd.f32 %v169, %v280
  %v315 = vadd.f32 %v170, %v285
  %v316 = vadd.f32 %v171, %v290
  %v317 = vadd.f32 %v172, %v295
  %v318 = vadd.f32 %v173, %v300
  %v319 = vadd.f32 %v174, %v305
  %v320 = vadd.f32 %v175, %v310
  %321 = vst [vmem:[#allocation2] sm:$0xff] %v313
  %322 = vst [vmem:[#allocation2 + $0x8] sm:$0xff] %v314
  %323 = vst [vmem:[#allocation2 + $0x10] sm:$0xff] %v315
  %324 = vst [vmem:[#allocation2 + $0x18] sm:$0xff] %v316
  %325 = vst [vmem:[#allocation2 + $0x20] sm:$0xff] %v317
  %326 = vst [vmem:[#allocation2 + $0x28] sm:$0xff] %v318
  %327 = vst [vmem:[#allocation2 + $0x30] sm:$0xff] %v319
  %328 = vst [vmem:[#allocation2 + $0x38] sm:$0xff] %v320
  // Predicated region
  $region26: #{rgcn_ae_forward.6} parent=0 // pred_check
    %p329 = pneg %p20
  $region27: #{rgcn_ae_forward.6} parent=0 // pred_check_branch
    %331 = sbr.rel (%p329) target = $region29
  $region28: #{rgcn_ae_forward.6} parent=0 // pred_region
    %v332 = vld [vmem:[#allocation2] sm:$0xff]
    %v333 = vld [vmem:[#allocation2 + $0x8] sm:$0xff]
    %v334 = vld [vmem:[#allocation2 + $0x10] sm:$0xff]
    %v335 = vld [vmem:[#allocation2 + $0x18] sm:$0xff]
    %v336 = vld [vmem:[#allocation2 + $0x20] sm:$0xff]
    %v337 = vld [vmem:[#allocation2 + $0x28] sm:$0xff]
    %v338 = vld [vmem:[#allocation2 + $0x30] sm:$0xff]
    %v339 = vld [vmem:[#allocation2 + $0x38] sm:$0xff]
    %340 = vst [vmem:[%s5] sm:$0xff] %v332
    %341 = vst [vmem:[%s5 + $0x8] sm:$0xff] %v333
    %342 = vst [vmem:[%s5 + $0x10] sm:$0xff] %v334
    %343 = vst [vmem:[%s5 + $0x18] sm:$0xff] %v335
    %344 = vst [vmem:[%s5 + $0x20] sm:$0xff] %v336
    %345 = vst [vmem:[%s5 + $0x28] sm:$0xff] %v337
    %346 = vst [vmem:[%s5 + $0x30] sm:$0xff] %v338
    %347 = vst [vmem:[%s5 + $0x38] sm:$0xff] %v339
  $region29: #{rgcn_ae_forward.6} parent=0 // pred_fallthru
    _
  // Predicated region
  $region30: #{rgcn_ae_forward.6} parent=0 // pred_check
    _
  $region31: #{rgcn_ae_forward.6} parent=0 // pred_check_branch
    %349 = sbr.rel (0) target = $region33
  $region32: #{rgcn_ae_forward.6} parent=0 // pred_region
    _
  $region33: #{rgcn_ae_forward.6} parent=0 // pred_fallthru
    _
  // Predicated region
  $region34: #{rgcn_ae_forward.6} parent=0 // pred_check
    _
  $region35: #{rgcn_ae_forward.6} parent=0 // pred_check_branch
    %351 = sbr.rel (0) target = $region37
  $region36: #{rgcn_ae_forward.6} parent=0 // pred_region
    _
  $region37: #{rgcn_ae_forward.6} parent=0 // pred_fallthru
    _

// kernel: rgcn_ae_forward.5
$region0: #{rgcn_ae_forward.5}
  #allocation0 [shape = 'u32[]', space=smem, size = 0x4, offset = 0x4, fixed_abs, tag = 'smem constant byte address 0x4 - core index']
  #allocation1 [shape = 'u32[144,128]{1,0:T(1,128)}', space=vmem, size = 0x12000, scoped, tag = 'internal scratch']
  %s0 = inlined_call_operand.vmem [shape: f32[128,128], index: 0, kind: input, shape index: {}]
  %s1 = inlined_call_operand.vmem [shape: f32[128,8], index: 1, kind: input, shape index: {}]
  %s2 = inlined_call_operand.vmem [shape: f32[128,1024], index: 2, kind: input, shape index: {}]
  %s3 = inlined_call_operand.vmem [shape: f32[128,128], index: 3, kind: output, shape index: {}]
  %s4 = sld [smem:[#allocation0]]
  $region22: #{rgcn_ae_forward.5} parent=0
    _
  %s6 = ssub.s32 1, %s4
  %s7 = scalar_select 0, %s6, %s4
  // Predicated region
  $region2: #{rgcn_ae_forward.5} parent=0 // pred_check
    _
  $region3: #{rgcn_ae_forward.5} parent=0 // pred_check_branch
    %9 = sbr.rel (0) target = $region5
  $region4: #{rgcn_ae_forward.5} parent=0 // pred_region
    _
  $region5: #{rgcn_ae_forward.5} parent=0 // pred_fallthru
    _
  // Predicated region
  $region6: #{rgcn_ae_forward.5} parent=0 // pred_check
    _
  $region7: #{rgcn_ae_forward.5} parent=0 // pred_check_branch
    %11 = sbr.rel (0) target = $region9
  $region8: #{rgcn_ae_forward.5} parent=0 // pred_region
    _
  $region9: #{rgcn_ae_forward.5} parent=0 // pred_fallthru
    _
  // Predicated region
  $region10: #{rgcn_ae_forward.5} parent=0 // pred_check
    _
  $region11: #{rgcn_ae_forward.5} parent=0 // pred_check_branch
    %13 = sbr.rel (0) target = $region13
  $region12: #{rgcn_ae_forward.5} parent=0 // pred_region
    _
  $region13: #{rgcn_ae_forward.5} parent=0 // pred_fallthru
    _
  %v14 = vld [vmem:[%s0] sm:$0xff]
  %v15 = vld [vmem:[%s0 + $0x8] sm:$0xff]
  %v16 = vld [vmem:[%s0 + $0x10] sm:$0xff]
  %v17 = vld [vmem:[%s0 + $0x18] sm:$0xff]
  %v18 = vld [vmem:[%s0 + $0x20] sm:$0xff]
  %v19 = vld [vmem:[%s0 + $0x28] sm:$0xff]
  %v20 = vld [vmem:[%s0 + $0x30] sm:$0xff]
  %v21 = vld [vmem:[%s0 + $0x38] sm:$0xff]
  %v22 = vld [vmem:[%s0 + $0x40] sm:$0xff]
  %v23 = vld [vmem:[%s0 + $0x48] sm:$0xff]
  %v24 = vld [vmem:[%s0 + $0x50] sm:$0xff]
  %v25 = vld [vmem:[%s0 + $0x58] sm:$0xff]
  %v26 = vld [vmem:[%s0 + $0x60] sm:$0xff]
  %v27 = vld [vmem:[%s0 + $0x68] sm:$0xff]
  %v28 = vld [vmem:[%s0 + $0x70] sm:$0xff]
  %v29 = vld [vmem:[%s0 + $0x78] sm:$0xff]
  %v30 = vld [vmem:[%s2] sm:$0xff]
  %v31 = vld [vmem:[%s2 + $0x8] sm:$0xff]
  %v32 = vld [vmem:[%s2 + $0x10] sm:$0xff]
  %v33 = vld [vmem:[%s2 + $0x18] sm:$0xff]
  %v34 = vld [vmem:[%s2 + $0x20] sm:$0xff]
  %v35 = vld [vmem:[%s2 + $0x28] sm:$0xff]
  %v36 = vld [vmem:[%s2 + $0x30] sm:$0xff]
  %v37 = vld [vmem:[%s2 + $0x38] sm:$0xff]
  %v38 = vld [vmem:[%s2 + $0x40] sm:$0xff]
  %v39 = vld [vmem:[%s2 + $0x48] sm:$0xff]
  %v40 = vld [vmem:[%s2 + $0x50] sm:$0xff]
  %v41 = vld [vmem:[%s2 + $0x58] sm:$0xff]
  %v42 = vld [vmem:[%s2 + $0x60] sm:$0xff]
  %v43 = vld [vmem:[%s2 + $0x68] sm:$0xff]
  %v44 = vld [vmem:[%s2 + $0x70] sm:$0xff]
  %v45 = vld [vmem:[%s2 + $0x78] sm:$0xff]
  %v46 = vld [vmem:[%s2 + $0x80] sm:$0xff]
  %v47 = vld [vmem:[%s2 + $0x88] sm:$0xff]
  %v48 = vld [vmem:[%s2 + $0x90] sm:$0xff]
  %v49 = vld [vmem:[%s2 + $0x98] sm:$0xff]
  %v50 = vld [vmem:[%s2 + $0xa0] sm:$0xff]
  %v51 = vld [vmem:[%s2 + $0xa8] sm:$0xff]
  %v52 = vld [vmem:[%s2 + $0xb0] sm:$0xff]
  %v53 = vld [vmem:[%s2 + $0xb8] sm:$0xff]
  %v54 = vld [vmem:[%s2 + $0xc0] sm:$0xff]
  %v55 = vld [vmem:[%s2 + $0xc8] sm:$0xff]
  %v56 = vld [vmem:[%s2 + $0xd0] sm:$0xff]
  %v57 = vld [vmem:[%s2 + $0xd8] sm:$0xff]
  %v58 = vld [vmem:[%s2 + $0xe0] sm:$0xff]
  %v59 = vld [vmem:[%s2 + $0xe8] sm:$0xff]
  %v60 = vld [vmem:[%s2 + $0xf0] sm:$0xff]
  %v61 = vld [vmem:[%s2 + $0xf8] sm:$0xff]
  %v62 = vld [vmem:[%s2 + $0x100] sm:$0xff]
  %v63 = vld [vmem:[%s2 + $0x108] sm:$0xff]
  %v64 = vld [vmem:[%s2 + $0x110] sm:$0xff]
  %v65 = vld [vmem:[%s2 + $0x118] sm:$0xff]
  %v66 = vld [vmem:[%s2 + $0x120] sm:$0xff]
  %v67 = vld [vmem:[%s2 + $0x128] sm:$0xff]
  %v68 = vld [vmem:[%s2 + $0x130] sm:$0xff]
  %v69 = vld [vmem:[%s2 + $0x138] sm:$0xff]
  %v70 = vld [vmem:[%s2 + $0x140] sm:$0xff]
  %v71 = vld [vmem:[%s2 + $0x148] sm:$0xff]
  %v72 = vld [vmem:[%s2 + $0x150] sm:$0xff]
  %v73 = vld [vmem:[%s2 + $0x158] sm:$0xff]
  %v74 = vld [vmem:[%s2 + $0x160] sm:$0xff]
  %v75 = vld [vmem:[%s2 + $0x168] sm:$0xff]
  %v76 = vld [vmem:[%s2 + $0x170] sm:$0xff]
  %v77 = vld [vmem:[%s2 + $0x178] sm:$0xff]
  %v78 = vld [vmem:[%s2 + $0x180] sm:$0xff]
  %v79 = vld [vmem:[%s2 + $0x188] sm:$0xff]
  %v80 = vld [vmem:[%s2 + $0x190] sm:$0xff]
  %v81 = vld [vmem:[%s2 + $0x198] sm:$0xff]
  %v82 = vld [vmem:[%s2 + $0x1a0] sm:$0xff]
  %v83 = vld [vmem:[%s2 + $0x1a8] sm:$0xff]
  %v84 = vld [vmem:[%s2 + $0x1b0] sm:$0xff]
  %v85 = vld [vmem:[%s2 + $0x1b8] sm:$0xff]
  %v86 = vld [vmem:[%s2 + $0x1c0] sm:$0xff]
  %v87 = vld [vmem:[%s2 + $0x1c8] sm:$0xff]
  %v88 = vld [vmem:[%s2 + $0x1d0] sm:$0xff]
  %v89 = vld [vmem:[%s2 + $0x1d8] sm:$0xff]
  %v90 = vld [vmem:[%s2 + $0x1e0] sm:$0xff]
  %v91 = vld [vmem:[%s2 + $0x1e8] sm:$0xff]
  %v92 = vld [vmem:[%s2 + $0x1f0] sm:$0xff]
  %v93 = vld [vmem:[%s2 + $0x1f8] sm:$0xff]
  %v94 = vld [vmem:[%s2 + $0x200] sm:$0xff]
  %v95 = vld [vmem:[%s2 + $0x208] sm:$0xff]
  %v96 = vld [vmem:[%s2 + $0x210] sm:$0xff]
  %v97 = vld [vmem:[%s2 + $0x218] sm:$0xff]
  %v98 = vld [vmem:[%s2 + $0x220] sm:$0xff]
  %v99 = vld [vmem:[%s2 + $0x228] sm:$0xff]
  %v100 = vld [vmem:[%s2 + $0x230] sm:$0xff]
  %v101 = vld [vmem:[%s2 + $0x238] sm:$0xff]
  %v102 = vld [vmem:[%s2 + $0x240] sm:$0xff]
  %v103 = vld [vmem:[%s2 + $0x248] sm:$0xff]
  %v104 = vld [vmem:[%s2 + $0x250] sm:$0xff]
  %v105 = vld [vmem:[%s2 + $0x258] sm:$0xff]
  %v106 = vld [vmem:[%s2 + $0x260] sm:$0xff]
  %v107 = vld [vmem:[%s2 + $0x268] sm:$0xff]
  %v108 = vld [vmem:[%s2 + $0x270] sm:$0xff]
  %v109 = vld [vmem:[%s2 + $0x278] sm:$0xff]
  %v110 = vld [vmem:[%s2 + $0x280] sm:$0xff]
  %v111 = vld [vmem:[%s2 + $0x288] sm:$0xff]
  %v112 = vld [vmem:[%s2 + $0x290] sm:$0xff]
  %v113 = vld [vmem:[%s2 + $0x298] sm:$0xff]
  %v114 = vld [vmem:[%s2 + $0x2a0] sm:$0xff]
  %v115 = vld [vmem:[%s2 + $0x2a8] sm:$0xff]
  %v116 = vld [vmem:[%s2 + $0x2b0] sm:$0xff]
  %v117 = vld [vmem:[%s2 + $0x2b8] sm:$0xff]
  %v118 = vld [vmem:[%s2 + $0x2c0] sm:$0xff]
  %v119 = vld [vmem:[%s2 + $0x2c8] sm:$0xff]
  %v120 = vld [vmem:[%s2 + $0x2d0] sm:$0xff]
  %v121 = vld [vmem:[%s2 + $0x2d8] sm:$0xff]
  %v122 = vld [vmem:[%s2 + $0x2e0] sm:$0xff]
  %v123 = vld [vmem:[%s2 + $0x2e8] sm:$0xff]
  %v124 = vld [vmem:[%s2 + $0x2f0] sm:$0xff]
  %v125 = vld [vmem:[%s2 + $0x2f8] sm:$0xff]
  %v126 = vld [vmem:[%s2 + $0x300] sm:$0xff]
  %v127 = vld [vmem:[%s2 + $0x308] sm:$0xff]
  %v128 = vld [vmem:[%s2 + $0x310] sm:$0xff]
  %v129 = vld [vmem:[%s2 + $0x318] sm:$0xff]
  %v130 = vld [vmem:[%s2 + $0x320] sm:$0xff]
  %v131 = vld [vmem:[%s2 + $0x328] sm:$0xff]
  %v132 = vld [vmem:[%s2 + $0x330] sm:$0xff]
  %v133 = vld [vmem:[%s2 + $0x338] sm:$0xff]
  %v134 = vld [vmem:[%s2 + $0x340] sm:$0xff]
  %v135 = vld [vmem:[%s2 + $0x348] sm:$0xff]
  %v136 = vld [vmem:[%s2 + $0x350] sm:$0xff]
  %v137 = vld [vmem:[%s2 + $0x358] sm:$0xff]
  %v138 = vld [vmem:[%s2 + $0x360] sm:$0xff]
  %v139 = vld [vmem:[%s2 + $0x368] sm:$0xff]
  %v140 = vld [vmem:[%s2 + $0x370] sm:$0xff]
  %v141 = vld [vmem:[%s2 + $0x378] sm:$0xff]
  %v142 = vld [vmem:[%s2 + $0x380] sm:$0xff]
  %v143 = vld [vmem:[%s2 + $0x388] sm:$0xff]
  %v144 = vld [vmem:[%s2 + $0x390] sm:$0xff]
  %v145 = vld [vmem:[%s2 + $0x398] sm:$0xff]
  %v146 = vld [vmem:[%s2 + $0x3a0] sm:$0xff]
  %v147 = vld [vmem:[%s2 + $0x3a8] sm:$0xff]
  %v148 = vld [vmem:[%s2 + $0x3b0] sm:$0xff]
  %v149 = vld [vmem:[%s2 + $0x3b8] sm:$0xff]
  %v150 = vld [vmem:[%s2 + $0x3c0] sm:$0xff]
  %v151 = vld [vmem:[%s2 + $0x3c8] sm:$0xff]
  %v152 = vld [vmem:[%s2 + $0x3d0] sm:$0xff]
  %v153 = vld [vmem:[%s2 + $0x3d8] sm:$0xff]
  %v154 = vld [vmem:[%s2 + $0x3e0] sm:$0xff]
  %v155 = vld [vmem:[%s2 + $0x3e8] sm:$0xff]
  %v156 = vld [vmem:[%s2 + $0x3f0] sm:$0xff]
  %v157 = vld [vmem:[%s2 + $0x3f8] sm:$0xff]
  %158 = vmatprep.subr.mxu0 %v31
  %159 = vmatpush1.msra.mxu0 %v30
  %160 = vmatprep.subr.mxu0 %v39
  %161 = vmatpush1.msra.mxu0 %v38
  %162 = vmatprep.subr.mxu0 %v47
  %163 = vmatpush1.msra.mxu0 %v46
  %164 = vmatprep.subr.mxu0 %v55
  %165 = vmatpush1.msra.mxu0 %v54
  %166 = vmatprep.subr.mxu0 %v63
  %167 = vmatpush1.msra.mxu0 %v62
  %168 = vmatprep.subr.mxu0 %v71
  %169 = vmatpush1.msra.mxu0 %v70
  %170 = vmatprep.subr.mxu0 %v79
  %171 = vmatpush1.msra.mxu0 %v78
  %172 = vmatprep.subr.mxu0 %v87
  %173 = vmatpush1.msra.mxu0 %v86
  %174 = vmatprep.subr.mxu0 %v95
  %175 = vmatpush1.msra.mxu0 %v94
  %176 = vmatprep.subr.mxu0 %v103
  %177 = vmatpush1.msra.mxu0 %v102
  %178 = vmatprep.subr.mxu0 %v111
  %179 = vmatpush1.msra.mxu0 %v110
  %180 = vmatprep.subr.mxu0 %v119
  %181 = vmatpush1.msra.mxu0 %v118
  %182 = vmatprep.subr.mxu0 %v127
  %183 = vmatpush1.msra.mxu0 %v126
  %184 = vmatprep.subr.mxu0 %v135
  %185 = vmatpush1.msra.mxu0 %v134
  %186 = vmatprep.subr.mxu0 %v143
  %187 = vmatpush1.msra.mxu0 %v142
  %188 = vmatprep.subr.mxu0 %v151
  %189 = vmatpush1.msra.mxu0 %v150
  %190 = vmatprep.subr.mxu0 0.0
  %191 = vmatpush1.msra.mxu0 0.0
  %192 = vmatprep.subr.mxu0 0.0
  %193 = vmatpush1.msra.mxu0 0.0
  %194 = vmatprep.subr.mxu0 0.0
  %195 = vmatpush1.msra.mxu0 0.0
  %196 = vmatprep.subr.mxu0 0.0
  %197 = vmatpush1.msra.mxu0 0.0
  %198 = vmatprep.subr.mxu0 0.0
  %199 = vmatpush1.msra.mxu0 0.0
  %200 = vmatprep.subr.mxu0 0.0
  %201 = vmatpush1.msra.mxu0 0.0
  %202 = vmatprep.subr.mxu0 0.0
  %203 = vmatpush1.msra.mxu0 0.0
  %204 = vmatprep.subr.mxu0 0.0
  %205 = vmatpush1.msra.mxu0 0.0
  %206 = vmatprep.subr.mxu0 0.0
  %207 = vmatpush1.msra.mxu0 0.0
  %208 = vmatprep.subr.mxu0 0.0
  %209 = vmatpush1.msra.mxu0 0.0
  %210 = vmatprep.subr.mxu0 0.0
  %211 = vmatpush1.msra.mxu0 0.0
  %212 = vmatprep.subr.mxu0 0.0
  %213 = vmatpush1.msra.mxu0 0.0
  %214 = vmatprep.subr.mxu0 0.0
  %215 = vmatpush1.msra.mxu0 0.0
  %216 = vmatprep.subr.mxu0 0.0
  %217 = vmatpush1.msra.mxu0 0.0
  %218 = vmatprep.subr.mxu0 0.0
  %219 = vmatpush1.msra.mxu0 0.0
  %220 = vmatprep.subr.mxu0 0.0
  %221 = vmatpush1.msra.mxu0 0.0
  %222 = vmatprep.mubr.f32.mxu0 0.0
  %223 = vmatmul.mubr.f32.gmra.mrb[0].mxu0 %v14
  %v224 = vpop.f32.mrb[0].mxu0
  %v225 = vadd.f32 0.0, %v224
  %v226 = vpop.f32.mrb[0].mxu0
  %v227 = vadd.f32 0.0, %v226
  %228 = vmatprep.mubr.f32.mxu0 0.0
  %229 = vmatmul.mubr.f32.gmra.mrb[0].mxu0 %v15
  %v230 = vpop.f32.mrb[0].mxu0
  %v231 = vadd.f32 0.0, %v230
  %v232 = vpop.f32.mrb[0].mxu0
  %v233 = vadd.f32 0.0, %v232
  %234 = vmatprep.mubr.f32.mxu0 0.0
  %235 = vmatmul.mubr.f32.gmra.mrb[0].mxu0 %v16
  %v236 = vpop.f32.mrb[0].mxu0
  %v237 = vadd.f32 0.0, %v236
  %v238 = vpop.f32.mrb[0].mxu0
  %v239 = vadd.f32 0.0, %v238
  %240 = vmatprep.mubr.f32.mxu0 0.0
  %241 = vmatmul.mubr.f32.gmra.mrb[0].mxu0 %v17
  %v242 = vpop.f32.mrb[0].mxu0
  %v243 = vadd.f32 0.0, %v242
  %v244 = vpop.f32.mrb[0].mxu0
  %v245 = vadd.f32 0.0, %v244
  %246 = vmatprep.mubr.f32.mxu0 0.0
  %247 = vmatmul.mubr.f32.gmra.mrb[0].mxu0 %v18
  %v248 = vpop.f32.mrb[0].mxu0
  %v249 = vadd.f32 0.0, %v248
  %v250 = vpop.f32.mrb[0].mxu0
  %v251 = vadd.f32 0.0, %v250
  %252 = vmatprep.mubr.f32.mxu0 0.0
  %253 = vmatmul.mubr.f32.gmra.mrb[0].mxu0 %v19
  %v254 = vpop.f32.mrb[0].mxu0
  %v255 = vadd.f32 0.0, %v254
  %v256 = vpop.f32.mrb[0].mxu0
  %v257 = vadd.f32 0.0, %v256
  %258 = vmatprep.mubr.f32.mxu0 0.0
  %259 = vmatmul.mubr.f32.gmra.mrb[0].mxu0 %v20
  %v260 = vpop.f32.mrb[0].mxu0
  %v261 = vadd.f32 0.0, %v260
  %v262 = vpop.f32.mrb[0].mxu0
  %v263 = vadd.f32 0.0, %v262
  %264 = vmatprep.mubr.f32.mxu0 0.0
  %265 = vmatmul.mubr.f32.gmra.mrb[0].mxu0 %v21
  %v266 = vpop.f32.mrb[0].mxu0
  %v267 = vadd.f32 0.0, %v266
  %v268 = vpop.f32.mrb[0].mxu0
  %v269 = vadd.f32 0.0, %v268
  %270 = vmatprep.mubr.f32.mxu0 0.0
  %271 = vmatmul.mubr.f32.gmra.mrb[0].mxu0 %v22
  %v272 = vpop.f32.mrb[0].mxu0
  %v273 = vadd.f32 0.0, %v272
  %v274 = vpop.f32.mrb[0].mxu0
  %v275 = vadd.f32 0.0, %v274
  %276 = vmatprep.mubr.f32.mxu0 0.0
  %277 = vmatmul.mubr.f32.gmra.mrb[0].mxu0 %v23
  %v278 = vpop.f32.mrb[0].mxu0
  %v279 = vadd.f32 0.0, %v278
  %v280 = vpop.f32.mrb[0].mxu0
  %v281 = vadd.f32 0.0, %v280
  %282 = vmatprep.mubr.f32.mxu0 0.0
  %283 = vmatmul.mubr.f32.gmra.mrb[0].mxu0 %v24
  %v284 = vpop.f32.mrb[0].mxu0
  %v285 = vadd.f32 0.0, %v284
  %v286 = vpop.f32.mrb[0].mxu0
  %v287 = vadd.f32 0.0, %v286
  %288 = vmatprep.mubr.f32.mxu0 0.0
  %289 = vmatmul.mubr.f32.gmra.mrb[0].mxu0 %v25
  %v290 = vpop.f32.mrb[0].mxu0
  %v291 = vadd.f32 0.0, %v290
  %v292 = vpop.f32.mrb[0].mxu0
  %v293 = vadd.f32 0.0, %v292
  %294 = vmatprep.mubr.f32.mxu0 0.0
  %295 = vmatmul.mubr.f32.gmra.mrb[0].mxu0 %v26
  %v296 = vpop.f32.mrb[0].mxu0
  %v297 = vadd.f32 0.0, %v296
  %v298 = vpop.f32.mrb[0].mxu0
  %v299 = vadd.f32 0.0, %v298
  %300 = vmatprep.mubr.f32.mxu0 0.0
  %301 = vmatmul.mubr.f32.gmra.mrb[0].mxu0 %v27
  %v302 = vpop.f32.mrb[0].mxu0
  %v303 = vadd.f32 0.0, %v302
  %v304 = vpop.f32.mrb[0].mxu0
  %v305 = vadd.f32 0.0, %v304
  %306 = vmatprep.mubr.f32.mxu0 0.0
  %307 = vmatmul.mubr.f32.gmra.mrb[0].mxu0 %v28
  %v308 = vpop.f32.mrb[0].mxu0
  %v309 = vadd.f32 0.0, %v308
  %v310 = vpop.f32.mrb[0].mxu0
  %v311 = vadd.f32 0.0, %v310
  %312 = vmatprep.mubr.f32.mxu0 0.0
  %313 = vmatmul.mubr.f32.gmra.mrb[0].mxu0 %v29
  %v314 = vpop.f32.mrb[0].mxu0
  %v315 = vadd.f32 0.0, %v314
  %v316 = vpop.f32.mrb[0].mxu0
  %v317 = vadd.f32 0.0, %v316
  %318 = vdwg.mxu0
  %319 = vmatprep.subr.mxu0 %v33
  %320 = vmatpush1.msra.mxu0 %v32
  %321 = vmatprep.subr.mxu0 %v41
  %322 = vmatpush1.msra.mxu0 %v40
  %323 = vmatprep.subr.mxu0 %v49
  %324 = vmatpush1.msra.mxu0 %v48
  %325 = vmatprep.subr.mxu0 %v57
  %326 = vmatpush1.msra.mxu0 %v56
  %327 = vmatprep.subr.mxu0 %v65
  %328 = vmatpush1.msra.mxu0 %v64
  %329 = vmatprep.subr.mxu0 %v73
  %330 = vmatpush1.msra.mxu0 %v72
  %331 = vmatprep.subr.mxu0 %v81
  %332 = vmatpush1.msra.mxu0 %v80
  %333 = vmatprep.subr.mxu0 %v89
  %334 = vmatpush1.msra.mxu0 %v88
  %335 = vmatprep.subr.mxu0 %v97
  %336 = vmatpush1.msra.mxu0 %v96
  %337 = vmatprep.subr.mxu0 %v105
  %338 = vmatpush1.msra.mxu0 %v104
  %339 = vmatprep.subr.mxu0 %v113
  %340 = vmatpush1.msra.mxu0 %v112
  %341 = vmatprep.subr.mxu0 %v121
  %342 = vmatpush1.msra.mxu0 %v120
  %343 = vmatprep.subr.mxu0 %v129
  %344 = vmatpush1.msra.mxu0 %v128
  %345 = vmatprep.subr.mxu0 %v137
  %346 = vmatpush1.msra.mxu0 %v136
  %347 = vmatprep.subr.mxu0 %v145
  %348 = vmatpush1.msra.mxu0 %v144
  %349 = vmatprep.subr.mxu0 %v153
  %350 = vmatpush1.msra.mxu0 %v152
  %351 = vmatprep.subr.mxu0 0.0
  %352 = vmatpush1.msra.mxu0 0.0
  %353 = vmatprep.subr.mxu0 0.0
  %354 = vmatpush1.msra.mxu0 0.0
  %355 = vmatprep.subr.mxu0 0.0
  %356 = vmatpush1.msra.mxu0 0.0
  %357 = vmatprep.subr.mxu0 0.0
  %358 = vmatpush1.msra.mxu0 0.0
  %359 = vmatprep.subr.mxu0 0.0
  %360 = vmatpush1.msra.mxu0 0.0
  %361 = vmatprep.subr.mxu0 0.0
  %362 = vmatpush1.msra.mxu0 0.0
  %363 = vmatprep.subr.mxu0 0.0
  %364 = vmatpush1.msra.mxu0 0.0
  %365 = vmatprep.subr.mxu0 0.0
  %366 = vmatpush1.msra.mxu0 0.0
  %367 = vmatprep.subr.mxu0 0.0
  %368 = vmatpush1.msra.mxu0 0.0
  %369 = vmatprep.subr.mxu0 0.0
  %370 = vmatpush1.msra.mxu0 0.0
  %371 = vmatprep.subr.mxu0 0.0
  %372 = vmatpush1.msra.mxu0 0.0
  %373 = vmatprep.subr.mxu0 0.0
  %374 = vmatpush1.msra.mxu0 0.0
  %375 = vmatprep.subr.mxu0 0.0
  %376 = vmatpush1.msra.mxu0 0.0
  %377 = vmatprep.subr.mxu0 0.0
  %378 = vmatpush1.msra.mxu0 0.0
  %379 = vmatprep.subr.mxu0 0.0
  %380 = vmatpush1.msra.mxu0 0.0
  %381 = vmatprep.subr.mxu0 0.0
  %382 = vmatpush1.msra.mxu0 0.0
  %383 = vmatprep.mubr.f32.mxu0 0.0
  %384 = vmatmul.mubr.f32.gmra.mrb[0].mxu0 %v14
  %v385 = vpop.f32.mrb[0].mxu0
  %v386 = vadd.f32 0.0, %v385
  %v387 = vpop.f32.mrb[0].mxu0
  %v388 = vadd.f32 0.0, %v387
  %389 = vmatprep.mubr.f32.mxu0 0.0
  %390 = vmatmul.mubr.f32.gmra.mrb[0].mxu0 %v15
  %v391 = vpop.f32.mrb[0].mxu0
  %v392 = vadd.f32 0.0, %v391
  %v393 = vpop.f32.mrb[0].mxu0
  %v394 = vadd.f32 0.0, %v393
  %395 = vmatprep.mubr.f32.mxu0 0.0
  %396 = vmatmul.mubr.f32.gmra.mrb[0].mxu0 %v16
  %v397 = vpop.f32.mrb[0].mxu0
  %v398 = vadd.f32 0.0, %v397
  %v399 = vpop.f32.mrb[0].mxu0
  %v400 = vadd.f32 0.0, %v399
  %401 = vmatprep.mubr.f32.mxu0 0.0
  %402 = vmatmul.mubr.f32.gmra.mrb[0].mxu0 %v17
  %v403 = vpop.f32.mrb[0].mxu0
  %v404 = vadd.f32 0.0, %v403
  %v405 = vpop.f32.mrb[0].mxu0
  %v406 = vadd.f32 0.0, %v405
  %407 = vmatprep.mubr.f32.mxu0 0.0
  %408 = vmatmul.mubr.f32.gmra.mrb[0].mxu0 %v18
  %v409 = vpop.f32.mrb[0].mxu0
  %v410 = vadd.f32 0.0, %v409
  %v411 = vpop.f32.mrb[0].mxu0
  %v412 = vadd.f32 0.0, %v411
  %413 = vmatprep.mubr.f32.mxu0 0.0
  %414 = vmatmul.mubr.f32.gmra.mrb[0].mxu0 %v19
  %v415 = vpop.f32.mrb[0].mxu0
  %v416 = vadd.f32 0.0, %v415
  %v417 = vpop.f32.mrb[0].mxu0
  %v418 = vadd.f32 0.0, %v417
  %419 = vmatprep.mubr.f32.mxu0 0.0
  %420 = vmatmul.mubr.f32.gmra.mrb[0].mxu0 %v20
  %v421 = vpop.f32.mrb[0].mxu0
  %v422 = vadd.f32 0.0, %v421
  %v423 = vpop.f32.mrb[0].mxu0
  %v424 = vadd.f32 0.0, %v423
  %425 = vmatprep.mubr.f32.mxu0 0.0
  %426 = vmatmul.mubr.f32.gmra.mrb[0].mxu0 %v21
  %v427 = vpop.f32.mrb[0].mxu0
  %v428 = vadd.f32 0.0, %v427
  %v429 = vpop.f32.mrb[0].mxu0
  %v430 = vadd.f32 0.0, %v429
  %431 = vmatprep.mubr.f32.mxu0 0.0
  %432 = vmatmul.mubr.f32.gmra.mrb[0].mxu0 %v22
  %v433 = vpop.f32.mrb[0].mxu0
  %v434 = vadd.f32 0.0, %v433
  %v435 = vpop.f32.mrb[0].mxu0
  %v436 = vadd.f32 0.0, %v435
  %437 = vmatprep.mubr.f32.mxu0 0.0
  %438 = vmatmul.mubr.f32.gmra.mrb[0].mxu0 %v23
  %v439 = vpop.f32.mrb[0].mxu0
  %v440 = vadd.f32 0.0, %v439
  %v441 = vpop.f32.mrb[0].mxu0
  %v442 = vadd.f32 0.0, %v441
  %443 = vmatprep.mubr.f32.mxu0 0.0
  %444 = vmatmul.mubr.f32.gmra.mrb[0].mxu0 %v24
  %v445 = vpop.f32.mrb[0].mxu0
  %v446 = vadd.f32 0.0, %v445
  %v447 = vpop.f32.mrb[0].mxu0
  %v448 = vadd.f32 0.0, %v447
  %449 = vmatprep.mubr.f32.mxu0 0.0
  %450 = vmatmul.mubr.f32.gmra.mrb[0].mxu0 %v25
  %v451 = vpop.f32.mrb[0].mxu0
  %v452 = vadd.f32 0.0, %v451
  %v453 = vpop.f32.mrb[0].mxu0
  %v454 = vadd.f32 0.0, %v453
  %455 = vmatprep.mubr.f32.mxu0 0.0
  %456 = vmatmul.mubr.f32.gmra.mrb[0].mxu0 %v26
  %v457 = vpop.f32.mrb[0].mxu0
  %v458 = vadd.f32 0.0, %v457
  %v459 = vpop.f32.mrb[0].mxu0
  %v460 = vadd.f32 0.0, %v459
  %461 = vmatprep.mubr.f32.mxu0 0.0
  %462 = vmatmul.mubr.f32.gmra.mrb[0].mxu0 %v27
  %v463 = vpop.f32.mrb[0].mxu0
  %v464 = vadd.f32 0.0, %v463
  %v465 = vpop.f32.mrb[0].mxu0
  %v466 = vadd.f32 0.0, %v465
  %467 = vmatprep.mubr.f32.mxu0 0.0
  %468 = vmatmul.mubr.f32.gmra.mrb[0].mxu0 %v28
  %v469 = vpop.f32.mrb[0].mxu0
  %v470 = vadd.f32 0.0, %v469
  %v471 = vpop.f32.mrb[0].mxu0
  %v472 = vadd.f32 0.0, %v471
  %473 = vmatprep.mubr.f32.mxu0 0.0
  %474 = vmatmul.mubr.f32.gmra.mrb[0].mxu0 %v29
  %v475 = vpop.f32.mrb[0].mxu0
  %v476 = vadd.f32 0.0, %v475
  %v477 = vpop.f32.mrb[0].mxu0
  %v478 = vadd.f32 0.0, %v477
  %479 = vdwg.mxu0
  %480 = vmatprep.subr.mxu0 %v35
  %481 = vmatpush1.msra.mxu0 %v34
  %482 = vmatprep.subr.mxu0 %v43
  %483 = vmatpush1.msra.mxu0 %v42
  %484 = vmatprep.subr.mxu0 %v51
  %485 = vmatpush1.msra.mxu0 %v50
  %486 = vmatprep.subr.mxu0 %v59
  %487 = vmatpush1.msra.mxu0 %v58
  %488 = vmatprep.subr.mxu0 %v67
  %489 = vmatpush1.msra.mxu0 %v66
  %490 = vmatprep.subr.mxu0 %v75
  %491 = vmatpush1.msra.mxu0 %v74
  %492 = vmatprep.subr.mxu0 %v83
  %493 = vmatpush1.msra.mxu0 %v82
  %494 = vmatprep.subr.mxu0 %v91
  %495 = vmatpush1.msra.mxu0 %v90
  %496 = vmatprep.subr.mxu0 %v99
  %497 = vmatpush1.msra.mxu0 %v98
  %498 = vmatprep.subr.mxu0 %v107
  %499 = vmatpush1.msra.mxu0 %v106
  %500 = vmatprep.subr.mxu0 %v115
  %501 = vmatpush1.msra.mxu0 %v114
  %502 = vmatprep.subr.mxu0 %v123
  %503 = vmatpush1.msra.mxu0 %v122
  %504 = vmatprep.subr.mxu0 %v131
  %505 = vmatpush1.msra.mxu0 %v130
  %506 = vmatprep.subr.mxu0 %v139
  %507 = vmatpush1.msra.mxu0 %v138
  %508 = vmatprep.subr.mxu0 %v147
  %509 = vmatpush1.msra.mxu0 %v146
  %510 = vmatprep.subr.mxu0 %v155
  %511 = vmatpush1.msra.mxu0 %v154
  %512 = vmatprep.subr.mxu0 0.0
  %513 = vmatpush1.msra.mxu0 0.0
  %514 = vmatprep.subr.mxu0 0.0
  %515 = vmatpush1.msra.mxu0 0.0
  %516 = vmatprep.subr.mxu0 0.0
  %517 = vmatpush1.msra.mxu0 0.0
  %518 = vmatprep.subr.mxu0 0.0
  %519 = vmatpush1.msra.mxu0 0.0
  %520 = vmatprep.subr.mxu0 0.0
  %521 = vmatpush1.msra.mxu0 0.0
  %522 = vmatprep.subr.mxu0 0.0
  %523 = vmatpush1.msra.mxu0 0.0
  %524 = vmatprep.subr.mxu0 0.0
  %525 = vmatpush1.msra.mxu0 0.0
  %526 = vmatprep.subr.mxu0 0.0
  %527 = vmatpush1.msra.mxu0 0.0
  %528 = vmatprep.subr.mxu0 0.0
  %529 = vmatpush1.msra.mxu0 0.0
  %530 = vmatprep.subr.mxu0 0.0
  %531 = vmatpush1.msra.mxu0 0.0
  %532 = vmatprep.subr.mxu0 0.0
  %533 = vmatpush1.msra.mxu0 0.0
  %534 = vmatprep.subr.mxu0 0.0
  %535 = vmatpush1.msra.mxu0 0.0
  %536 = vmatprep.subr.mxu0 0.0
  %537 = vmatpush1.msra.mxu0 0.0
  %538 = vmatprep.subr.mxu0 0.0
  %539 = vmatpush1.msra.mxu0 0.0
  %540 = vmatprep.subr.mxu0 0.0
  %541 = vmatpush1.msra.mxu0 0.0
  %542 = vmatprep.subr.mxu0 0.0
  %543 = vmatpush1.msra.mxu0 0.0
  %544 = vmatprep.mubr.f32.mxu0 0.0
  %545 = vmatmul.mubr.f32.gmra.mrb[0].mxu0 %v14
  %v546 = vpop.f32.mrb[0].mxu0
  %v547 = vadd.f32 0.0, %v546
  %v548 = vpop.f32.mrb[0].mxu0
  %v549 = vadd.f32 0.0, %v548
  %550 = vmatprep.mubr.f32.mxu0 0.0
  %551 = vmatmul.mubr.f32.gmra.mrb[0].mxu0 %v15
  %v552 = vpop.f32.mrb[0].mxu0
  %v553 = vadd.f32 0.0, %v552
  %v554 = vpop.f32.mrb[0].mxu0
  %v555 = vadd.f32 0.0, %v554
  %556 = vmatprep.mubr.f32.mxu0 0.0
  %557 = vmatmul.mubr.f32.gmra.mrb[0].mxu0 %v16
  %v558 = vpop.f32.mrb[0].mxu0
  %v559 = vadd.f32 0.0, %v558
  %v560 = vpop.f32.mrb[0].mxu0
  %v561 = vadd.f32 0.0, %v560
  %562 = vmatprep.mubr.f32.mxu0 0.0
  %563 = vmatmul.mubr.f32.gmra.mrb[0].mxu0 %v17
  %v564 = vpop.f32.mrb[0].mxu0
  %v565 = vadd.f32 0.0, %v564
  %v566 = vpop.f32.mrb[0].mxu0
  %v567 = vadd.f32 0.0, %v566
  %568 = vmatprep.mubr.f32.mxu0 0.0
  %569 = vmatmul.mubr.f32.gmra.mrb[0].mxu0 %v18
  %v570 = vpop.f32.mrb[0].mxu0
  %v571 = vadd.f32 0.0, %v570
  %v572 = vpop.f32.mrb[0].mxu0
  %v573 = vadd.f32 0.0, %v572
  %574 = vmatprep.mubr.f32.mxu0 0.0
  %575 = vmatmul.mubr.f32.gmra.mrb[0].mxu0 %v19
  %v576 = vpop.f32.mrb[0].mxu0
  %v577 = vadd.f32 0.0, %v576
  %v578 = vpop.f32.mrb[0].mxu0
  %v579 = vadd.f32 0.0, %v578
  %580 = vmatprep.mubr.f32.mxu0 0.0
  %581 = vmatmul.mubr.f32.gmra.mrb[0].mxu0 %v20
  %v582 = vpop.f32.mrb[0].mxu0
  %v583 = vadd.f32 0.0, %v582
  %v584 = vpop.f32.mrb[0].mxu0
  %v585 = vadd.f32 0.0, %v584
  %586 = vmatprep.mubr.f32.mxu0 0.0
  %587 = vmatmul.mubr.f32.gmra.mrb[0].mxu0 %v21
  %v588 = vpop.f32.mrb[0].mxu0
  %v589 = vadd.f32 0.0, %v588
  %v590 = vpop.f32.mrb[0].mxu0
  %v591 = vadd.f32 0.0, %v590
  %592 = vmatprep.mubr.f32.mxu0 0.0
  %593 = vmatmul.mubr.f32.gmra.mrb[0].mxu0 %v22
  %v594 = vpop.f32.mrb[0].mxu0
  %v595 = vadd.f32 0.0, %v594
  %v596 = vpop.f32.mrb[0].mxu0
  %v597 = vadd.f32 0.0, %v596
  %598 = vmatprep.mubr.f32.mxu0 0.0
  %599 = vmatmul.mubr.f32.gmra.mrb[0].mxu0 %v23
  %v600 = vpop.f32.mrb[0].mxu0
  %v601 = vadd.f32 0.0, %v600
  %v602 = vpop.f32.mrb[0].mxu0
  %v603 = vadd.f32 0.0, %v602
  %604 = vmatprep.mubr.f32.mxu0 0.0
  %605 = vmatmul.mubr.f32.gmra.mrb[0].mxu0 %v24
  %v606 = vpop.f32.mrb[0].mxu0
  %v607 = vadd.f32 0.0, %v606
  %v608 = vpop.f32.mrb[0].mxu0
  %v609 = vadd.f32 0.0, %v608
  %610 = vmatprep.mubr.f32.mxu0 0.0
  %611 = vmatmul.mubr.f32.gmra.mrb[0].mxu0 %v25
  %v612 = vpop.f32.mrb[0].mxu0
  %v613 = vadd.f32 0.0, %v612
  %v614 = vpop.f32.mrb[0].mxu0
  %v615 = vadd.f32 0.0, %v614
  %616 = vmatprep.mubr.f32.mxu0 0.0
  %617 = vmatmul.mubr.f32.gmra.mrb[0].mxu0 %v26
  %v618 = vpop.f32.mrb[0].mxu0
  %v619 = vadd.f32 0.0, %v618
  %v620 = vpop.f32.mrb[0].mxu0
  %v621 = vadd.f32 0.0, %v620
  %622 = vmatprep.mubr.f32.mxu0 0.0
  %623 = vmatmul.mubr.f32.gmra.mrb[0].mxu0 %v27
  %v624 = vpop.f32.mrb[0].mxu0
  %v625 = vadd.f32 0.0, %v624
  %v626 = vpop.f32.mrb[0].mxu0
  %v627 = vadd.f32 0.0, %v626
  %628 = vmatprep.mubr.f32.mxu0 0.0
  %629 = vmatmul.mubr.f32.gmra.mrb[0].mxu0 %v28
  %v630 = vpop.f32.mrb[0].mxu0
  %v631 = vadd.f32 0.0, %v630
  %v632 = vpop.f32.mrb[0].mxu0
  %v633 = vadd.f32 0.0, %v632
  %634 = vmatprep.mubr.f32.mxu0 0.0
  %635 = vmatmul.mubr.f32.gmra.mrb[0].mxu0 %v29
  %v636 = vpop.f32.mrb[0].mxu0
  %v637 = vadd.f32 0.0, %v636
  %v638 = vpop.f32.mrb[0].mxu0
  %v639 = vadd.f32 0.0, %v638
  %640 = vdwg.mxu0
  %641 = vmatprep.subr.mxu0 %v37
  %642 = vmatpush1.msra.mxu0 %v36
  %643 = vmatprep.subr.mxu0 %v45
  %644 = vmatpush1.msra.mxu0 %v44
  %645 = vmatprep.subr.mxu0 %v53
  %646 = vmatpush1.msra.mxu0 %v52
  %647 = vmatprep.subr.mxu0 %v61
  %648 = vmatpush1.msra.mxu0 %v60
  %649 = vmatprep.subr.mxu0 %v69
  %650 = vmatpush1.msra.mxu0 %v68
  %651 = vmatprep.subr.mxu0 %v77
  %652 = vmatpush1.msra.mxu0 %v76
  %653 = vmatprep.subr.mxu0 %v85
  %654 = vmatpush1.msra.mxu0 %v84
  %655 = vmatprep.subr.mxu0 %v93
  %656 = vmatpush1.msra.mxu0 %v92
  %657 = vmatprep.subr.mxu0 %v101
  %658 = vmatpush1.msra.mxu0 %v100
  %659 = vmatprep.subr.mxu0 %v109
  %660 = vmatpush1.msra.mxu0 %v108
  %661 = vmatprep.subr.mxu0 %v117
  %662 = vmatpush1.msra.mxu0 %v116
  %663 = vmatprep.subr.mxu0 %v125
  %664 = vmatpush1.msra.mxu0 %v124
  %665 = vmatprep.subr.mxu0 %v133
  %666 = vmatpush1.msra.mxu0 %v132
  %667 = vmatprep.subr.mxu0 %v141
  %668 = vmatpush1.msra.mxu0 %v140
  %669 = vmatprep.subr.mxu0 %v149
  %670 = vmatpush1.msra.mxu0 %v148
  %671 = vmatprep.subr.mxu0 %v157
  %672 = vmatpush1.msra.mxu0 %v156
  %673 = vmatprep.subr.mxu0 0.0
  %674 = vmatpush1.msra.mxu0 0.0
  %675 = vmatprep.subr.mxu0 0.0
  %676 = vmatpush1.msra.mxu0 0.0
  %677 = vmatprep.subr.mxu0 0.0
  %678 = vmatpush1.msra.mxu0 0.0
  %679 = vmatprep.subr.mxu0 0.0
  %680 = vmatpush1.msra.mxu0 0.0
  %681 = vmatprep.subr.mxu0 0.0
  %682 = vmatpush1.msra.mxu0 0.0
  %683 = vmatprep.subr.mxu0 0.0
  %684 = vmatpush1.msra.mxu0 0.0
  %685 = vmatprep.subr.mxu0 0.0
  %686 = vmatpush1.msra.mxu0 0.0
  %687 = vmatprep.subr.mxu0 0.0
  %688 = vmatpush1.msra.mxu0 0.0
  %689 = vmatprep.subr.mxu0 0.0
  %690 = vmatpush1.msra.mxu0 0.0
  %691 = vmatprep.subr.mxu0 0.0
  %692 = vmatpush1.msra.mxu0 0.0
  %693 = vmatprep.subr.mxu0 0.0
  %694 = vmatpush1.msra.mxu0 0.0
  %695 = vmatprep.subr.mxu0 0.0
  %696 = vmatpush1.msra.mxu0 0.0
  %697 = vmatprep.subr.mxu0 0.0
  %698 = vmatpush1.msra.mxu0 0.0
  %699 = vmatprep.subr.mxu0 0.0
  %700 = vmatpush1.msra.mxu0 0.0
  %701 = vmatprep.subr.mxu0 0.0
  %702 = vmatpush1.msra.mxu0 0.0
  %703 = vmatprep.subr.mxu0 0.0
  %704 = vmatpush1.msra.mxu0 0.0
  %705 = vmatprep.mubr.f32.mxu0 0.0
  %706 = vmatmul.mubr.f32.gmra.mrb[0].mxu0 %v14
  %v707 = vpop.f32.mrb[0].mxu0
  %v708 = vadd.f32 0.0, %v707
  %v709 = vpop.f32.mrb[0].mxu0
  %v710 = vadd.f32 0.0, %v709
  %711 = vmatprep.mubr.f32.mxu0 0.0
  %712 = vmatmul.mubr.f32.gmra.mrb[0].mxu0 %v15
  %v713 = vpop.f32.mrb[0].mxu0
  %v714 = vadd.f32 0.0, %v713
  %v715 = vpop.f32.mrb[0].mxu0
  %v716 = vadd.f32 0.0, %v715
  %717 = vmatprep.mubr.f32.mxu0 0.0
  %718 = vmatmul.mubr.f32.gmra.mrb[0].mxu0 %v16
  %v719 = vpop.f32.mrb[0].mxu0
  %v720 = vadd.f32 0.0, %v719
  %v721 = vpop.f32.mrb[0].mxu0
  %v722 = vadd.f32 0.0, %v721
  %723 = vmatprep.mubr.f32.mxu0 0.0
  %724 = vmatmul.mubr.f32.gmra.mrb[0].mxu0 %v17
  %v725 = vpop.f32.mrb[0].mxu0
  %v726 = vadd.f32 0.0, %v725
  %v727 = vpop.f32.mrb[0].mxu0
  %v728 = vadd.f32 0.0, %v727
  %729 = vmatprep.mubr.f32.mxu0 0.0
  %730 = vmatmul.mubr.f32.gmra.mrb[0].mxu0 %v18
  %v731 = vpop.f32.mrb[0].mxu0
  %v732 = vadd.f32 0.0, %v731
  %v733 = vpop.f32.mrb[0].mxu0
  %v734 = vadd.f32 0.0, %v733
  %735 = vmatprep.mubr.f32.mxu0 0.0
  %736 = vmatmul.mubr.f32.gmra.mrb[0].mxu0 %v19
  %v737 = vpop.f32.mrb[0].mxu0
  %v738 = vadd.f32 0.0, %v737
  %v739 = vpop.f32.mrb[0].mxu0
  %v740 = vadd.f32 0.0, %v739
  %741 = vmatprep.mubr.f32.mxu0 0.0
  %742 = vmatmul.mubr.f32.gmra.mrb[0].mxu0 %v20
  %v743 = vpop.f32.mrb[0].mxu0
  %v744 = vadd.f32 0.0, %v743
  %v745 = vpop.f32.mrb[0].mxu0
  %v746 = vadd.f32 0.0, %v745
  %747 = vmatprep.mubr.f32.mxu0 0.0
  %748 = vmatmul.mubr.f32.gmra.mrb[0].mxu0 %v21
  %v749 = vpop.f32.mrb[0].mxu0
  %v750 = vadd.f32 0.0, %v749
  %v751 = vpop.f32.mrb[0].mxu0
  %v752 = vadd.f32 0.0, %v751
  %753 = vmatprep.mubr.f32.mxu0 0.0
  %754 = vmatmul.mubr.f32.gmra.mrb[0].mxu0 %v22
  %v755 = vpop.f32.mrb[0].mxu0
  %v756 = vadd.f32 0.0, %v755
  %v757 = vpop.f32.mrb[0].mxu0
  %v758 = vadd.f32 0.0, %v757
  %759 = vmatprep.mubr.f32.mxu0 0.0
  %760 = vmatmul.mubr.f32.gmra.mrb[0].mxu0 %v23
  %v761 = vpop.f32.mrb[0].mxu0
  %v762 = vadd.f32 0.0, %v761
  %v763 = vpop.f32.mrb[0].mxu0
  %v764 = vadd.f32 0.0, %v763
  %765 = vmatprep.mubr.f32.mxu0 0.0
  %766 = vmatmul.mubr.f32.gmra.mrb[0].mxu0 %v24
  %v767 = vpop.f32.mrb[0].mxu0
  %v768 = vadd.f32 0.0, %v767
  %v769 = vpop.f32.mrb[0].mxu0
  %v770 = vadd.f32 0.0, %v769
  %771 = vmatprep.mubr.f32.mxu0 0.0
  %772 = vmatmul.mubr.f32.gmra.mrb[0].mxu0 %v25
  %v773 = vpop.f32.mrb[0].mxu0
  %v774 = vadd.f32 0.0, %v773
  %v775 = vpop.f32.mrb[0].mxu0
  %v776 = vadd.f32 0.0, %v775
  %777 = vmatprep.mubr.f32.mxu0 0.0
  %778 = vmatmul.mubr.f32.gmra.mrb[0].mxu0 %v26
  %v779 = vpop.f32.mrb[0].mxu0
  %v780 = vadd.f32 0.0, %v779
  %v781 = vpop.f32.mrb[0].mxu0
  %v782 = vadd.f32 0.0, %v781
  %783 = vmatprep.mubr.f32.mxu0 0.0
  %784 = vmatmul.mubr.f32.gmra.mrb[0].mxu0 %v27
  %v785 = vpop.f32.mrb[0].mxu0
  %v786 = vadd.f32 0.0, %v785
  %v787 = vpop.f32.mrb[0].mxu0
  %v788 = vadd.f32 0.0, %v787
  %789 = vmatprep.mubr.f32.mxu0 0.0
  %790 = vmatmul.mubr.f32.gmra.mrb[0].mxu0 %v28
  %v791 = vpop.f32.mrb[0].mxu0
  %v792 = vadd.f32 0.0, %v791
  %v793 = vpop.f32.mrb[0].mxu0
  %v794 = vadd.f32 0.0, %v793
  %795 = vmatprep.mubr.f32.mxu0 0.0
  %796 = vmatmul.mubr.f32.gmra.mrb[0].mxu0 %v29
  %v797 = vpop.f32.mrb[0].mxu0
  %v798 = vadd.f32 0.0, %v797
  %v799 = vpop.f32.mrb[0].mxu0
  %v800 = vadd.f32 0.0, %v799
  %801 = vdwg.mxu0
  %v802 = vld [vmem:[%s1] sm:$0xff]
  %v803 = vld [vmem:[%s1 + $0x8] sm:$0xff]
  %v804 = vld [vmem:[%s1 + $0x10] sm:$0xff]
  %v805 = vld [vmem:[%s1 + $0x18] sm:$0xff]
  %v806 = vld [vmem:[%s1 + $0x20] sm:$0xff]
  %v807 = vld [vmem:[%s1 + $0x28] sm:$0xff]
  %v808 = vld [vmem:[%s1 + $0x30] sm:$0xff]
  %v809 = vld [vmem:[%s1 + $0x38] sm:$0xff]
  %v810 = vld [vmem:[%s1 + $0x40] sm:$0xff]
  %v811 = vld [vmem:[%s1 + $0x48] sm:$0xff]
  %v812 = vld [vmem:[%s1 + $0x50] sm:$0xff]
  %v813 = vld [vmem:[%s1 + $0x58] sm:$0xff]
  %v814 = vld [vmem:[%s1 + $0x60] sm:$0xff]
  %v815 = vld [vmem:[%s1 + $0x68] sm:$0xff]
  %v816 = vld [vmem:[%s1 + $0x70] sm:$0xff]
  %v817 = vld [vmem:[%s1 + $0x78] sm:$0xff]
  %819 = vset.pattern.permute.xlu0 0
  %820 = vperm.xlu0 %819, %v802
  %v821 = vpop.permute.xlu0 %820
  %824 = vset.pattern.permute.xlu0 0
  %825 = vperm.xlu0 %824, %v803
  %v826 = vpop.permute.xlu0 %825
  %829 = vset.pattern.permute.xlu0 0
  %830 = vperm.xlu0 %829, %v804
  %v831 = vpop.permute.xlu0 %830
  %834 = vset.pattern.permute.xlu0 0
  %835 = vperm.xlu0 %834, %v805
  %v836 = vpop.permute.xlu0 %835
  %839 = vset.pattern.permute.xlu0 0
  %840 = vperm.xlu0 %839, %v806
  %v841 = vpop.permute.xlu0 %840
  %844 = vset.pattern.permute.xlu0 0
  %845 = vperm.xlu0 %844, %v807
  %v846 = vpop.permute.xlu0 %845
  %849 = vset.pattern.permute.xlu0 0
  %850 = vperm.xlu0 %849, %v808
  %v851 = vpop.permute.xlu0 %850
  %854 = vset.pattern.permute.xlu0 0
  %855 = vperm.xlu0 %854, %v809
  %v856 = vpop.permute.xlu0 %855
  %859 = vset.pattern.permute.xlu0 0
  %860 = vperm.xlu0 %859, %v810
  %v861 = vpop.permute.xlu0 %860
  %864 = vset.pattern.permute.xlu0 0
  %865 = vperm.xlu0 %864, %v811
  %v866 = vpop.permute.xlu0 %865
  %869 = vset.pattern.permute.xlu0 0
  %870 = vperm.xlu0 %869, %v812
  %v871 = vpop.permute.xlu0 %870
  %874 = vset.pattern.permute.xlu0 0
  %875 = vperm.xlu0 %874, %v813
  %v876 = vpop.permute.xlu0 %875
  %879 = vset.pattern.permute.xlu0 0
  %880 = vperm.xlu0 %879, %v814
  %v881 = vpop.permute.xlu0 %880
  %884 = vset.pattern.permute.xlu0 0
  %885 = vperm.xlu0 %884, %v815
  %v886 = vpop.permute.xlu0 %885
  %889 = vset.pattern.permute.xlu0 0
  %890 = vperm.xlu0 %889, %v816
  %v891 = vpop.permute.xlu0 %890
  %894 = vset.pattern.permute.xlu0 0
  %895 = vperm.xlu0 %894, %v817
  %v896 = vpop.permute.xlu0 %895
  %v898 = vmul.f32 %v821, %v225
  %v899 = vmul.f32 %v826, %v231
  %v900 = vmul.f32 %v831, %v237
  %v901 = vmul.f32 %v836, %v243
  %v902 = vmul.f32 %v841, %v249
  %v903 = vmul.f32 %v846, %v255
  %v904 = vmul.f32 %v851, %v261
  %v905 = vmul.f32 %v856, %v267
  %v906 = vmul.f32 %v861, %v273
  %v907 = vmul.f32 %v866, %v279
  %v908 = vmul.f32 %v871, %v285
  %v909 = vmul.f32 %v876, %v291
  %v910 = vmul.f32 %v881, %v297
  %v911 = vmul.f32 %v886, %v303
  %v912 = vmul.f32 %v891, %v309
  %v913 = vmul.f32 %v896, %v315
  %914 = vset.pattern.permute.xlu0 1
  %915 = vperm.xlu0 %914, %v802
  %v916 = vpop.permute.xlu0 %915
  %918 = vset.pattern.permute.xlu0 1
  %919 = vperm.xlu0 %918, %v803
  %v920 = vpop.permute.xlu0 %919
  %922 = vset.pattern.permute.xlu0 1
  %923 = vperm.xlu0 %922, %v804
  %v924 = vpop.permute.xlu0 %923
  %926 = vset.pattern.permute.xlu0 1
  %927 = vperm.xlu0 %926, %v805
  %v928 = vpop.permute.xlu0 %927
  %930 = vset.pattern.permute.xlu0 1
  %931 = vperm.xlu0 %930, %v806
  %v932 = vpop.permute.xlu0 %931
  %934 = vset.pattern.permute.xlu0 1
  %935 = vperm.xlu0 %934, %v807
  %v936 = vpop.permute.xlu0 %935
  %938 = vset.pattern.permute.xlu0 1
  %939 = vperm.xlu0 %938, %v808
  %v940 = vpop.permute.xlu0 %939
  %942 = vset.pattern.permute.xlu0 1
  %943 = vperm.xlu0 %942, %v809
  %v944 = vpop.permute.xlu0 %943
  %946 = vset.pattern.permute.xlu0 1
  %947 = vperm.xlu0 %946, %v810
  %v948 = vpop.permute.xlu0 %947
  %950 = vset.pattern.permute.xlu0 1
  %951 = vperm.xlu0 %950, %v811
  %v952 = vpop.permute.xlu0 %951
  %954 = vset.pattern.permute.xlu0 1
  %955 = vperm.xlu0 %954, %v812
  %v956 = vpop.permute.xlu0 %955
  %958 = vset.pattern.permute.xlu0 1
  %959 = vperm.xlu0 %958, %v813
  %v960 = vpop.permute.xlu0 %959
  %962 = vset.pattern.permute.xlu0 1
  %963 = vperm.xlu0 %962, %v814
  %v964 = vpop.permute.xlu0 %963
  %966 = vset.pattern.permute.xlu0 1
  %967 = vperm.xlu0 %966, %v815
  %v968 = vpop.permute.xlu0 %967
  %970 = vset.pattern.permute.xlu0 1
  %971 = vperm.xlu0 %970, %v816
  %v972 = vpop.permute.xlu0 %971
  %974 = vset.pattern.permute.xlu0 1
  %975 = vperm.xlu0 %974, %v817
  %v976 = vpop.permute.xlu0 %975
  %v978 = vmul.f32 %v916, %v227
  %v979 = vmul.f32 %v920, %v233
  %v980 = vmul.f32 %v924, %v239
  %v981 = vmul.f32 %v928, %v245
  %v982 = vmul.f32 %v932, %v251
  %v983 = vmul.f32 %v936, %v257
  %v984 = vmul.f32 %v940, %v263
  %v985 = vmul.f32 %v944, %v269
  %v986 = vmul.f32 %v948, %v275
  %v987 = vmul.f32 %v952, %v281
  %v988 = vmul.f32 %v956, %v287
  %v989 = vmul.f32 %v960, %v293
  %v990 = vmul.f32 %v964, %v299
  %v991 = vmul.f32 %v968, %v305
  %v992 = vmul.f32 %v972, %v311
  %v993 = vmul.f32 %v976, %v317
  %v994 = vadd.f32 %v898, %v978
  %v995 = vadd.f32 %v899, %v979
  %v996 = vadd.f32 %v900, %v980
  %v997 = vadd.f32 %v901, %v981
  %v998 = vadd.f32 %v902, %v982
  %v999 = vadd.f32 %v903, %v983
  %v1000 = vadd.f32 %v904, %v984
  %v1001 = vadd.f32 %v905, %v985
  %v1002 = vadd.f32 %v906, %v986
  %v1003 = vadd.f32 %v907, %v987
  %v1004 = vadd.f32 %v908, %v988
  %v1005 = vadd.f32 %v909, %v989
  %v1006 = vadd.f32 %v910, %v990
  %v1007 = vadd.f32 %v911, %v991
  %v1008 = vadd.f32 %v912, %v992
  %v1009 = vadd.f32 %v913, %v993
  %1010 = vset.pattern.permute.xlu0 2
  %1011 = vperm.xlu0 %1010, %v802
  %v1012 = vpop.permute.xlu0 %1011
  %1014 = vset.pattern.permute.xlu0 2
  %1015 = vperm.xlu0 %1014, %v803
  %v1016 = vpop.permute.xlu0 %1015
  %1018 = vset.pattern.permute.xlu0 2
  %1019 = vperm.xlu0 %1018, %v804
  %v1020 = vpop.permute.xlu0 %1019
  %1022 = vset.pattern.permute.xlu0 2
  %1023 = vperm.xlu0 %1022, %v805
  %v1024 = vpop.permute.xlu0 %1023
  %1026 = vset.pattern.permute.xlu0 2
  %1027 = vperm.xlu0 %1026, %v806
  %v1028 = vpop.permute.xlu0 %1027
  %1030 = vset.pattern.permute.xlu0 2
  %1031 = vperm.xlu0 %1030, %v807
  %v1032 = vpop.permute.xlu0 %1031
  %1034 = vset.pattern.permute.xlu0 2
  %1035 = vperm.xlu0 %1034, %v808
  %v1036 = vpop.permute.xlu0 %1035
  %1038 = vset.pattern.permute.xlu0 2
  %1039 = vperm.xlu0 %1038, %v809
  %v1040 = vpop.permute.xlu0 %1039
  %1042 = vset.pattern.permute.xlu0 2
  %1043 = vperm.xlu0 %1042, %v810
  %v1044 = vpop.permute.xlu0 %1043
  %1046 = vset.pattern.permute.xlu0 2
  %1047 = vperm.xlu0 %1046, %v811
  %v1048 = vpop.permute.xlu0 %1047
  %1050 = vset.pattern.permute.xlu0 2
  %1051 = vperm.xlu0 %1050, %v812
  %v1052 = vpop.permute.xlu0 %1051
  %1054 = vset.pattern.permute.xlu0 2
  %1055 = vperm.xlu0 %1054, %v813
  %v1056 = vpop.permute.xlu0 %1055
  %1058 = vset.pattern.permute.xlu0 2
  %1059 = vperm.xlu0 %1058, %v814
  %v1060 = vpop.permute.xlu0 %1059
  %1062 = vset.pattern.permute.xlu0 2
  %1063 = vperm.xlu0 %1062, %v815
  %v1064 = vpop.permute.xlu0 %1063
  %1066 = vset.pattern.permute.xlu0 2
  %1067 = vperm.xlu0 %1066, %v816
  %v1068 = vpop.permute.xlu0 %1067
  %1070 = vset.pattern.permute.xlu0 2
  %1071 = vperm.xlu0 %1070, %v817
  %v1072 = vpop.permute.xlu0 %1071
  %v1074 = vmul.f32 %v1012, %v386
  %v1075 = vmul.f32 %v1016, %v392
  %v1076 = vmul.f32 %v1020, %v398
  %v1077 = vmul.f32 %v1024, %v404
  %v1078 = vmul.f32 %v1028, %v410
  %v1079 = vmul.f32 %v1032, %v416
  %v1080 = vmul.f32 %v1036, %v422
  %v1081 = vmul.f32 %v1040, %v428
  %v1082 = vmul.f32 %v1044, %v434
  %v1083 = vmul.f32 %v1048, %v440
  %v1084 = vmul.f32 %v1052, %v446
  %v1085 = vmul.f32 %v1056, %v452
  %v1086 = vmul.f32 %v1060, %v458
  %v1087 = vmul.f32 %v1064, %v464
  %v1088 = vmul.f32 %v1068, %v470
  %v1089 = vmul.f32 %v1072, %v476
  %v1090 = vadd.f32 %v994, %v1074
  %v1091 = vadd.f32 %v995, %v1075
  %v1092 = vadd.f32 %v996, %v1076
  %v1093 = vadd.f32 %v997, %v1077
  %v1094 = vadd.f32 %v998, %v1078
  %v1095 = vadd.f32 %v999, %v1079
  %v1096 = vadd.f32 %v1000, %v1080
  %v1097 = vadd.f32 %v1001, %v1081
  %v1098 = vadd.f32 %v1002, %v1082
  %v1099 = vadd.f32 %v1003, %v1083
  %v1100 = vadd.f32 %v1004, %v1084
  %v1101 = vadd.f32 %v1005, %v1085
  %v1102 = vadd.f32 %v1006, %v1086
  %v1103 = vadd.f32 %v1007, %v1087
  %v1104 = vadd.f32 %v1008, %v1088
  %v1105 = vadd.f32 %v1009, %v1089
  %1106 = vset.pattern.permute.xlu0 3
  %1107 = vperm.xlu0 %1106, %v802
  %v1108 = vpop.permute.xlu0 %1107
  %1110 = vset.pattern.permute.xlu0 3
  %1111 = vperm.xlu0 %1110, %v803
  %v1112 = vpop.permute.xlu0 %1111
  %1114 = vset.pattern.permute.xlu0 3
  %1115 = vperm.xlu0 %1114, %v804
  %v1116 = vpop.permute.xlu0 %1115
  %1118 = vset.pattern.permute.xlu0 3
  %1119 = vperm.xlu0 %1118, %v805
  %v1120 = vpop.permute.xlu0 %1119
  %1122 = vset.pattern.permute.xlu0 3
  %1123 = vperm.xlu0 %1122, %v806
  %v1124 = vpop.permute.xlu0 %1123
  %1126 = vset.pattern.permute.xlu0 3
  %1127 = vperm.xlu0 %1126, %v807
  %v1128 = vpop.permute.xlu0 %1127
  %1130 = vset.pattern.permute.xlu0 3
  %1131 = vperm.xlu0 %1130, %v808
  %v1132 = vpop.permute.xlu0 %1131
  %1134 = vset.pattern.permute.xlu0 3
  %1135 = vperm.xlu0 %1134, %v809
  %v1136 = vpop.permute.xlu0 %1135
  %1138 = vset.pattern.permute.xlu0 3
  %1139 = vperm.xlu0 %1138, %v810
  %v1140 = vpop.permute.xlu0 %1139
  %1142 = vset.pattern.permute.xlu0 3
  %1143 = vperm.xlu0 %1142, %v811
  %v1144 = vpop.permute.xlu0 %1143
  %1146 = vset.pattern.permute.xlu0 3
  %1147 = vperm.xlu0 %1146, %v812
  %v1148 = vpop.permute.xlu0 %1147
  %1150 = vset.pattern.permute.xlu0 3
  %1151 = vperm.xlu0 %1150, %v813
  %v1152 = vpop.permute.xlu0 %1151
  %1154 = vset.pattern.permute.xlu0 3
  %1155 = vperm.xlu0 %1154, %v814
  %v1156 = vpop.permute.xlu0 %1155
  %1158 = vset.pattern.permute.xlu0 3
  %1159 = vperm.xlu0 %1158, %v815
  %v1160 = vpop.permute.xlu0 %1159
  %1162 = vset.pattern.permute.xlu0 3
  %1163 = vperm.xlu0 %1162, %v816
  %v1164 = vpop.permute.xlu0 %1163
  %1166 = vset.pattern.permute.xlu0 3
  %1167 = vperm.xlu0 %1166, %v817
  %v1168 = vpop.permute.xlu0 %1167
  %v1170 = vmul.f32 %v1108, %v388
  %v1171 = vmul.f32 %v1112, %v394
  %v1172 = vmul.f32 %v1116, %v400
  %v1173 = vmul.f32 %v1120, %v406
  %v1174 = vmul.f32 %v1124, %v412
  %v1175 = vmul.f32 %v1128, %v418
  %v1176 = vmul.f32 %v1132, %v424
  %v1177 = vmul.f32 %v1136, %v430
  %v1178 = vmul.f32 %v1140, %v436
  %v1179 = vmul.f32 %v1144, %v442
  %v1180 = vmul.f32 %v1148, %v448
  %v1181 = vmul.f32 %v1152, %v454
  %v1182 = vmul.f32 %v1156, %v460
  %v1183 = vmul.f32 %v1160, %v466
  %v1184 = vmul.f32 %v1164, %v472
  %v1185 = vmul.f32 %v1168, %v478
  %v1186 = vadd.f32 %v1090, %v1170
  %v1187 = vadd.f32 %v1091, %v1171
  %v1188 = vadd.f32 %v1092, %v1172
  %v1189 = vadd.f32 %v1093, %v1173
  %v1190 = vadd.f32 %v1094, %v1174
  %v1191 = vadd.f32 %v1095, %v1175
  %v1192 = vadd.f32 %v1096, %v1176
  %v1193 = vadd.f32 %v1097, %v1177
  %v1194 = vadd.f32 %v1098, %v1178
  %v1195 = vadd.f32 %v1099, %v1179
  %v1196 = vadd.f32 %v1100, %v1180
  %v1197 = vadd.f32 %v1101, %v1181
  %v1198 = vadd.f32 %v1102, %v1182
  %v1199 = vadd.f32 %v1103, %v1183
  %v1200 = vadd.f32 %v1104, %v1184
  %v1201 = vadd.f32 %v1105, %v1185
  %1202 = vset.pattern.permute.xlu0 4
  %1203 = vperm.xlu0 %1202, %v802
  %v1204 = vpop.permute.xlu0 %1203
  %1206 = vset.pattern.permute.xlu0 4
  %1207 = vperm.xlu0 %1206, %v803
  %v1208 = vpop.permute.xlu0 %1207
  %1210 = vset.pattern.permute.xlu0 4
  %1211 = vperm.xlu0 %1210, %v804
  %v1212 = vpop.permute.xlu0 %1211
  %1214 = vset.pattern.permute.xlu0 4
  %1215 = vperm.xlu0 %1214, %v805
  %v1216 = vpop.permute.xlu0 %1215
  %1218 = vset.pattern.permute.xlu0 4
  %1219 = vperm.xlu0 %1218, %v806
  %v1220 = vpop.permute.xlu0 %1219
  %1222 = vset.pattern.permute.xlu0 4
  %1223 = vperm.xlu0 %1222, %v807
  %v1224 = vpop.permute.xlu0 %1223
  %1226 = vset.pattern.permute.xlu0 4
  %1227 = vperm.xlu0 %1226, %v808
  %v1228 = vpop.permute.xlu0 %1227
  %1230 = vset.pattern.permute.xlu0 4
  %1231 = vperm.xlu0 %1230, %v809
  %v1232 = vpop.permute.xlu0 %1231
  %1234 = vset.pattern.permute.xlu0 4
  %1235 = vperm.xlu0 %1234, %v810
  %v1236 = vpop.permute.xlu0 %1235
  %1238 = vset.pattern.permute.xlu0 4
  %1239 = vperm.xlu0 %1238, %v811
  %v1240 = vpop.permute.xlu0 %1239
  %1242 = vset.pattern.permute.xlu0 4
  %1243 = vperm.xlu0 %1242, %v812
  %v1244 = vpop.permute.xlu0 %1243
  %1246 = vset.pattern.permute.xlu0 4
  %1247 = vperm.xlu0 %1246, %v813
  %v1248 = vpop.permute.xlu0 %1247
  %1250 = vset.pattern.permute.xlu0 4
  %1251 = vperm.xlu0 %1250, %v814
  %v1252 = vpop.permute.xlu0 %1251
  %1254 = vset.pattern.permute.xlu0 4
  %1255 = vperm.xlu0 %1254, %v815
  %v1256 = vpop.permute.xlu0 %1255
  %1258 = vset.pattern.permute.xlu0 4
  %1259 = vperm.xlu0 %1258, %v816
  %v1260 = vpop.permute.xlu0 %1259
  %1262 = vset.pattern.permute.xlu0 4
  %1263 = vperm.xlu0 %1262, %v817
  %v1264 = vpop.permute.xlu0 %1263
  %v1266 = vmul.f32 %v1204, %v547
  %v1267 = vmul.f32 %v1208, %v553
  %v1268 = vmul.f32 %v1212, %v559
  %v1269 = vmul.f32 %v1216, %v565
  %v1270 = vmul.f32 %v1220, %v571
  %v1271 = vmul.f32 %v1224, %v577
  %v1272 = vmul.f32 %v1228, %v583
  %v1273 = vmul.f32 %v1232, %v589
  %v1274 = vmul.f32 %v1236, %v595
  %v1275 = vmul.f32 %v1240, %v601
  %v1276 = vmul.f32 %v1244, %v607
  %v1277 = vmul.f32 %v1248, %v613
  %v1278 = vmul.f32 %v1252, %v619
  %v1279 = vmul.f32 %v1256, %v625
  %v1280 = vmul.f32 %v1260, %v631
  %v1281 = vmul.f32 %v1264, %v637
  %v1282 = vadd.f32 %v1186, %v1266
  %v1283 = vadd.f32 %v1187, %v1267
  %v1284 = vadd.f32 %v1188, %v1268
  %v1285 = vadd.f32 %v1189, %v1269
  %v1286 = vadd.f32 %v1190, %v1270
  %v1287 = vadd.f32 %v1191, %v1271
  %v1288 = vadd.f32 %v1192, %v1272
  %v1289 = vadd.f32 %v1193, %v1273
  %v1290 = vadd.f32 %v1194, %v1274
  %v1291 = vadd.f32 %v1195, %v1275
  %v1292 = vadd.f32 %v1196, %v1276
  %v1293 = vadd.f32 %v1197, %v1277
  %v1294 = vadd.f32 %v1198, %v1278
  %v1295 = vadd.f32 %v1199, %v1279
  %v1296 = vadd.f32 %v1200, %v1280
  %v1297 = vadd.f32 %v1201, %v1281
  %1298 = vset.pattern.permute.xlu0 5
  %1299 = vperm.xlu0 %1298, %v802
  %v1300 = vpop.permute.xlu0 %1299
  %1302 = vset.pattern.permute.xlu0 5
  %1303 = vperm.xlu0 %1302, %v803
  %v1304 = vpop.permute.xlu0 %1303
  %1306 = vset.pattern.permute.xlu0 5
  %1307 = vperm.xlu0 %1306, %v804
  %v1308 = vpop.permute.xlu0 %1307
  %1310 = vset.pattern.permute.xlu0 5
  %1311 = vperm.xlu0 %1310, %v805
  %v1312 = vpop.permute.xlu0 %1311
  %1314 = vset.pattern.permute.xlu0 5
  %1315 = vperm.xlu0 %1314, %v806
  %v1316 = vpop.permute.xlu0 %1315
  %1318 = vset.pattern.permute.xlu0 5
  %1319 = vperm.xlu0 %1318, %v807
  %v1320 = vpop.permute.xlu0 %1319
  %1322 = vset.pattern.permute.xlu0 5
  %1323 = vperm.xlu0 %1322, %v808
  %v1324 = vpop.permute.xlu0 %1323
  %1326 = vset.pattern.permute.xlu0 5
  %1327 = vperm.xlu0 %1326, %v809
  %v1328 = vpop.permute.xlu0 %1327
  %1330 = vset.pattern.permute.xlu0 5
  %1331 = vperm.xlu0 %1330, %v810
  %v1332 = vpop.permute.xlu0 %1331
  %1334 = vset.pattern.permute.xlu0 5
  %1335 = vperm.xlu0 %1334, %v811
  %v1336 = vpop.permute.xlu0 %1335
  %1338 = vset.pattern.permute.xlu0 5
  %1339 = vperm.xlu0 %1338, %v812
  %v1340 = vpop.permute.xlu0 %1339
  %1342 = vset.pattern.permute.xlu0 5
  %1343 = vperm.xlu0 %1342, %v813
  %v1344 = vpop.permute.xlu0 %1343
  %1346 = vset.pattern.permute.xlu0 5
  %1347 = vperm.xlu0 %1346, %v814
  %v1348 = vpop.permute.xlu0 %1347
  %1350 = vset.pattern.permute.xlu0 5
  %1351 = vperm.xlu0 %1350, %v815
  %v1352 = vpop.permute.xlu0 %1351
  %1354 = vset.pattern.permute.xlu0 5
  %1355 = vperm.xlu0 %1354, %v816
  %v1356 = vpop.permute.xlu0 %1355
  %1358 = vset.pattern.permute.xlu0 5
  %1359 = vperm.xlu0 %1358, %v817
  %v1360 = vpop.permute.xlu0 %1359
  %v1362 = vmul.f32 %v1300, %v549
  %v1363 = vmul.f32 %v1304, %v555
  %v1364 = vmul.f32 %v1308, %v561
  %v1365 = vmul.f32 %v1312, %v567
  %v1366 = vmul.f32 %v1316, %v573
  %v1367 = vmul.f32 %v1320, %v579
  %v1368 = vmul.f32 %v1324, %v585
  %v1369 = vmul.f32 %v1328, %v591
  %v1370 = vmul.f32 %v1332, %v597
  %v1371 = vmul.f32 %v1336, %v603
  %v1372 = vmul.f32 %v1340, %v609
  %v1373 = vmul.f32 %v1344, %v615
  %v1374 = vmul.f32 %v1348, %v621
  %v1375 = vmul.f32 %v1352, %v627
  %v1376 = vmul.f32 %v1356, %v633
  %v1377 = vmul.f32 %v1360, %v639
  %v1378 = vadd.f32 %v1282, %v1362
  %v1379 = vadd.f32 %v1283, %v1363
  %v1380 = vadd.f32 %v1284, %v1364
  %v1381 = vadd.f32 %v1285, %v1365
  %v1382 = vadd.f32 %v1286, %v1366
  %v1383 = vadd.f32 %v1287, %v1367
  %v1384 = vadd.f32 %v1288, %v1368
  %v1385 = vadd.f32 %v1289, %v1369
  %v1386 = vadd.f32 %v1290, %v1370
  %v1387 = vadd.f32 %v1291, %v1371
  %v1388 = vadd.f32 %v1292, %v1372
  %v1389 = vadd.f32 %v1293, %v1373
  %v1390 = vadd.f32 %v1294, %v1374
  %v1391 = vadd.f32 %v1295, %v1375
  %v1392 = vadd.f32 %v1296, %v1376
  %v1393 = vadd.f32 %v1297, %v1377
  %1394 = vset.pattern.permute.xlu0 6
  %1395 = vperm.xlu0 %1394, %v802
  %v1396 = vpop.permute.xlu0 %1395
  %1398 = vset.pattern.permute.xlu0 6
  %1399 = vperm.xlu0 %1398, %v803
  %v1400 = vpop.permute.xlu0 %1399
  %1402 = vset.pattern.permute.xlu0 6
  %1403 = vperm.xlu0 %1402, %v804
  %v1404 = vpop.permute.xlu0 %1403
  %1406 = vset.pattern.permute.xlu0 6
  %1407 = vperm.xlu0 %1406, %v805
  %v1408 = vpop.permute.xlu0 %1407
  %1410 = vset.pattern.permute.xlu0 6
  %1411 = vperm.xlu0 %1410, %v806
  %v1412 = vpop.permute.xlu0 %1411
  %1414 = vset.pattern.permute.xlu0 6
  %1415 = vperm.xlu0 %1414, %v807
  %v1416 = vpop.permute.xlu0 %1415
  %1418 = vset.pattern.permute.xlu0 6
  %1419 = vperm.xlu0 %1418, %v808
  %v1420 = vpop.permute.xlu0 %1419
  %1422 = vset.pattern.permute.xlu0 6
  %1423 = vperm.xlu0 %1422, %v809
  %v1424 = vpop.permute.xlu0 %1423
  %1426 = vset.pattern.permute.xlu0 6
  %1427 = vperm.xlu0 %1426, %v810
  %v1428 = vpop.permute.xlu0 %1427
  %1430 = vset.pattern.permute.xlu0 6
  %1431 = vperm.xlu0 %1430, %v811
  %v1432 = vpop.permute.xlu0 %1431
  %1434 = vset.pattern.permute.xlu0 6
  %1435 = vperm.xlu0 %1434, %v812
  %v1436 = vpop.permute.xlu0 %1435
  %1438 = vset.pattern.permute.xlu0 6
  %1439 = vperm.xlu0 %1438, %v813
  %v1440 = vpop.permute.xlu0 %1439
  %1442 = vset.pattern.permute.xlu0 6
  %1443 = vperm.xlu0 %1442, %v814
  %v1444 = vpop.permute.xlu0 %1443
  %1446 = vset.pattern.permute.xlu0 6
  %1447 = vperm.xlu0 %1446, %v815
  %v1448 = vpop.permute.xlu0 %1447
  %1450 = vset.pattern.permute.xlu0 6
  %1451 = vperm.xlu0 %1450, %v816
  %v1452 = vpop.permute.xlu0 %1451
  %1454 = vset.pattern.permute.xlu0 6
  %1455 = vperm.xlu0 %1454, %v817
  %v1456 = vpop.permute.xlu0 %1455
  %v1458 = vmul.f32 %v1396, %v708
  %v1459 = vmul.f32 %v1400, %v714
  %v1460 = vmul.f32 %v1404, %v720
  %v1461 = vmul.f32 %v1408, %v726
  %v1462 = vmul.f32 %v1412, %v732
  %v1463 = vmul.f32 %v1416, %v738
  %v1464 = vmul.f32 %v1420, %v744
  %v1465 = vmul.f32 %v1424, %v750
  %v1466 = vmul.f32 %v1428, %v756
  %v1467 = vmul.f32 %v1432, %v762
  %v1468 = vmul.f32 %v1436, %v768
  %v1469 = vmul.f32 %v1440, %v774
  %v1470 = vmul.f32 %v1444, %v780
  %v1471 = vmul.f32 %v1448, %v786
  %v1472 = vmul.f32 %v1452, %v792
  %v1473 = vmul.f32 %v1456, %v798
  %v1474 = vadd.f32 %v1378, %v1458
  %v1475 = vadd.f32 %v1379, %v1459
  %v1476 = vadd.f32 %v1380, %v1460
  %v1477 = vadd.f32 %v1381, %v1461
  %v1478 = vadd.f32 %v1382, %v1462
  %v1479 = vadd.f32 %v1383, %v1463
  %v1480 = vadd.f32 %v1384, %v1464
  %v1481 = vadd.f32 %v1385, %v1465
  %v1482 = vadd.f32 %v1386, %v1466
  %v1483 = vadd.f32 %v1387, %v1467
  %v1484 = vadd.f32 %v1388, %v1468
  %v1485 = vadd.f32 %v1389, %v1469
  %v1486 = vadd.f32 %v1390, %v1470
  %v1487 = vadd.f32 %v1391, %v1471
  %v1488 = vadd.f32 %v1392, %v1472
  %v1489 = vadd.f32 %v1393, %v1473
  %1490 = vset.pattern.permute.xlu0 7
  %1491 = vperm.xlu0 %1490, %v802
  %v1492 = vpop.permute.xlu0 %1491
  %1494 = vset.pattern.permute.xlu0 7
  %1495 = vperm.xlu0 %1494, %v803
  %v1496 = vpop.permute.xlu0 %1495
  %1498 = vset.pattern.permute.xlu0 7
  %1499 = vperm.xlu0 %1498, %v804
  %v1500 = vpop.permute.xlu0 %1499
  %1502 = vset.pattern.permute.xlu0 7
  %1503 = vperm.xlu0 %1502, %v805
  %v1504 = vpop.permute.xlu0 %1503
  %1506 = vset.pattern.permute.xlu0 7
  %1507 = vperm.xlu0 %1506, %v806
  %v1508 = vpop.permute.xlu0 %1507
  %1510 = vset.pattern.permute.xlu0 7
  %1511 = vperm.xlu0 %1510, %v807
  %v1512 = vpop.permute.xlu0 %1511
  %1514 = vset.pattern.permute.xlu0 7
  %1515 = vperm.xlu0 %1514, %v808
  %v1516 = vpop.permute.xlu0 %1515
  %1518 = vset.pattern.permute.xlu0 7
  %1519 = vperm.xlu0 %1518, %v809
  %v1520 = vpop.permute.xlu0 %1519
  %1522 = vset.pattern.permute.xlu0 7
  %1523 = vperm.xlu0 %1522, %v810
  %v1524 = vpop.permute.xlu0 %1523
  %1526 = vset.pattern.permute.xlu0 7
  %1527 = vperm.xlu0 %1526, %v811
  %v1528 = vpop.permute.xlu0 %1527
  %1530 = vset.pattern.permute.xlu0 7
  %1531 = vperm.xlu0 %1530, %v812
  %v1532 = vpop.permute.xlu0 %1531
  %1534 = vset.pattern.permute.xlu0 7
  %1535 = vperm.xlu0 %1534, %v813
  %v1536 = vpop.permute.xlu0 %1535
  %1538 = vset.pattern.permute.xlu0 7
  %1539 = vperm.xlu0 %1538, %v814
  %v1540 = vpop.permute.xlu0 %1539
  %1542 = vset.pattern.permute.xlu0 7
  %1543 = vperm.xlu0 %1542, %v815
  %v1544 = vpop.permute.xlu0 %1543
  %1546 = vset.pattern.permute.xlu0 7
  %1547 = vperm.xlu0 %1546, %v816
  %v1548 = vpop.permute.xlu0 %1547
  %1550 = vset.pattern.permute.xlu0 7
  %1551 = vperm.xlu0 %1550, %v817
  %v1552 = vpop.permute.xlu0 %1551
  %v1554 = vmul.f32 %v1492, %v710
  %v1555 = vmul.f32 %v1496, %v716
  %v1556 = vmul.f32 %v1500, %v722
  %v1557 = vmul.f32 %v1504, %v728
  %v1558 = vmul.f32 %v1508, %v734
  %v1559 = vmul.f32 %v1512, %v740
  %v1560 = vmul.f32 %v1516, %v746
  %v1561 = vmul.f32 %v1520, %v752
  %v1562 = vmul.f32 %v1524, %v758
  %v1563 = vmul.f32 %v1528, %v764
  %v1564 = vmul.f32 %v1532, %v770
  %v1565 = vmul.f32 %v1536, %v776
  %v1566 = vmul.f32 %v1540, %v782
  %v1567 = vmul.f32 %v1544, %v788
  %v1568 = vmul.f32 %v1548, %v794
  %v1569 = vmul.f32 %v1552, %v800
  %v1570 = vadd.f32 %v1474, %v1554
  %v1571 = vadd.f32 %v1475, %v1555
  %v1572 = vadd.f32 %v1476, %v1556
  %v1573 = vadd.f32 %v1477, %v1557
  %v1574 = vadd.f32 %v1478, %v1558
  %v1575 = vadd.f32 %v1479, %v1559
  %v1576 = vadd.f32 %v1480, %v1560
  %v1577 = vadd.f32 %v1481, %v1561
  %v1578 = vadd.f32 %v1482, %v1562
  %v1579 = vadd.f32 %v1483, %v1563
  %v1580 = vadd.f32 %v1484, %v1564
  %v1581 = vadd.f32 %v1485, %v1565
  %v1582 = vadd.f32 %v1486, %v1566
  %v1583 = vadd.f32 %v1487, %v1567
  %v1584 = vadd.f32 %v1488, %v1568
  %v1585 = vadd.f32 %v1489, %v1569
  %1586 = vst [vmem:[%s3] sm:$0xff] %v1570
  %1587 = vst [vmem:[%s3 + $0x8] sm:$0xff] %v1571
  %1588 = vst [vmem:[%s3 + $0x10] sm:$0xff] %v1572
  %1589 = vst [vmem:[%s3 + $0x18] sm:$0xff] %v1573
  %1590 = vst [vmem:[%s3 + $0x20] sm:$0xff] %v1574
  %1591 = vst [vmem:[%s3 + $0x28] sm:$0xff] %v1575
  %1592 = vst [vmem:[%s3 + $0x30] sm:$0xff] %v1576
  %1593 = vst [vmem:[%s3 + $0x38] sm:$0xff] %v1577
  %1594 = vst [vmem:[%s3 + $0x40] sm:$0xff] %v1578
  %1595 = vst [vmem:[%s3 + $0x48] sm:$0xff] %v1579
  %1596 = vst [vmem:[%s3 + $0x50] sm:$0xff] %v1580
  %1597 = vst [vmem:[%s3 + $0x58] sm:$0xff] %v1581
  %1598 = vst [vmem:[%s3 + $0x60] sm:$0xff] %v1582
  %1599 = vst [vmem:[%s3 + $0x68] sm:$0xff] %v1583
  %1600 = vst [vmem:[%s3 + $0x70] sm:$0xff] %v1584
  %1601 = vst [vmem:[%s3 + $0x78] sm:$0xff] %v1585
  // Predicated region
  $region14: #{rgcn_ae_forward.5} parent=0 // pred_check
    _
  $region15: #{rgcn_ae_forward.5} parent=0 // pred_check_branch
    %1603 = sbr.rel (0) target = $region17
  $region16: #{rgcn_ae_forward.5} parent=0 // pred_region
    _
  $region17: #{rgcn_ae_forward.5} parent=0 // pred_fallthru
    _
  // Predicated region
  $region18: #{rgcn_ae_forward.5} parent=0 // pred_check
    _
  $region19: #{rgcn_ae_forward.5} parent=0 // pred_check_branch
    %1605 = sbr.rel (0) target = $region21
  $region20: #{rgcn_ae_forward.5} parent=0 // pred_region
    _
  $region21: #{rgcn_ae_forward.5} parent=0 // pred_fallthru
    _

// kernel: rgcn_ae_forward.7
$region0: #{rgcn_ae_forward.7}
  #allocation0 [shape = 'u32[]', space=smem, size = 0x4, offset = 0x4, fixed_abs, tag = 'smem constant byte address 0x4 - core index']
  #allocation1 [shape = 'u32[144,128]{1,0:T(1,128)}', space=vmem, size = 0x12000, scoped, tag = 'internal scratch']
  #allocation2 [shape = 'f32[1,1]{1,0:T(1,128)S(6)}', space=smem, size = 0x200, scoped, tag = 'scoped memory for rgcn_ae_forward.7']
  %s0 = inlined_call_operand.vmem [shape: bf16[128,128], index: 0, kind: input, shape index: {}]
  %s1 = inlined_call_operand.vmem [shape: bf16[128,128], index: 1, kind: input, shape index: {}]
  %s2 = inlined_call_operand.vmem [shape: bf16[128,128], index: 2, kind: input, shape index: {}]
  %s3 = inlined_call_operand.vmem [shape: f32[128,128], index: 3, kind: input, shape index: {}]
  %s4 = inlined_call_operand.vmem [shape: f32[128,128], index: 4, kind: input, shape index: {}]
  %s5 = inlined_call_operand.vmem [shape: f32[128,128], index: 5, kind: input, shape index: {}]
  %s6 = inlined_call_operand.vmem [shape: f32[1,128], index: 6, kind: input, shape index: {}]
  %s7 = inlined_call_operand.vmem [shape: f32[1,128], index: 7, kind: input, shape index: {}]
  %s8 = inlined_call_operand.<no memory space> [shape: f32[1,1], index: 8, kind: input, shape index: {}]
  %s9 = inlined_call_operand.vmem [shape: f32[1,128], index: 9, kind: output, shape index: {}]
  %s10 = sld [smem:[#allocation0]]
  $region46: #{rgcn_ae_forward.7} parent=0
    _
  %s12 = ssub.s32 1, %s10
  %s13 = scalar_select 0, %s12, %s10
  %14 = sst [smem:[#allocation2]] %s8
  // Predicated region
  $region2: #{rgcn_ae_forward.7} parent=0 // pred_check
    _
  $region3: #{rgcn_ae_forward.7} parent=0 // pred_check_branch
    %16 = sbr.rel (0) target = $region5
  $region4: #{rgcn_ae_forward.7} parent=0 // pred_region
    _
  $region5: #{rgcn_ae_forward.7} parent=0 // pred_fallthru
    _
  // Predicated region
  $region6: #{rgcn_ae_forward.7} parent=0 // pred_check
    _
  $region7: #{rgcn_ae_forward.7} parent=0 // pred_check_branch
    %18 = sbr.rel (0) target = $region9
  $region8: #{rgcn_ae_forward.7} parent=0 // pred_region
    _
  $region9: #{rgcn_ae_forward.7} parent=0 // pred_fallthru
    _
  // Predicated region
  $region10: #{rgcn_ae_forward.7} parent=0 // pred_check
    _
  $region11: #{rgcn_ae_forward.7} parent=0 // pred_check_branch
    %20 = sbr.rel (0) target = $region13
  $region12: #{rgcn_ae_forward.7} parent=0 // pred_region
    _
  $region13: #{rgcn_ae_forward.7} parent=0 // pred_fallthru
    _
  // Predicated region
  $region14: #{rgcn_ae_forward.7} parent=0 // pred_check
    _
  $region15: #{rgcn_ae_forward.7} parent=0 // pred_check_branch
    %22 = sbr.rel (0) target = $region17
  $region16: #{rgcn_ae_forward.7} parent=0 // pred_region
    _
  $region17: #{rgcn_ae_forward.7} parent=0 // pred_fallthru
    _
  // Predicated region
  $region18: #{rgcn_ae_forward.7} parent=0 // pred_check
    _
  $region19: #{rgcn_ae_forward.7} parent=0 // pred_check_branch
    %24 = sbr.rel (0) target = $region21
  $region20: #{rgcn_ae_forward.7} parent=0 // pred_region
    _
  $region21: #{rgcn_ae_forward.7} parent=0 // pred_fallthru
    _
  // Predicated region
  $region22: #{rgcn_ae_forward.7} parent=0 // pred_check
    _
  $region23: #{rgcn_ae_forward.7} parent=0 // pred_check_branch
    %26 = sbr.rel (0) target = $region25
  $region24: #{rgcn_ae_forward.7} parent=0 // pred_region
    _
  $region25: #{rgcn_ae_forward.7} parent=0 // pred_fallthru
    _
  // Predicated region
  $region26: #{rgcn_ae_forward.7} parent=0 // pred_check
    _
  $region27: #{rgcn_ae_forward.7} parent=0 // pred_check_branch
    %28 = sbr.rel (0) target = $region29
  $region28: #{rgcn_ae_forward.7} parent=0 // pred_region
    _
  $region29: #{rgcn_ae_forward.7} parent=0 // pred_fallthru
    _
  // Predicated region
  $region30: #{rgcn_ae_forward.7} parent=0 // pred_check
    _
  $region31: #{rgcn_ae_forward.7} parent=0 // pred_check_branch
    %30 = sbr.rel (0) target = $region33
  $region32: #{rgcn_ae_forward.7} parent=0 // pred_region
    _
  $region33: #{rgcn_ae_forward.7} parent=0 // pred_fallthru
    _
  // Predicated region
  $region34: #{rgcn_ae_forward.7} parent=0 // pred_check
    _
  $region35: #{rgcn_ae_forward.7} parent=0 // pred_check_branch
    %32 = sbr.rel (0) target = $region37
  $region36: #{rgcn_ae_forward.7} parent=0 // pred_region
    _
  $region37: #{rgcn_ae_forward.7} parent=0 // pred_fallthru
    _
  %v33 = vld [vmem:[%s0] sm:$0xf]
  %v34 = vld [vmem:[%s0 + $0x4] sm:$0xf]
  %v35 = vld [vmem:[%s0 + $0x8] sm:$0xf]
  %v36 = vld [vmem:[%s0 + $0xc] sm:$0xf]
  %v37 = vld [vmem:[%s0 + $0x10] sm:$0xf]
  %v38 = vld [vmem:[%s0 + $0x14] sm:$0xf]
  %v39 = vld [vmem:[%s0 + $0x18] sm:$0xf]
  %v40 = vld [vmem:[%s0 + $0x1c] sm:$0xf]
  %v41 = vld [vmem:[%s0 + $0x20] sm:$0xf]
  %v42 = vld [vmem:[%s0 + $0x24] sm:$0xf]
  %v43 = vld [vmem:[%s0 + $0x28] sm:$0xf]
  %v44 = vld [vmem:[%s0 + $0x2c] sm:$0xf]
  %v45 = vld [vmem:[%s0 + $0x30] sm:$0xf]
  %v46 = vld [vmem:[%s0 + $0x34] sm:$0xf]
  %v47 = vld [vmem:[%s0 + $0x38] sm:$0xf]
  %v48 = vld [vmem:[%s0 + $0x3c] sm:$0xf]
  %v49 = vunpack.c.l.bf16 %v33
  %v50 = vunpack.c.l.bf16 %v34
  %v51 = vunpack.c.l.bf16 %v35
  %v52 = vunpack.c.l.bf16 %v36
  %v53 = vunpack.c.l.bf16 %v37
  %v54 = vunpack.c.l.bf16 %v38
  %v55 = vunpack.c.l.bf16 %v39
  %v56 = vunpack.c.l.bf16 %v40
  %v57 = vunpack.c.l.bf16 %v41
  %v58 = vunpack.c.l.bf16 %v42
  %v59 = vunpack.c.l.bf16 %v43
  %v60 = vunpack.c.l.bf16 %v44
  %v61 = vunpack.c.l.bf16 %v45
  %v62 = vunpack.c.l.bf16 %v46
  %v63 = vunpack.c.l.bf16 %v47
  %v64 = vunpack.c.l.bf16 %v48
  %v65 = vld [vmem:[%s1] sm:$0xf]
  %v66 = vld [vmem:[%s1 + $0x4] sm:$0xf]
  %v67 = vld [vmem:[%s1 + $0x8] sm:$0xf]
  %v68 = vld [vmem:[%s1 + $0xc] sm:$0xf]
  %v69 = vld [vmem:[%s1 + $0x10] sm:$0xf]
  %v70 = vld [vmem:[%s1 + $0x14] sm:$0xf]
  %v71 = vld [vmem:[%s1 + $0x18] sm:$0xf]
  %v72 = vld [vmem:[%s1 + $0x1c] sm:$0xf]
  %v73 = vld [vmem:[%s1 + $0x20] sm:$0xf]
  %v74 = vld [vmem:[%s1 + $0x24] sm:$0xf]
  %v75 = vld [vmem:[%s1 + $0x28] sm:$0xf]
  %v76 = vld [vmem:[%s1 + $0x2c] sm:$0xf]
  %v77 = vld [vmem:[%s1 + $0x30] sm:$0xf]
  %v78 = vld [vmem:[%s1 + $0x34] sm:$0xf]
  %v79 = vld [vmem:[%s1 + $0x38] sm:$0xf]
  %v80 = vld [vmem:[%s1 + $0x3c] sm:$0xf]
  %v81 = vunpack.c.l.bf16 %v65
  %v82 = vunpack.c.l.bf16 %v66
  %v83 = vunpack.c.l.bf16 %v67
  %v84 = vunpack.c.l.bf16 %v68
  %v85 = vunpack.c.l.bf16 %v69
  %v86 = vunpack.c.l.bf16 %v70
  %v87 = vunpack.c.l.bf16 %v71
  %v88 = vunpack.c.l.bf16 %v72
  %v89 = vunpack.c.l.bf16 %v73
  %v90 = vunpack.c.l.bf16 %v74
  %v91 = vunpack.c.l.bf16 %v75
  %v92 = vunpack.c.l.bf16 %v76
  %v93 = vunpack.c.l.bf16 %v77
  %v94 = vunpack.c.l.bf16 %v78
  %v95 = vunpack.c.l.bf16 %v79
  %v96 = vunpack.c.l.bf16 %v80
  %v97 = vld [vmem:[%s2] sm:$0xf]
  %v98 = vld [vmem:[%s2 + $0x4] sm:$0xf]
  %v99 = vld [vmem:[%s2 + $0x8] sm:$0xf]
  %v100 = vld [vmem:[%s2 + $0xc] sm:$0xf]
  %v101 = vld [vmem:[%s2 + $0x10] sm:$0xf]
  %v102 = vld [vmem:[%s2 + $0x14] sm:$0xf]
  %v103 = vld [vmem:[%s2 + $0x18] sm:$0xf]
  %v104 = vld [vmem:[%s2 + $0x1c] sm:$0xf]
  %v105 = vld [vmem:[%s2 + $0x20] sm:$0xf]
  %v106 = vld [vmem:[%s2 + $0x24] sm:$0xf]
  %v107 = vld [vmem:[%s2 + $0x28] sm:$0xf]
  %v108 = vld [vmem:[%s2 + $0x2c] sm:$0xf]
  %v109 = vld [vmem:[%s2 + $0x30] sm:$0xf]
  %v110 = vld [vmem:[%s2 + $0x34] sm:$0xf]
  %v111 = vld [vmem:[%s2 + $0x38] sm:$0xf]
  %v112 = vld [vmem:[%s2 + $0x3c] sm:$0xf]
  %v113 = vunpack.c.l.bf16 %v97
  %v114 = vunpack.c.l.bf16 %v98
  %v115 = vunpack.c.l.bf16 %v99
  %v116 = vunpack.c.l.bf16 %v100
  %v117 = vunpack.c.l.bf16 %v101
  %v118 = vunpack.c.l.bf16 %v102
  %v119 = vunpack.c.l.bf16 %v103
  %v120 = vunpack.c.l.bf16 %v104
  %v121 = vunpack.c.l.bf16 %v105
  %v122 = vunpack.c.l.bf16 %v106
  %v123 = vunpack.c.l.bf16 %v107
  %v124 = vunpack.c.l.bf16 %v108
  %v125 = vunpack.c.l.bf16 %v109
  %v126 = vunpack.c.l.bf16 %v110
  %v127 = vunpack.c.l.bf16 %v111
  %v128 = vunpack.c.l.bf16 %v112
  %v129 = vmul.f32 %v49, %v49
  %v130 = vmul.f32 %v50, %v50
  %v131 = vmul.f32 %v51, %v51
  %v132 = vmul.f32 %v52, %v52
  %v133 = vmul.f32 %v53, %v53
  %v134 = vmul.f32 %v54, %v54
  %v135 = vmul.f32 %v55, %v55
  %v136 = vmul.f32 %v56, %v56
  %v137 = vmul.f32 %v57, %v57
  %v138 = vmul.f32 %v58, %v58
  %v139 = vmul.f32 %v59, %v59
  %v140 = vmul.f32 %v60, %v60
  %v141 = vmul.f32 %v61, %v61
  %v142 = vmul.f32 %v62, %v62
  %v143 = vmul.f32 %v63, %v63
  %v144 = vmul.f32 %v64, %v64
  %145 = vadd.xlane.f32.xlu0 %v129
  %v146 = vpop.xlane.xlu0 %145
  %147 = vadd.xlane.f32.xlu0 %v130
  %v148 = vpop.xlane.xlu0 %147
  %149 = vadd.xlane.f32.xlu0 %v131
  %v150 = vpop.xlane.xlu0 %149
  %151 = vadd.xlane.f32.xlu0 %v132
  %v152 = vpop.xlane.xlu0 %151
  %153 = vadd.xlane.f32.xlu0 %v133
  %v154 = vpop.xlane.xlu0 %153
  %155 = vadd.xlane.f32.xlu0 %v134
  %v156 = vpop.xlane.xlu0 %155
  %157 = vadd.xlane.f32.xlu0 %v135
  %v158 = vpop.xlane.xlu0 %157
  %159 = vadd.xlane.f32.xlu0 %v136
  %v160 = vpop.xlane.xlu0 %159
  %161 = vadd.xlane.f32.xlu0 %v137
  %v162 = vpop.xlane.xlu0 %161
  %163 = vadd.xlane.f32.xlu0 %v138
  %v164 = vpop.xlane.xlu0 %163
  %165 = vadd.xlane.f32.xlu0 %v139
  %v166 = vpop.xlane.xlu0 %165
  %167 = vadd.xlane.f32.xlu0 %v140
  %v168 = vpop.xlane.xlu0 %167
  %169 = vadd.xlane.f32.xlu0 %v141
  %v170 = vpop.xlane.xlu0 %169
  %171 = vadd.xlane.f32.xlu0 %v142
  %v172 = vpop.xlane.xlu0 %171
  %173 = vadd.xlane.f32.xlu0 %v143
  %v174 = vpop.xlane.xlu0 %173
  %175 = vadd.xlane.f32.xlu0 %v144
  %v176 = vpop.xlane.xlu0 %175
  %v177 = vmul.f32 %v81, %v81
  %v178 = vmul.f32 %v82, %v82
  %v179 = vmul.f32 %v83, %v83
  %v180 = vmul.f32 %v84, %v84
  %v181 = vmul.f32 %v85, %v85
  %v182 = vmul.f32 %v86, %v86
  %v183 = vmul.f32 %v87, %v87
  %v184 = vmul.f32 %v88, %v88
  %v185 = vmul.f32 %v89, %v89
  %v186 = vmul.f32 %v90, %v90
  %v187 = vmul.f32 %v91, %v91
  %v188 = vmul.f32 %v92, %v92
  %v189 = vmul.f32 %v93, %v93
  %v190 = vmul.f32 %v94, %v94
  %v191 = vmul.f32 %v95, %v95
  %v192 = vmul.f32 %v96, %v96
  %193 = vadd.xlane.f32.xlu0 %v177
  %v194 = vpop.xlane.xlu0 %193
  %195 = vadd.xlane.f32.xlu0 %v178
  %v196 = vpop.xlane.xlu0 %195
  %197 = vadd.xlane.f32.xlu0 %v179
  %v198 = vpop.xlane.xlu0 %197
  %199 = vadd.xlane.f32.xlu0 %v180
  %v200 = vpop.xlane.xlu0 %199
  %201 = vadd.xlane.f32.xlu0 %v181
  %v202 = vpop.xlane.xlu0 %201
  %203 = vadd.xlane.f32.xlu0 %v182
  %v204 = vpop.xlane.xlu0 %203
  %205 = vadd.xlane.f32.xlu0 %v183
  %v206 = vpop.xlane.xlu0 %205
  %207 = vadd.xlane.f32.xlu0 %v184
  %v208 = vpop.xlane.xlu0 %207
  %209 = vadd.xlane.f32.xlu0 %v185
  %v210 = vpop.xlane.xlu0 %209
  %211 = vadd.xlane.f32.xlu0 %v186
  %v212 = vpop.xlane.xlu0 %211
  %213 = vadd.xlane.f32.xlu0 %v187
  %v214 = vpop.xlane.xlu0 %213
  %215 = vadd.xlane.f32.xlu0 %v188
  %v216 = vpop.xlane.xlu0 %215
  %217 = vadd.xlane.f32.xlu0 %v189
  %v218 = vpop.xlane.xlu0 %217
  %219 = vadd.xlane.f32.xlu0 %v190
  %v220 = vpop.xlane.xlu0 %219
  %221 = vadd.xlane.f32.xlu0 %v191
  %v222 = vpop.xlane.xlu0 %221
  %223 = vadd.xlane.f32.xlu0 %v192
  %v224 = vpop.xlane.xlu0 %223
  %v225 = vadd.f32 %v146, %v194
  %v226 = vadd.f32 %v148, %v196
  %v227 = vadd.f32 %v150, %v198
  %v228 = vadd.f32 %v152, %v200
  %v229 = vadd.f32 %v154, %v202
  %v230 = vadd.f32 %v156, %v204
  %v231 = vadd.f32 %v158, %v206
  %v232 = vadd.f32 %v160, %v208
  %v233 = vadd.f32 %v162, %v210
  %v234 = vadd.f32 %v164, %v212
  %v235 = vadd.f32 %v166, %v214
  %v236 = vadd.f32 %v168, %v216
  %v237 = vadd.f32 %v170, %v218
  %v238 = vadd.f32 %v172, %v220
  %v239 = vadd.f32 %v174, %v222
  %v240 = vadd.f32 %v176, %v224
  %v241 = vmul.f32 %v113, %v113
  %v242 = vmul.f32 %v114, %v114
  %v243 = vmul.f32 %v115, %v115
  %v244 = vmul.f32 %v116, %v116
  %v245 = vmul.f32 %v117, %v117
  %v246 = vmul.f32 %v118, %v118
  %v247 = vmul.f32 %v119, %v119
  %v248 = vmul.f32 %v120, %v120
  %v249 = vmul.f32 %v121, %v121
  %v250 = vmul.f32 %v122, %v122
  %v251 = vmul.f32 %v123, %v123
  %v252 = vmul.f32 %v124, %v124
  %v253 = vmul.f32 %v125, %v125
  %v254 = vmul.f32 %v126, %v126
  %v255 = vmul.f32 %v127, %v127
  %v256 = vmul.f32 %v128, %v128
  %257 = vadd.xlane.f32.xlu0 %v241
  %v258 = vpop.xlane.xlu0 %257
  %259 = vadd.xlane.f32.xlu0 %v242
  %v260 = vpop.xlane.xlu0 %259
  %261 = vadd.xlane.f32.xlu0 %v243
  %v262 = vpop.xlane.xlu0 %261
  %263 = vadd.xlane.f32.xlu0 %v244
  %v264 = vpop.xlane.xlu0 %263
  %265 = vadd.xlane.f32.xlu0 %v245
  %v266 = vpop.xlane.xlu0 %265
  %267 = vadd.xlane.f32.xlu0 %v246
  %v268 = vpop.xlane.xlu0 %267
  %269 = vadd.xlane.f32.xlu0 %v247
  %v270 = vpop.xlane.xlu0 %269
  %271 = vadd.xlane.f32.xlu0 %v248
  %v272 = vpop.xlane.xlu0 %271
  %273 = vadd.xlane.f32.xlu0 %v249
  %v274 = vpop.xlane.xlu0 %273
  %275 = vadd.xlane.f32.xlu0 %v250
  %v276 = vpop.xlane.xlu0 %275
  %277 = vadd.xlane.f32.xlu0 %v251
  %v278 = vpop.xlane.xlu0 %277
  %279 = vadd.xlane.f32.xlu0 %v252
  %v280 = vpop.xlane.xlu0 %279
  %281 = vadd.xlane.f32.xlu0 %v253
  %v282 = vpop.xlane.xlu0 %281
  %283 = vadd.xlane.f32.xlu0 %v254
  %v284 = vpop.xlane.xlu0 %283
  %285 = vadd.xlane.f32.xlu0 %v255
  %v286 = vpop.xlane.xlu0 %285
  %287 = vadd.xlane.f32.xlu0 %v256
  %v288 = vpop.xlane.xlu0 %287
  %v289 = vadd.f32 %v225, %v258
  %v290 = vadd.f32 %v226, %v260
  %v291 = vadd.f32 %v227, %v262
  %v292 = vadd.f32 %v228, %v264
  %v293 = vadd.f32 %v229, %v266
  %v294 = vadd.f32 %v230, %v268
  %v295 = vadd.f32 %v231, %v270
  %v296 = vadd.f32 %v232, %v272
  %v297 = vadd.f32 %v233, %v274
  %v298 = vadd.f32 %v234, %v276
  %v299 = vadd.f32 %v235, %v278
  %v300 = vadd.f32 %v236, %v280
  %v301 = vadd.f32 %v237, %v282
  %v302 = vadd.f32 %v238, %v284
  %v303 = vadd.f32 %v239, %v286
  %v304 = vadd.f32 %v240, %v288
  %v305 = vmax.f32 %v289, 1e-24
  %v306 = vmax.f32 %v290, 1e-24
  %v307 = vmax.f32 %v291, 1e-24
  %v308 = vmax.f32 %v292, 1e-24
  %v309 = vmax.f32 %v293, 1e-24
  %v310 = vmax.f32 %v294, 1e-24
  %v311 = vmax.f32 %v295, 1e-24
  %v312 = vmax.f32 %v296, 1e-24
  %v313 = vmax.f32 %v297, 1e-24
  %v314 = vmax.f32 %v298, 1e-24
  %v315 = vmax.f32 %v299, 1e-24
  %v316 = vmax.f32 %v300, 1e-24
  %v317 = vmax.f32 %v301, 1e-24
  %v318 = vmax.f32 %v302, 1e-24
  %v319 = vmax.f32 %v303, 1e-24
  %v320 = vmax.f32 %v304, 1e-24
  %v321 = vrsqrt.pop %v305
  %v322 = vrsqrt.pop %v306
  %v323 = vrsqrt.pop %v307
  %v324 = vrsqrt.pop %v308
  %v325 = vrsqrt.pop %v309
  %v326 = vrsqrt.pop %v310
  %v327 = vrsqrt.pop %v311
  %v328 = vrsqrt.pop %v312
  %v329 = vrsqrt.pop %v313
  %v330 = vrsqrt.pop %v314
  %v331 = vrsqrt.pop %v315
  %v332 = vrsqrt.pop %v316
  %v333 = vrsqrt.pop %v317
  %v334 = vrsqrt.pop %v318
  %v335 = vrsqrt.pop %v319
  %v336 = vrsqrt.pop %v320
  %v337 = vld [vmem:[%s3] sm:$0xff]
  %v338 = vld [vmem:[%s3 + $0x8] sm:$0xff]
  %v339 = vld [vmem:[%s3 + $0x10] sm:$0xff]
  %v340 = vld [vmem:[%s3 + $0x18] sm:$0xff]
  %v341 = vld [vmem:[%s3 + $0x20] sm:$0xff]
  %v342 = vld [vmem:[%s3 + $0x28] sm:$0xff]
  %v343 = vld [vmem:[%s3 + $0x30] sm:$0xff]
  %v344 = vld [vmem:[%s3 + $0x38] sm:$0xff]
  %v345 = vld [vmem:[%s3 + $0x40] sm:$0xff]
  %v346 = vld [vmem:[%s3 + $0x48] sm:$0xff]
  %v347 = vld [vmem:[%s3 + $0x50] sm:$0xff]
  %v348 = vld [vmem:[%s3 + $0x58] sm:$0xff]
  %v349 = vld [vmem:[%s3 + $0x60] sm:$0xff]
  %v350 = vld [vmem:[%s3 + $0x68] sm:$0xff]
  %v351 = vld [vmem:[%s3 + $0x70] sm:$0xff]
  %v352 = vld [vmem:[%s3 + $0x78] sm:$0xff]
  %v353 = vld [vmem:[%s4] sm:$0xff]
  %v354 = vld [vmem:[%s4 + $0x8] sm:$0xff]
  %v355 = vld [vmem:[%s4 + $0x10] sm:$0xff]
  %v356 = vld [vmem:[%s4 + $0x18] sm:$0xff]
  %v357 = vld [vmem:[%s4 + $0x20] sm:$0xff]
  %v358 = vld [vmem:[%s4 + $0x28] sm:$0xff]
  %v359 = vld [vmem:[%s4 + $0x30] sm:$0xff]
  %v360 = vld [vmem:[%s4 + $0x38] sm:$0xff]
  %v361 = vld [vmem:[%s4 + $0x40] sm:$0xff]
  %v362 = vld [vmem:[%s4 + $0x48] sm:$0xff]
  %v363 = vld [vmem:[%s4 + $0x50] sm:$0xff]
  %v364 = vld [vmem:[%s4 + $0x58] sm:$0xff]
  %v365 = vld [vmem:[%s4 + $0x60] sm:$0xff]
  %v366 = vld [vmem:[%s4 + $0x68] sm:$0xff]
  %v367 = vld [vmem:[%s4 + $0x70] sm:$0xff]
  %v368 = vld [vmem:[%s4 + $0x78] sm:$0xff]
  %369 = vmatprep.subr.mxu0 0.0
  %370 = vmatpush1.msra.mxu0 %v353
  %371 = vmatprep.subr.mxu0 0.0
  %372 = vmatpush1.msra.mxu0 %v354
  %373 = vmatprep.subr.mxu0 0.0
  %374 = vmatpush1.msra.mxu0 %v355
  %375 = vmatprep.subr.mxu0 0.0
  %376 = vmatpush1.msra.mxu0 %v356
  %377 = vmatprep.subr.mxu0 0.0
  %378 = vmatpush1.msra.mxu0 %v357
  %379 = vmatprep.subr.mxu0 0.0
  %380 = vmatpush1.msra.mxu0 %v358
  %381 = vmatprep.subr.mxu0 0.0
  %382 = vmatpush1.msra.mxu0 %v359
  %383 = vmatprep.subr.mxu0 0.0
  %384 = vmatpush1.msra.mxu0 %v360
  %385 = vmatprep.subr.mxu0 0.0
  %386 = vmatpush1.msra.mxu0 %v361
  %387 = vmatprep.subr.mxu0 0.0
  %388 = vmatpush1.msra.mxu0 %v362
  %389 = vmatprep.subr.mxu0 0.0
  %390 = vmatpush1.msra.mxu0 %v363
  %391 = vmatprep.subr.mxu0 0.0
  %392 = vmatpush1.msra.mxu0 %v364
  %393 = vmatprep.subr.mxu0 0.0
  %394 = vmatpush1.msra.mxu0 %v365
  %395 = vmatprep.subr.mxu0 0.0
  %396 = vmatpush1.msra.mxu0 %v366
  %397 = vmatprep.subr.mxu0 0.0
  %398 = vmatpush1.msra.mxu0 %v367
  %399 = vmatprep.subr.mxu0 0.0
  %400 = vmatpush1.msra.mxu0 %v368
  %401 = vmatprep.subr.mxu0 0.0
  %402 = vmatpush1.msra.mxu0 0.0
  %403 = vmatprep.subr.mxu0 0.0
  %404 = vmatpush1.msra.mxu0 0.0
  %405 = vmatprep.subr.mxu0 0.0
  %406 = vmatpush1.msra.mxu0 0.0
  %407 = vmatprep.subr.mxu0 0.0
  %408 = vmatpush1.msra.mxu0 0.0
  %409 = vmatprep.subr.mxu0 0.0
  %410 = vmatpush1.msra.mxu0 0.0
  %411 = vmatprep.subr.mxu0 0.0
  %412 = vmatpush1.msra.mxu0 0.0
  %413 = vmatprep.subr.mxu0 0.0
  %414 = vmatpush1.msra.mxu0 0.0
  %415 = vmatprep.subr.mxu0 0.0
  %416 = vmatpush1.msra.mxu0 0.0
  %417 = vmatprep.subr.mxu0 0.0
  %418 = vmatpush1.msra.mxu0 0.0
  %419 = vmatprep.subr.mxu0 0.0
  %420 = vmatpush1.msra.mxu0 0.0
  %421 = vmatprep.subr.mxu0 0.0
  %422 = vmatpush1.msra.mxu0 0.0
  %423 = vmatprep.subr.mxu0 0.0
  %424 = vmatpush1.msra.mxu0 0.0
  %425 = vmatprep.subr.mxu0 0.0
  %426 = vmatpush1.msra.mxu0 0.0
  %427 = vmatprep.subr.mxu0 0.0
  %428 = vmatpush1.msra.mxu0 0.0
  %429 = vmatprep.subr.mxu0 0.0
  %430 = vmatpush1.msra.mxu0 0.0
  %431 = vmatprep.subr.mxu0 0.0
  %432 = vmatpush1.msra.mxu0 0.0
  %433 = vmatprep.mubr.f32.mxu0 0.0
  %434 = vmatmul.mubr.f32.gmra.mrb[0].mxu0 %v81
  %v435 = vpop.f32.mrb[0].mxu0
  %v436 = vadd.f32 0.0, %v435
  %v437 = vpop.f32.mrb[0].mxu0
  %438 = vmatprep.mubr.f32.mxu0 0.0
  %439 = vmatmul.mubr.f32.gmra.mrb[0].mxu0 %v82
  %v440 = vpop.f32.mrb[0].mxu0
  %v441 = vadd.f32 0.0, %v440
  %v442 = vpop.f32.mrb[0].mxu0
  %443 = vmatprep.mubr.f32.mxu0 0.0
  %444 = vmatmul.mubr.f32.gmra.mrb[0].mxu0 %v83
  %v445 = vpop.f32.mrb[0].mxu0
  %v446 = vadd.f32 0.0, %v445
  %v447 = vpop.f32.mrb[0].mxu0
  %448 = vmatprep.mubr.f32.mxu0 0.0
  %449 = vmatmul.mubr.f32.gmra.mrb[0].mxu0 %v84
  %v450 = vpop.f32.mrb[0].mxu0
  %v451 = vadd.f32 0.0, %v450
  %v452 = vpop.f32.mrb[0].mxu0
  %453 = vmatprep.mubr.f32.mxu0 0.0
  %454 = vmatmul.mubr.f32.gmra.mrb[0].mxu0 %v85
  %v455 = vpop.f32.mrb[0].mxu0
  %v456 = vadd.f32 0.0, %v455
  %v457 = vpop.f32.mrb[0].mxu0
  %458 = vmatprep.mubr.f32.mxu0 0.0
  %459 = vmatmul.mubr.f32.gmra.mrb[0].mxu0 %v86
  %v460 = vpop.f32.mrb[0].mxu0
  %v461 = vadd.f32 0.0, %v460
  %v462 = vpop.f32.mrb[0].mxu0
  %463 = vmatprep.mubr.f32.mxu0 0.0
  %464 = vmatmul.mubr.f32.gmra.mrb[0].mxu0 %v87
  %v465 = vpop.f32.mrb[0].mxu0
  %v466 = vadd.f32 0.0, %v465
  %v467 = vpop.f32.mrb[0].mxu0
  %468 = vmatprep.mubr.f32.mxu0 0.0
  %469 = vmatmul.mubr.f32.gmra.mrb[0].mxu0 %v88
  %v470 = vpop.f32.mrb[0].mxu0
  %v471 = vadd.f32 0.0, %v470
  %v472 = vpop.f32.mrb[0].mxu0
  %473 = vmatprep.mubr.f32.mxu0 0.0
  %474 = vmatmul.mubr.f32.gmra.mrb[0].mxu0 %v89
  %v475 = vpop.f32.mrb[0].mxu0
  %v476 = vadd.f32 0.0, %v475
  %v477 = vpop.f32.mrb[0].mxu0
  %478 = vmatprep.mubr.f32.mxu0 0.0
  %479 = vmatmul.mubr.f32.gmra.mrb[0].mxu0 %v90
  %v480 = vpop.f32.mrb[0].mxu0
  %v481 = vadd.f32 0.0, %v480
  %v482 = vpop.f32.mrb[0].mxu0
  %483 = vmatprep.mubr.f32.mxu0 0.0
  %484 = vmatmul.mubr.f32.gmra.mrb[0].mxu0 %v91
  %v485 = vpop.f32.mrb[0].mxu0
  %v486 = vadd.f32 0.0, %v485
  %v487 = vpop.f32.mrb[0].mxu0
  %488 = vmatprep.mubr.f32.mxu0 0.0
  %489 = vmatmul.mubr.f32.gmra.mrb[0].mxu0 %v92
  %v490 = vpop.f32.mrb[0].mxu0
  %v491 = vadd.f32 0.0, %v490
  %v492 = vpop.f32.mrb[0].mxu0
  %493 = vmatprep.mubr.f32.mxu0 0.0
  %494 = vmatmul.mubr.f32.gmra.mrb[0].mxu0 %v93
  %v495 = vpop.f32.mrb[0].mxu0
  %v496 = vadd.f32 0.0, %v495
  %v497 = vpop.f32.mrb[0].mxu0
  %498 = vmatprep.mubr.f32.mxu0 0.0
  %499 = vmatmul.mubr.f32.gmra.mrb[0].mxu0 %v94
  %v500 = vpop.f32.mrb[0].mxu0
  %v501 = vadd.f32 0.0, %v500
  %v502 = vpop.f32.mrb[0].mxu0
  %503 = vmatprep.mubr.f32.mxu0 0.0
  %504 = vmatmul.mubr.f32.gmra.mrb[0].mxu0 %v95
  %v505 = vpop.f32.mrb[0].mxu0
  %v506 = vadd.f32 0.0, %v505
  %v507 = vpop.f32.mrb[0].mxu0
  %508 = vmatprep.mubr.f32.mxu0 0.0
  %509 = vmatmul.mubr.f32.gmra.mrb[0].mxu0 %v96
  %v510 = vpop.f32.mrb[0].mxu0
  %v511 = vadd.f32 0.0, %v510
  %v512 = vpop.f32.mrb[0].mxu0
  %513 = vdwg.mxu0
  %514 = vmatprep.subr.mxu0 0.0
  %515 = vmatpush1.msra.mxu0 %v337
  %516 = vmatprep.subr.mxu0 0.0
  %517 = vmatpush1.msra.mxu0 %v338
  %518 = vmatprep.subr.mxu0 0.0
  %519 = vmatpush1.msra.mxu0 %v339
  %520 = vmatprep.subr.mxu0 0.0
  %521 = vmatpush1.msra.mxu0 %v340
  %522 = vmatprep.subr.mxu0 0.0
  %523 = vmatpush1.msra.mxu0 %v341
  %524 = vmatprep.subr.mxu0 0.0
  %525 = vmatpush1.msra.mxu0 %v342
  %526 = vmatprep.subr.mxu0 0.0
  %527 = vmatpush1.msra.mxu0 %v343
  %528 = vmatprep.subr.mxu0 0.0
  %529 = vmatpush1.msra.mxu0 %v344
  %530 = vmatprep.subr.mxu0 0.0
  %531 = vmatpush1.msra.mxu0 %v345
  %532 = vmatprep.subr.mxu0 0.0
  %533 = vmatpush1.msra.mxu0 %v346
  %534 = vmatprep.subr.mxu0 0.0
  %535 = vmatpush1.msra.mxu0 %v347
  %536 = vmatprep.subr.mxu0 0.0
  %537 = vmatpush1.msra.mxu0 %v348
  %538 = vmatprep.subr.mxu0 0.0
  %539 = vmatpush1.msra.mxu0 %v349
  %540 = vmatprep.subr.mxu0 0.0
  %541 = vmatpush1.msra.mxu0 %v350
  %542 = vmatprep.subr.mxu0 0.0
  %543 = vmatpush1.msra.mxu0 %v351
  %544 = vmatprep.subr.mxu0 0.0
  %545 = vmatpush1.msra.mxu0 %v352
  %546 = vmatprep.subr.mxu0 0.0
  %547 = vmatpush1.msra.mxu0 0.0
  %548 = vmatprep.subr.mxu0 0.0
  %549 = vmatpush1.msra.mxu0 0.0
  %550 = vmatprep.subr.mxu0 0.0
  %551 = vmatpush1.msra.mxu0 0.0
  %552 = vmatprep.subr.mxu0 0.0
  %553 = vmatpush1.msra.mxu0 0.0
  %554 = vmatprep.subr.mxu0 0.0
  %555 = vmatpush1.msra.mxu0 0.0
  %556 = vmatprep.subr.mxu0 0.0
  %557 = vmatpush1.msra.mxu0 0.0
  %558 = vmatprep.subr.mxu0 0.0
  %559 = vmatpush1.msra.mxu0 0.0
  %560 = vmatprep.subr.mxu0 0.0
  %561 = vmatpush1.msra.mxu0 0.0
  %562 = vmatprep.subr.mxu0 0.0
  %563 = vmatpush1.msra.mxu0 0.0
  %564 = vmatprep.subr.mxu0 0.0
  %565 = vmatpush1.msra.mxu0 0.0
  %566 = vmatprep.subr.mxu0 0.0
  %567 = vmatpush1.msra.mxu0 0.0
  %568 = vmatprep.subr.mxu0 0.0
  %569 = vmatpush1.msra.mxu0 0.0
  %570 = vmatprep.subr.mxu0 0.0
  %571 = vmatpush1.msra.mxu0 0.0
  %572 = vmatprep.subr.mxu0 0.0
  %573 = vmatpush1.msra.mxu0 0.0
  %574 = vmatprep.subr.mxu0 0.0
  %575 = vmatpush1.msra.mxu0 0.0
  %576 = vmatprep.subr.mxu0 0.0
  %577 = vmatpush1.msra.mxu0 0.0
  %578 = vmatprep.mubr.f32.mxu0 0.0
  %579 = vmatmul.mubr.f32.gmra.mrb[0].mxu0 %v49
  %v580 = vpop.f32.mrb[0].mxu0
  %v581 = vadd.f32 %v436, %v580
  %v582 = vpop.f32.mrb[0].mxu0
  %583 = vmatprep.mubr.f32.mxu0 0.0
  %584 = vmatmul.mubr.f32.gmra.mrb[0].mxu0 %v50
  %v585 = vpop.f32.mrb[0].mxu0
  %v586 = vadd.f32 %v441, %v585
  %v587 = vpop.f32.mrb[0].mxu0
  %588 = vmatprep.mubr.f32.mxu0 0.0
  %589 = vmatmul.mubr.f32.gmra.mrb[0].mxu0 %v51
  %v590 = vpop.f32.mrb[0].mxu0
  %v591 = vadd.f32 %v446, %v590
  %v592 = vpop.f32.mrb[0].mxu0
  %593 = vmatprep.mubr.f32.mxu0 0.0
  %594 = vmatmul.mubr.f32.gmra.mrb[0].mxu0 %v52
  %v595 = vpop.f32.mrb[0].mxu0
  %v596 = vadd.f32 %v451, %v595
  %v597 = vpop.f32.mrb[0].mxu0
  %598 = vmatprep.mubr.f32.mxu0 0.0
  %599 = vmatmul.mubr.f32.gmra.mrb[0].mxu0 %v53
  %v600 = vpop.f32.mrb[0].mxu0
  %v601 = vadd.f32 %v456, %v600
  %v602 = vpop.f32.mrb[0].mxu0
  %603 = vmatprep.mubr.f32.mxu0 0.0
  %604 = vmatmul.mubr.f32.gmra.mrb[0].mxu0 %v54
  %v605 = vpop.f32.mrb[0].mxu0
  %v606 = vadd.f32 %v461, %v605
  %v607 = vpop.f32.mrb[0].mxu0
  %608 = vmatprep.mubr.f32.mxu0 0.0
  %609 = vmatmul.mubr.f32.gmra.mrb[0].mxu0 %v55
  %v610 = vpop.f32.mrb[0].mxu0
  %v611 = vadd.f32 %v466, %v610
  %v612 = vpop.f32.mrb[0].mxu0
  %613 = vmatprep.mubr.f32.mxu0 0.0
  %614 = vmatmul.mubr.f32.gmra.mrb[0].mxu0 %v56
  %v615 = vpop.f32.mrb[0].mxu0
  %v616 = vadd.f32 %v471, %v615
  %v617 = vpop.f32.mrb[0].mxu0
  %618 = vmatprep.mubr.f32.mxu0 0.0
  %619 = vmatmul.mubr.f32.gmra.mrb[0].mxu0 %v57
  %v620 = vpop.f32.mrb[0].mxu0
  %v621 = vadd.f32 %v476, %v620
  %v622 = vpop.f32.mrb[0].mxu0
  %623 = vmatprep.mubr.f32.mxu0 0.0
  %624 = vmatmul.mubr.f32.gmra.mrb[0].mxu0 %v58
  %v625 = vpop.f32.mrb[0].mxu0
  %v626 = vadd.f32 %v481, %v625
  %v627 = vpop.f32.mrb[0].mxu0
  %628 = vmatprep.mubr.f32.mxu0 0.0
  %629 = vmatmul.mubr.f32.gmra.mrb[0].mxu0 %v59
  %v630 = vpop.f32.mrb[0].mxu0
  %v631 = vadd.f32 %v486, %v630
  %v632 = vpop.f32.mrb[0].mxu0
  %633 = vmatprep.mubr.f32.mxu0 0.0
  %634 = vmatmul.mubr.f32.gmra.mrb[0].mxu0 %v60
  %v635 = vpop.f32.mrb[0].mxu0
  %v636 = vadd.f32 %v491, %v635
  %v637 = vpop.f32.mrb[0].mxu0
  %638 = vmatprep.mubr.f32.mxu0 0.0
  %639 = vmatmul.mubr.f32.gmra.mrb[0].mxu0 %v61
  %v640 = vpop.f32.mrb[0].mxu0
  %v641 = vadd.f32 %v496, %v640
  %v642 = vpop.f32.mrb[0].mxu0
  %643 = vmatprep.mubr.f32.mxu0 0.0
  %644 = vmatmul.mubr.f32.gmra.mrb[0].mxu0 %v62
  %v645 = vpop.f32.mrb[0].mxu0
  %v646 = vadd.f32 %v501, %v645
  %v647 = vpop.f32.mrb[0].mxu0
  %648 = vmatprep.mubr.f32.mxu0 0.0
  %649 = vmatmul.mubr.f32.gmra.mrb[0].mxu0 %v63
  %v650 = vpop.f32.mrb[0].mxu0
  %v651 = vadd.f32 %v506, %v650
  %v652 = vpop.f32.mrb[0].mxu0
  %653 = vmatprep.mubr.f32.mxu0 0.0
  %654 = vmatmul.mubr.f32.gmra.mrb[0].mxu0 %v64
  %v655 = vpop.f32.mrb[0].mxu0
  %v656 = vadd.f32 %v511, %v655
  %v657 = vpop.f32.mrb[0].mxu0
  %658 = vdwg.mxu0
  %v659 = vld [vmem:[%s5] sm:$0xff]
  %v660 = vld [vmem:[%s5 + $0x8] sm:$0xff]
  %v661 = vld [vmem:[%s5 + $0x10] sm:$0xff]
  %v662 = vld [vmem:[%s5 + $0x18] sm:$0xff]
  %v663 = vld [vmem:[%s5 + $0x20] sm:$0xff]
  %v664 = vld [vmem:[%s5 + $0x28] sm:$0xff]
  %v665 = vld [vmem:[%s5 + $0x30] sm:$0xff]
  %v666 = vld [vmem:[%s5 + $0x38] sm:$0xff]
  %v667 = vld [vmem:[%s5 + $0x40] sm:$0xff]
  %v668 = vld [vmem:[%s5 + $0x48] sm:$0xff]
  %v669 = vld [vmem:[%s5 + $0x50] sm:$0xff]
  %v670 = vld [vmem:[%s5 + $0x58] sm:$0xff]
  %v671 = vld [vmem:[%s5 + $0x60] sm:$0xff]
  %v672 = vld [vmem:[%s5 + $0x68] sm:$0xff]
  %v673 = vld [vmem:[%s5 + $0x70] sm:$0xff]
  %v674 = vld [vmem:[%s5 + $0x78] sm:$0xff]
  %675 = vmatprep.subr.mxu0 0.0
  %676 = vmatpush1.msra.mxu0 %v659
  %677 = vmatprep.subr.mxu0 0.0
  %678 = vmatpush1.msra.mxu0 %v660
  %679 = vmatprep.subr.mxu0 0.0
  %680 = vmatpush1.msra.mxu0 %v661
  %681 = vmatprep.subr.mxu0 0.0
  %682 = vmatpush1.msra.mxu0 %v662
  %683 = vmatprep.subr.mxu0 0.0
  %684 = vmatpush1.msra.mxu0 %v663
  %685 = vmatprep.subr.mxu0 0.0
  %686 = vmatpush1.msra.mxu0 %v664
  %687 = vmatprep.subr.mxu0 0.0
  %688 = vmatpush1.msra.mxu0 %v665
  %689 = vmatprep.subr.mxu0 0.0
  %690 = vmatpush1.msra.mxu0 %v666
  %691 = vmatprep.subr.mxu0 0.0
  %692 = vmatpush1.msra.mxu0 %v667
  %693 = vmatprep.subr.mxu0 0.0
  %694 = vmatpush1.msra.mxu0 %v668
  %695 = vmatprep.subr.mxu0 0.0
  %696 = vmatpush1.msra.mxu0 %v669
  %697 = vmatprep.subr.mxu0 0.0
  %698 = vmatpush1.msra.mxu0 %v670
  %699 = vmatprep.subr.mxu0 0.0
  %700 = vmatpush1.msra.mxu0 %v671
  %701 = vmatprep.subr.mxu0 0.0
  %702 = vmatpush1.msra.mxu0 %v672
  %703 = vmatprep.subr.mxu0 0.0
  %704 = vmatpush1.msra.mxu0 %v673
  %705 = vmatprep.subr.mxu0 0.0
  %706 = vmatpush1.msra.mxu0 %v674
  %707 = vmatprep.subr.mxu0 0.0
  %708 = vmatpush1.msra.mxu0 0.0
  %709 = vmatprep.subr.mxu0 0.0
  %710 = vmatpush1.msra.mxu0 0.0
  %711 = vmatprep.subr.mxu0 0.0
  %712 = vmatpush1.msra.mxu0 0.0
  %713 = vmatprep.subr.mxu0 0.0
  %714 = vmatpush1.msra.mxu0 0.0
  %715 = vmatprep.subr.mxu0 0.0
  %716 = vmatpush1.msra.mxu0 0.0
  %717 = vmatprep.subr.mxu0 0.0
  %718 = vmatpush1.msra.mxu0 0.0
  %719 = vmatprep.subr.mxu0 0.0
  %720 = vmatpush1.msra.mxu0 0.0
  %721 = vmatprep.subr.mxu0 0.0
  %722 = vmatpush1.msra.mxu0 0.0
  %723 = vmatprep.subr.mxu0 0.0
  %724 = vmatpush1.msra.mxu0 0.0
  %725 = vmatprep.subr.mxu0 0.0
  %726 = vmatpush1.msra.mxu0 0.0
  %727 = vmatprep.subr.mxu0 0.0
  %728 = vmatpush1.msra.mxu0 0.0
  %729 = vmatprep.subr.mxu0 0.0
  %730 = vmatpush1.msra.mxu0 0.0
  %731 = vmatprep.subr.mxu0 0.0
  %732 = vmatpush1.msra.mxu0 0.0
  %733 = vmatprep.subr.mxu0 0.0
  %734 = vmatpush1.msra.mxu0 0.0
  %735 = vmatprep.subr.mxu0 0.0
  %736 = vmatpush1.msra.mxu0 0.0
  %737 = vmatprep.subr.mxu0 0.0
  %738 = vmatpush1.msra.mxu0 0.0
  %739 = vmatprep.mubr.f32.mxu0 0.0
  %740 = vmatmul.mubr.f32.gmra.mrb[0].mxu0 %v113
  %v741 = vpop.f32.mrb[0].mxu0
  %v742 = vadd.f32 0.0, %v741
  %v743 = vpop.f32.mrb[0].mxu0
  %744 = vmatprep.mubr.f32.mxu0 0.0
  %745 = vmatmul.mubr.f32.gmra.mrb[0].mxu0 %v114
  %v746 = vpop.f32.mrb[0].mxu0
  %v747 = vadd.f32 0.0, %v746
  %v748 = vpop.f32.mrb[0].mxu0
  %749 = vmatprep.mubr.f32.mxu0 0.0
  %750 = vmatmul.mubr.f32.gmra.mrb[0].mxu0 %v115
  %v751 = vpop.f32.mrb[0].mxu0
  %v752 = vadd.f32 0.0, %v751
  %v753 = vpop.f32.mrb[0].mxu0
  %754 = vmatprep.mubr.f32.mxu0 0.0
  %755 = vmatmul.mubr.f32.gmra.mrb[0].mxu0 %v116
  %v756 = vpop.f32.mrb[0].mxu0
  %v757 = vadd.f32 0.0, %v756
  %v758 = vpop.f32.mrb[0].mxu0
  %759 = vmatprep.mubr.f32.mxu0 0.0
  %760 = vmatmul.mubr.f32.gmra.mrb[0].mxu0 %v117
  %v761 = vpop.f32.mrb[0].mxu0
  %v762 = vadd.f32 0.0, %v761
  %v763 = vpop.f32.mrb[0].mxu0
  %764 = vmatprep.mubr.f32.mxu0 0.0
  %765 = vmatmul.mubr.f32.gmra.mrb[0].mxu0 %v118
  %v766 = vpop.f32.mrb[0].mxu0
  %v767 = vadd.f32 0.0, %v766
  %v768 = vpop.f32.mrb[0].mxu0
  %769 = vmatprep.mubr.f32.mxu0 0.0
  %770 = vmatmul.mubr.f32.gmra.mrb[0].mxu0 %v119
  %v771 = vpop.f32.mrb[0].mxu0
  %v772 = vadd.f32 0.0, %v771
  %v773 = vpop.f32.mrb[0].mxu0
  %774 = vmatprep.mubr.f32.mxu0 0.0
  %775 = vmatmul.mubr.f32.gmra.mrb[0].mxu0 %v120
  %v776 = vpop.f32.mrb[0].mxu0
  %v777 = vadd.f32 0.0, %v776
  %v778 = vpop.f32.mrb[0].mxu0
  %779 = vmatprep.mubr.f32.mxu0 0.0
  %780 = vmatmul.mubr.f32.gmra.mrb[0].mxu0 %v121
  %v781 = vpop.f32.mrb[0].mxu0
  %v782 = vadd.f32 0.0, %v781
  %v783 = vpop.f32.mrb[0].mxu0
  %784 = vmatprep.mubr.f32.mxu0 0.0
  %785 = vmatmul.mubr.f32.gmra.mrb[0].mxu0 %v122
  %v786 = vpop.f32.mrb[0].mxu0
  %v787 = vadd.f32 0.0, %v786
  %v788 = vpop.f32.mrb[0].mxu0
  %789 = vmatprep.mubr.f32.mxu0 0.0
  %790 = vmatmul.mubr.f32.gmra.mrb[0].mxu0 %v123
  %v791 = vpop.f32.mrb[0].mxu0
  %v792 = vadd.f32 0.0, %v791
  %v793 = vpop.f32.mrb[0].mxu0
  %794 = vmatprep.mubr.f32.mxu0 0.0
  %795 = vmatmul.mubr.f32.gmra.mrb[0].mxu0 %v124
  %v796 = vpop.f32.mrb[0].mxu0
  %v797 = vadd.f32 0.0, %v796
  %v798 = vpop.f32.mrb[0].mxu0
  %799 = vmatprep.mubr.f32.mxu0 0.0
  %800 = vmatmul.mubr.f32.gmra.mrb[0].mxu0 %v125
  %v801 = vpop.f32.mrb[0].mxu0
  %v802 = vadd.f32 0.0, %v801
  %v803 = vpop.f32.mrb[0].mxu0
  %804 = vmatprep.mubr.f32.mxu0 0.0
  %805 = vmatmul.mubr.f32.gmra.mrb[0].mxu0 %v126
  %v806 = vpop.f32.mrb[0].mxu0
  %v807 = vadd.f32 0.0, %v806
  %v808 = vpop.f32.mrb[0].mxu0
  %809 = vmatprep.mubr.f32.mxu0 0.0
  %810 = vmatmul.mubr.f32.gmra.mrb[0].mxu0 %v127
  %v811 = vpop.f32.mrb[0].mxu0
  %v812 = vadd.f32 0.0, %v811
  %v813 = vpop.f32.mrb[0].mxu0
  %814 = vmatprep.mubr.f32.mxu0 0.0
  %815 = vmatmul.mubr.f32.gmra.mrb[0].mxu0 %v128
  %v816 = vpop.f32.mrb[0].mxu0
  %v817 = vadd.f32 0.0, %v816
  %v818 = vpop.f32.mrb[0].mxu0
  %819 = vdwg.mxu0
  %v820 = vadd.f32 %v581, %v742
  %v821 = vadd.f32 %v586, %v747
  %v822 = vadd.f32 %v591, %v752
  %v823 = vadd.f32 %v596, %v757
  %v824 = vadd.f32 %v601, %v762
  %v825 = vadd.f32 %v606, %v767
  %v826 = vadd.f32 %v611, %v772
  %v827 = vadd.f32 %v616, %v777
  %v828 = vadd.f32 %v621, %v782
  %v829 = vadd.f32 %v626, %v787
  %v830 = vadd.f32 %v631, %v792
  %v831 = vadd.f32 %v636, %v797
  %v832 = vadd.f32 %v641, %v802
  %v833 = vadd.f32 %v646, %v807
  %v834 = vadd.f32 %v651, %v812
  %v835 = vadd.f32 %v656, %v817
  %v836 = vmul.f32 %v820, %v321
  %v837 = vmul.f32 %v821, %v322
  %v838 = vmul.f32 %v822, %v323
  %v839 = vmul.f32 %v823, %v324
  %v840 = vmul.f32 %v824, %v325
  %v841 = vmul.f32 %v825, %v326
  %v842 = vmul.f32 %v826, %v327
  %v843 = vmul.f32 %v827, %v328
  %v844 = vmul.f32 %v828, %v329
  %v845 = vmul.f32 %v829, %v330
  %v846 = vmul.f32 %v830, %v331
  %v847 = vmul.f32 %v831, %v332
  %v848 = vmul.f32 %v832, %v333
  %v849 = vmul.f32 %v833, %v334
  %v850 = vmul.f32 %v834, %v335
  %v851 = vmul.f32 %v835, %v336
  %v852 = vld [vmem:[%s6] sm:$0x1]
  %v854 = vlaneseq
  %v855 = vshrl.u32 %v854, 7
  %v856 = vsub.s32 0, %v855
  %v857 = vrot.slane %v852, %v856
  %v859 = vadd.f32 %v836, %v857
  %v860 = vadd.f32 %v837, %v857
  %v861 = vadd.f32 %v838, %v857
  %v862 = vadd.f32 %v839, %v857
  %v863 = vadd.f32 %v840, %v857
  %v864 = vadd.f32 %v841, %v857
  %v865 = vadd.f32 %v842, %v857
  %v866 = vadd.f32 %v843, %v857
  %v867 = vadd.f32 %v844, %v857
  %v868 = vadd.f32 %v845, %v857
  %v869 = vadd.f32 %v846, %v857
  %v870 = vadd.f32 %v847, %v857
  %v871 = vadd.f32 %v848, %v857
  %v872 = vadd.f32 %v849, %v857
  %v873 = vadd.f32 %v850, %v857
  %v874 = vadd.f32 %v851, %v857
  %v875 = vmax.f32 %v859, 0.0
  %v876 = vmax.f32 %v860, 0.0
  %v877 = vmax.f32 %v861, 0.0
  %v878 = vmax.f32 %v862, 0.0
  %v879 = vmax.f32 %v863, 0.0
  %v880 = vmax.f32 %v864, 0.0
  %v881 = vmax.f32 %v865, 0.0
  %v882 = vmax.f32 %v866, 0.0
  %v883 = vmax.f32 %v867, 0.0
  %v884 = vmax.f32 %v868, 0.0
  %v885 = vmax.f32 %v869, 0.0
  %v886 = vmax.f32 %v870, 0.0
  %v887 = vmax.f32 %v871, 0.0
  %v888 = vmax.f32 %v872, 0.0
  %v889 = vmax.f32 %v873, 0.0
  %v890 = vmax.f32 %v874, 0.0
  %v891 = vld [vmem:[%s7] sm:$0x1]
  %v893 = vlaneseq
  %v894 = vshrl.u32 %v893, 7
  %v895 = vsub.s32 0, %v894
  %v896 = vrot.slane %v891, %v895
  %v898 = vmul.f32 %v875, %v896
  %v899 = vmul.f32 %v876, %v896
  %v900 = vmul.f32 %v877, %v896
  %v901 = vmul.f32 %v878, %v896
  %v902 = vmul.f32 %v879, %v896
  %v903 = vmul.f32 %v880, %v896
  %v904 = vmul.f32 %v881, %v896
  %v905 = vmul.f32 %v882, %v896
  %v906 = vmul.f32 %v883, %v896
  %v907 = vmul.f32 %v884, %v896
  %v908 = vmul.f32 %v885, %v896
  %v909 = vmul.f32 %v886, %v896
  %v910 = vmul.f32 %v887, %v896
  %v911 = vmul.f32 %v888, %v896
  %v912 = vmul.f32 %v889, %v896
  %v913 = vmul.f32 %v890, %v896
  %914 = vadd.xlane.f32.xlu0 %v898
  %v915 = vpop.xlane.xlu0 %914
  %916 = vadd.xlane.f32.xlu0 %v899
  %v917 = vpop.xlane.xlu0 %916
  %918 = vadd.xlane.f32.xlu0 %v900
  %v919 = vpop.xlane.xlu0 %918
  %920 = vadd.xlane.f32.xlu0 %v901
  %v921 = vpop.xlane.xlu0 %920
  %922 = vadd.xlane.f32.xlu0 %v902
  %v923 = vpop.xlane.xlu0 %922
  %924 = vadd.xlane.f32.xlu0 %v903
  %v925 = vpop.xlane.xlu0 %924
  %926 = vadd.xlane.f32.xlu0 %v904
  %v927 = vpop.xlane.xlu0 %926
  %928 = vadd.xlane.f32.xlu0 %v905
  %v929 = vpop.xlane.xlu0 %928
  %930 = vadd.xlane.f32.xlu0 %v906
  %v931 = vpop.xlane.xlu0 %930
  %932 = vadd.xlane.f32.xlu0 %v907
  %v933 = vpop.xlane.xlu0 %932
  %934 = vadd.xlane.f32.xlu0 %v908
  %v935 = vpop.xlane.xlu0 %934
  %936 = vadd.xlane.f32.xlu0 %v909
  %v937 = vpop.xlane.xlu0 %936
  %938 = vadd.xlane.f32.xlu0 %v910
  %v939 = vpop.xlane.xlu0 %938
  %940 = vadd.xlane.f32.xlu0 %v911
  %v941 = vpop.xlane.xlu0 %940
  %942 = vadd.xlane.f32.xlu0 %v912
  %v943 = vpop.xlane.xlu0 %942
  %944 = vadd.xlane.f32.xlu0 %v913
  %v945 = vpop.xlane.xlu0 %944
  %s946 = sld [smem:[#allocation2]]
  %v947 = vstv %s946
  %v948 = vadd.f32 %v915, %v947
  %v949 = vadd.f32 %v917, %v947
  %v950 = vadd.f32 %v919, %v947
  %v951 = vadd.f32 %v921, %v947
  %v952 = vadd.f32 %v923, %v947
  %v953 = vadd.f32 %v925, %v947
  %v954 = vadd.f32 %v927, %v947
  %v955 = vadd.f32 %v929, %v947
  %v956 = vadd.f32 %v931, %v947
  %v957 = vadd.f32 %v933, %v947
  %v958 = vadd.f32 %v935, %v947
  %v959 = vadd.f32 %v937, %v947
  %v960 = vadd.f32 %v939, %v947
  %v961 = vadd.f32 %v941, %v947
  %v962 = vadd.f32 %v943, %v947
  %v963 = vadd.f32 %v945, %v947
  %v964 = vxor.u32 %v948, 2147483648
  %v965 = vxor.u32 %v949, 2147483648
  %v966 = vxor.u32 %v950, 2147483648
  %v967 = vxor.u32 %v951, 2147483648
  %v968 = vxor.u32 %v952, 2147483648
  %v969 = vxor.u32 %v953, 2147483648
  %v970 = vxor.u32 %v954, 2147483648
  %v971 = vxor.u32 %v955, 2147483648
  %v972 = vxor.u32 %v956, 2147483648
  %v973 = vxor.u32 %v957, 2147483648
  %v974 = vxor.u32 %v958, 2147483648
  %v975 = vxor.u32 %v959, 2147483648
  %v976 = vxor.u32 %v960, 2147483648
  %v977 = vxor.u32 %v961, 2147483648
  %v978 = vxor.u32 %v962, 2147483648
  %v979 = vxor.u32 %v963, 2147483648
  %v980 = vmul.f32 %v964, 1.442695
  %v981 = vpow.pop %v980
  %v982 = vmul.f32 %v965, 1.442695
  %v983 = vpow.pop %v982
  %v984 = vmul.f32 %v966, 1.442695
  %v985 = vpow.pop %v984
  %v986 = vmul.f32 %v967, 1.442695
  %v987 = vpow.pop %v986
  %v988 = vmul.f32 %v968, 1.442695
  %v989 = vpow.pop %v988
  %v990 = vmul.f32 %v969, 1.442695
  %v991 = vpow.pop %v990
  %v992 = vmul.f32 %v970, 1.442695
  %v993 = vpow.pop %v992
  %v994 = vmul.f32 %v971, 1.442695
  %v995 = vpow.pop %v994
  %v996 = vmul.f32 %v972, 1.442695
  %v997 = vpow.pop %v996
  %v998 = vmul.f32 %v973, 1.442695
  %v999 = vpow.pop %v998
  %v1000 = vmul.f32 %v974, 1.442695
  %v1001 = vpow.pop %v1000
  %v1002 = vmul.f32 %v975, 1.442695
  %v1003 = vpow.pop %v1002
  %v1004 = vmul.f32 %v976, 1.442695
  %v1005 = vpow.pop %v1004
  %v1006 = vmul.f32 %v977, 1.442695
  %v1007 = vpow.pop %v1006
  %v1008 = vmul.f32 %v978, 1.442695
  %v1009 = vpow.pop %v1008
  %v1010 = vmul.f32 %v979, 1.442695
  %v1011 = vpow.pop %v1010
  %v1012 = vadd.f32 %v981, 1.0
  %v1013 = vadd.f32 %v983, 1.0
  %v1014 = vadd.f32 %v985, 1.0
  %v1015 = vadd.f32 %v987, 1.0
  %v1016 = vadd.f32 %v989, 1.0
  %v1017 = vadd.f32 %v991, 1.0
  %v1018 = vadd.f32 %v993, 1.0
  %v1019 = vadd.f32 %v995, 1.0
  %v1020 = vadd.f32 %v997, 1.0
  %v1021 = vadd.f32 %v999, 1.0
  %v1022 = vadd.f32 %v1001, 1.0
  %v1023 = vadd.f32 %v1003, 1.0
  %v1024 = vadd.f32 %v1005, 1.0
  %v1025 = vadd.f32 %v1007, 1.0
  %v1026 = vadd.f32 %v1009, 1.0
  %v1027 = vadd.f32 %v1011, 1.0
  %v1028 = vrcp.pop %v1012
  %v1029 = vmul.f32 1.0, %v1028
  %v1030 = vrcp.pop %v1013
  %v1031 = vmul.f32 1.0, %v1030
  %v1032 = vrcp.pop %v1014
  %v1033 = vmul.f32 1.0, %v1032
  %v1034 = vrcp.pop %v1015
  %v1035 = vmul.f32 1.0, %v1034
  %v1036 = vrcp.pop %v1016
  %v1037 = vmul.f32 1.0, %v1036
  %v1038 = vrcp.pop %v1017
  %v1039 = vmul.f32 1.0, %v1038
  %v1040 = vrcp.pop %v1018
  %v1041 = vmul.f32 1.0, %v1040
  %v1042 = vrcp.pop %v1019
  %v1043 = vmul.f32 1.0, %v1042
  %v1044 = vrcp.pop %v1020
  %v1045 = vmul.f32 1.0, %v1044
  %v1046 = vrcp.pop %v1021
  %v1047 = vmul.f32 1.0, %v1046
  %v1048 = vrcp.pop %v1022
  %v1049 = vmul.f32 1.0, %v1048
  %v1050 = vrcp.pop %v1023
  %v1051 = vmul.f32 1.0, %v1050
  %v1052 = vrcp.pop %v1024
  %v1053 = vmul.f32 1.0, %v1052
  %v1054 = vrcp.pop %v1025
  %v1055 = vmul.f32 1.0, %v1054
  %v1056 = vrcp.pop %v1026
  %v1057 = vmul.f32 1.0, %v1056
  %v1058 = vrcp.pop %v1027
  %v1059 = vmul.f32 1.0, %v1058
  %v1076 = vlaneseq
  %v1077 = vand.u32 %v1076, 127
  %v1078 = vlaneseq
  %v1079 = vshrl.u32 %v1078, 7
  %v1080 = vsub.s32 %v1077, %v1079
  %v1081 = vrot.slane %v1029, %v1080
  %v1082 = vadd.s32 %v1077, 4294967288
  %v1083 = vlaneseq
  %v1084 = vshrl.u32 %v1083, 7
  %v1085 = vsub.s32 %v1082, %v1084
  %v1086 = vrot.slane %v1031, %v1085
  %vm1087 = vcmask 130112
  %v1088 = vsel %vm1087, %v1086, %v1081
  %v1089 = vadd.s32 %v1077, 4294967280
  %v1090 = vlaneseq
  %v1091 = vshrl.u32 %v1090, 7
  %v1092 = vsub.s32 %v1089, %v1091
  %v1093 = vrot.slane %v1033, %v1092
  %vm1094 = vcmask 195712
  %v1095 = vsel %vm1094, %v1093, %v1088
  %v1096 = vadd.s32 %v1077, 4294967272
  %v1097 = vlaneseq
  %v1098 = vshrl.u32 %v1097, 7
  %v1099 = vsub.s32 %v1096, %v1098
  %v1100 = vrot.slane %v1035, %v1099
  %vm1101 = vcmask 261312
  %v1102 = vsel %vm1101, %v1100, %v1095
  %v1103 = vadd.s32 %v1077, 4294967264
  %v1104 = vlaneseq
  %v1105 = vshrl.u32 %v1104, 7
  %v1106 = vsub.s32 %v1103, %v1105
  %v1107 = vrot.slane %v1037, %v1106
  %vm1108 = vcmask 326912
  %v1109 = vsel %vm1108, %v1107, %v1102
  %v1110 = vadd.s32 %v1077, 4294967256
  %v1111 = vlaneseq
  %v1112 = vshrl.u32 %v1111, 7
  %v1113 = vsub.s32 %v1110, %v1112
  %v1114 = vrot.slane %v1039, %v1113
  %vm1115 = vcmask 392512
  %v1116 = vsel %vm1115, %v1114, %v1109
  %v1117 = vadd.s32 %v1077, 4294967248
  %v1118 = vlaneseq
  %v1119 = vshrl.u32 %v1118, 7
  %v1120 = vsub.s32 %v1117, %v1119
  %v1121 = vrot.slane %v1041, %v1120
  %vm1122 = vcmask 458112
  %v1123 = vsel %vm1122, %v1121, %v1116
  %v1124 = vadd.s32 %v1077, 4294967240
  %v1125 = vlaneseq
  %v1126 = vshrl.u32 %v1125, 7
  %v1127 = vsub.s32 %v1124, %v1126
  %v1128 = vrot.slane %v1043, %v1127
  %vm1129 = vcmask 523712
  %v1130 = vsel %vm1129, %v1128, %v1123
  %v1131 = vadd.s32 %v1077, 4294967232
  %v1132 = vlaneseq
  %v1133 = vshrl.u32 %v1132, 7
  %v1134 = vsub.s32 %v1131, %v1133
  %v1135 = vrot.slane %v1045, %v1134
  %vm1136 = vcmask 589312
  %v1137 = vsel %vm1136, %v1135, %v1130
  %v1138 = vadd.s32 %v1077, 4294967224
  %v1139 = vlaneseq
  %v1140 = vshrl.u32 %v1139, 7
  %v1141 = vsub.s32 %v1138, %v1140
  %v1142 = vrot.slane %v1047, %v1141
  %vm1143 = vcmask 654912
  %v1144 = vsel %vm1143, %v1142, %v1137
  %v1145 = vadd.s32 %v1077, 4294967216
  %v1146 = vlaneseq
  %v1147 = vshrl.u32 %v1146, 7
  %v1148 = vsub.s32 %v1145, %v1147
  %v1149 = vrot.slane %v1049, %v1148
  %vm1150 = vcmask 720512
  %v1151 = vsel %vm1150, %v1149, %v1144
  %v1152 = vadd.s32 %v1077, 4294967208
  %v1153 = vlaneseq
  %v1154 = vshrl.u32 %v1153, 7
  %v1155 = vsub.s32 %v1152, %v1154
  %v1156 = vrot.slane %v1051, %v1155
  %vm1157 = vcmask 786112
  %v1158 = vsel %vm1157, %v1156, %v1151
  %v1159 = vadd.s32 %v1077, 4294967200
  %v1160 = vlaneseq
  %v1161 = vshrl.u32 %v1160, 7
  %v1162 = vsub.s32 %v1159, %v1161
  %v1163 = vrot.slane %v1053, %v1162
  %vm1164 = vcmask 851712
  %v1165 = vsel %vm1164, %v1163, %v1158
  %v1166 = vadd.s32 %v1077, 4294967192
  %v1167 = vlaneseq
  %v1168 = vshrl.u32 %v1167, 7
  %v1169 = vsub.s32 %v1166, %v1168
  %v1170 = vrot.slane %v1055, %v1169
  %vm1171 = vcmask 917312
  %v1172 = vsel %vm1171, %v1170, %v1165
  %v1173 = vadd.s32 %v1077, 4294967184
  %v1174 = vlaneseq
  %v1175 = vshrl.u32 %v1174, 7
  %v1176 = vsub.s32 %v1173, %v1175
  %v1177 = vrot.slane %v1057, %v1176
  %vm1178 = vcmask 982912
  %v1179 = vsel %vm1178, %v1177, %v1172
  %v1180 = vadd.s32 %v1077, 4294967176
  %v1181 = vlaneseq
  %v1182 = vshrl.u32 %v1181, 7
  %v1183 = vsub.s32 %v1180, %v1182
  %v1184 = vrot.slane %v1059, %v1183
  %vm1185 = vcmask 1048512
  %v1186 = vsel %vm1185, %v1184, %v1179
  %1188 = vst [vmem:[%s9] sm:$0x1] %v1186
  // Predicated region
  $region38: #{rgcn_ae_forward.7} parent=0 // pred_check
    _
  $region39: #{rgcn_ae_forward.7} parent=0 // pred_check_branch
    %1190 = sbr.rel (0) target = $region41
  $region40: #{rgcn_ae_forward.7} parent=0 // pred_region
    _
  $region41: #{rgcn_ae_forward.7} parent=0 // pred_fallthru
    _
  // Predicated region
  $region42: #{rgcn_ae_forward.7} parent=0 // pred_check
    _
  $region43: #{rgcn_ae_forward.7} parent=0 // pred_check_branch
    %1192 = sbr.rel (0) target = $region45
  $region44: #{rgcn_ae_forward.7} parent=0 // pred_region
    _
  $region45: #{rgcn_ae_forward.7} parent=0 // pred_fallthru
    _

// kernel: rgcn_ae_forward.9
$region0: #{rgcn_ae_forward.9}
  #allocation0 [shape = 'u32[]', space=smem, size = 0x4, offset = 0x4, fixed_abs, tag = 'smem constant byte address 0x4 - core index']
  #allocation1 [shape = 'u32[144,128]{1,0:T(1,128)}', space=vmem, size = 0x12000, scoped, tag = 'internal scratch']
  #allocation2 [shape = 'f32[64,128]{1,0:T(8,128)}', space=vmem, size = 0x8000, scoped, tag = 'scratch operand']
  %s0 = inlined_call_operand.vmem [shape: f32[64,128], index: 0, kind: input, shape index: {}]
  %s1 = inlined_call_operand.vmem [shape: f32[128,128], index: 1, kind: input, shape index: {}]
  %s2 = inlined_call_operand.vmem [shape: f32[1,128], index: 2, kind: input, shape index: {}]
  %s3 = inlined_call_operand.vmem [shape: bf16[64,128], index: 3, kind: input, shape index: {}]
  %s4 = inlined_call_operand.vmem [shape: f32[128,128], index: 4, kind: input, shape index: {}]
  %s5 = inlined_call_operand.hbm [shape: f32[64,128], index: 5, kind: output, shape index: {}]
  %s6 = sld [smem:[#allocation0]]
  $region38: #{rgcn_ae_forward.9} parent=0
    _
  %s8 = ssub.s32 1, %s6
  %s9 = scalar_select 0, %s8, %s6
  $region1: #{rgcn_ae_forward.9} parent=0
    #allocation3 [shape = 'u8[32768]{0}', space=vmem, size = 0x8000, scoped, tag = 'output window, operand 0, single buffered']
    #allocation4 [shape = 's32[1]{0}', space=sflag, size = 0x4, scoped, tag = 'scoped memory for rgcn_ae_forward.9']
    %10 = vsyncpa [#allocation4], 0
    // Predicated region
    $region2: #{rgcn_ae_forward.9} parent=1 // pred_check
      _
    $region3: #{rgcn_ae_forward.9} parent=1 // pred_check_branch
      %12 = sbr.rel (0) target = $region5
    $region4: #{rgcn_ae_forward.9} parent=1 // pred_region
      _
    $region5: #{rgcn_ae_forward.9} parent=1 // pred_fallthru
      _
    // Predicated region
    $region6: #{rgcn_ae_forward.9} parent=1 // pred_check
      _
    $region7: #{rgcn_ae_forward.9} parent=1 // pred_check_branch
      %14 = sbr.rel (0) target = $region9
    $region8: #{rgcn_ae_forward.9} parent=1 // pred_region
      _
    $region9: #{rgcn_ae_forward.9} parent=1 // pred_fallthru
      _
    // Predicated region
    $region10: #{rgcn_ae_forward.9} parent=1 // pred_check
      _
    $region11: #{rgcn_ae_forward.9} parent=1 // pred_check_branch
      %16 = sbr.rel (0) target = $region13
    $region12: #{rgcn_ae_forward.9} parent=1 // pred_region
      _
    $region13: #{rgcn_ae_forward.9} parent=1 // pred_fallthru
      _
    // Predicated region
    $region14: #{rgcn_ae_forward.9} parent=1 // pred_check
      _
    $region15: #{rgcn_ae_forward.9} parent=1 // pred_check_branch
      %18 = sbr.rel (0) target = $region17
    $region16: #{rgcn_ae_forward.9} parent=1 // pred_region
      _
    $region17: #{rgcn_ae_forward.9} parent=1 // pred_fallthru
      _
    // Predicated region
    $region18: #{rgcn_ae_forward.9} parent=1 // pred_check
      _
    $region19: #{rgcn_ae_forward.9} parent=1 // pred_check_branch
      %20 = sbr.rel (0) target = $region21
    $region20: #{rgcn_ae_forward.9} parent=1 // pred_region
      _
    $region21: #{rgcn_ae_forward.9} parent=1 // pred_fallthru
      _
    %p21 = scmp.eq.s32.totalorder 0, 0
    // Predicated region
    $region22: #{rgcn_ae_forward.9} parent=1 // pred_check
      %p22 = pneg %p21
    $region23: #{rgcn_ae_forward.9} parent=1 // pred_check_branch
      %24 = sbr.rel (%p22) target = $region25
    $region24: #{rgcn_ae_forward.9} parent=1 // pred_region
      %v25 = vld [vmem:[%s0] sm:$0xff]
      %v26 = vld [vmem:[%s0 + $0x8] sm:$0xff]
      %v27 = vld [vmem:[%s0 + $0x10] sm:$0xff]
      %v28 = vld [vmem:[%s0 + $0x18] sm:$0xff]
      %v29 = vld [vmem:[%s0 + $0x20] sm:$0xff]
      %v30 = vld [vmem:[%s0 + $0x28] sm:$0xff]
      %v31 = vld [vmem:[%s0 + $0x30] sm:$0xff]
      %v32 = vld [vmem:[%s0 + $0x38] sm:$0xff]
      %v33 = vld [vmem:[%s1] sm:$0xff]
      %v34 = vld [vmem:[%s1 + $0x8] sm:$0xff]
      %v35 = vld [vmem:[%s1 + $0x10] sm:$0xff]
      %v36 = vld [vmem:[%s1 + $0x18] sm:$0xff]
      %v37 = vld [vmem:[%s1 + $0x20] sm:$0xff]
      %v38 = vld [vmem:[%s1 + $0x28] sm:$0xff]
      %v39 = vld [vmem:[%s1 + $0x30] sm:$0xff]
      %v40 = vld [vmem:[%s1 + $0x38] sm:$0xff]
      %v41 = vld [vmem:[%s1 + $0x40] sm:$0xff]
      %v42 = vld [vmem:[%s1 + $0x48] sm:$0xff]
      %v43 = vld [vmem:[%s1 + $0x50] sm:$0xff]
      %v44 = vld [vmem:[%s1 + $0x58] sm:$0xff]
      %v45 = vld [vmem:[%s1 + $0x60] sm:$0xff]
      %v46 = vld [vmem:[%s1 + $0x68] sm:$0xff]
      %v47 = vld [vmem:[%s1 + $0x70] sm:$0xff]
      %v48 = vld [vmem:[%s1 + $0x78] sm:$0xff]
      %v49 = vld [vmem:[%s2] sm:$0x1]
      %v51 = vlaneseq
      %v52 = vshrl.u32 %v51, 7
      %v53 = vsub.s32 0, %v52
      %v54 = vrot.slane %v49, %v53
      %56 = vmatprep.subr.mxu0 0.0
      %57 = vmatpush1.msra.mxu0 %v33
      %58 = vmatprep.subr.mxu0 0.0
      %59 = vmatpush1.msra.mxu0 %v34
      %60 = vmatprep.subr.mxu0 0.0
      %61 = vmatpush1.msra.mxu0 %v35
      %62 = vmatprep.subr.mxu0 0.0
      %63 = vmatpush1.msra.mxu0 %v36
      %64 = vmatprep.subr.mxu0 0.0
      %65 = vmatpush1.msra.mxu0 %v37
      %66 = vmatprep.subr.mxu0 0.0
      %67 = vmatpush1.msra.mxu0 %v38
      %68 = vmatprep.subr.mxu0 0.0
      %69 = vmatpush1.msra.mxu0 %v39
      %70 = vmatprep.subr.mxu0 0.0
      %71 = vmatpush1.msra.mxu0 %v40
      %72 = vmatprep.subr.mxu0 0.0
      %73 = vmatpush1.msra.mxu0 %v41
      %74 = vmatprep.subr.mxu0 0.0
      %75 = vmatpush1.msra.mxu0 %v42
      %76 = vmatprep.subr.mxu0 0.0
      %77 = vmatpush1.msra.mxu0 %v43
      %78 = vmatprep.subr.mxu0 0.0
      %79 = vmatpush1.msra.mxu0 %v44
      %80 = vmatprep.subr.mxu0 0.0
      %81 = vmatpush1.msra.mxu0 %v45
      %82 = vmatprep.subr.mxu0 0.0
      %83 = vmatpush1.msra.mxu0 %v46
      %84 = vmatprep.subr.mxu0 0.0
      %85 = vmatpush1.msra.mxu0 %v47
      %86 = vmatprep.subr.mxu0 0.0
      %87 = vmatpush1.msra.mxu0 %v48
      %88 = vmatprep.subr.mxu0 0.0
      %89 = vmatpush1.msra.mxu0 0.0
      %90 = vmatprep.subr.mxu0 0.0
      %91 = vmatpush1.msra.mxu0 0.0
      %92 = vmatprep.subr.mxu0 0.0
      %93 = vmatpush1.msra.mxu0 0.0
      %94 = vmatprep.subr.mxu0 0.0
      %95 = vmatpush1.msra.mxu0 0.0
      %96 = vmatprep.subr.mxu0 0.0
      %97 = vmatpush1.msra.mxu0 0.0
      %98 = vmatprep.subr.mxu0 0.0
      %99 = vmatpush1.msra.mxu0 0.0
      %100 = vmatprep.subr.mxu0 0.0
      %101 = vmatpush1.msra.mxu0 0.0
      %102 = vmatprep.subr.mxu0 0.0
      %103 = vmatpush1.msra.mxu0 0.0
      %104 = vmatprep.subr.mxu0 0.0
      %105 = vmatpush1.msra.mxu0 0.0
      %106 = vmatprep.subr.mxu0 0.0
      %107 = vmatpush1.msra.mxu0 0.0
      %108 = vmatprep.subr.mxu0 0.0
      %109 = vmatpush1.msra.mxu0 0.0
      %110 = vmatprep.subr.mxu0 0.0
      %111 = vmatpush1.msra.mxu0 0.0
      %112 = vmatprep.subr.mxu0 0.0
      %113 = vmatpush1.msra.mxu0 0.0
      %114 = vmatprep.subr.mxu0 0.0
      %115 = vmatpush1.msra.mxu0 0.0
      %116 = vmatprep.subr.mxu0 0.0
      %117 = vmatpush1.msra.mxu0 0.0
      %118 = vmatprep.subr.mxu0 0.0
      %119 = vmatpush1.msra.mxu0 0.0
      %120 = vmatprep.mubr.f32.mxu0 0.0
      %121 = vmatmul.mubr.f32.gmra.mrb[0].mxu0 %v25
      %v122 = vpop.f32.mrb[0].mxu0
      %v123 = vadd.f32 %v54, %v122
      %v124 = vpop.f32.mrb[0].mxu0
      %125 = vmatprep.mubr.f32.mxu0 0.0
      %126 = vmatmul.mubr.f32.gmra.mrb[0].mxu0 %v26
      %v127 = vpop.f32.mrb[0].mxu0
      %v128 = vadd.f32 %v54, %v127
      %v129 = vpop.f32.mrb[0].mxu0
      %130 = vmatprep.mubr.f32.mxu0 0.0
      %131 = vmatmul.mubr.f32.gmra.mrb[0].mxu0 %v27
      %v132 = vpop.f32.mrb[0].mxu0
      %v133 = vadd.f32 %v54, %v132
      %v134 = vpop.f32.mrb[0].mxu0
      %135 = vmatprep.mubr.f32.mxu0 0.0
      %136 = vmatmul.mubr.f32.gmra.mrb[0].mxu0 %v28
      %v137 = vpop.f32.mrb[0].mxu0
      %v138 = vadd.f32 %v54, %v137
      %v139 = vpop.f32.mrb[0].mxu0
      %140 = vmatprep.mubr.f32.mxu0 0.0
      %141 = vmatmul.mubr.f32.gmra.mrb[0].mxu0 %v29
      %v142 = vpop.f32.mrb[0].mxu0
      %v143 = vadd.f32 %v54, %v142
      %v144 = vpop.f32.mrb[0].mxu0
      %145 = vmatprep.mubr.f32.mxu0 0.0
      %146 = vmatmul.mubr.f32.gmra.mrb[0].mxu0 %v30
      %v147 = vpop.f32.mrb[0].mxu0
      %v148 = vadd.f32 %v54, %v147
      %v149 = vpop.f32.mrb[0].mxu0
      %150 = vmatprep.mubr.f32.mxu0 0.0
      %151 = vmatmul.mubr.f32.gmra.mrb[0].mxu0 %v31
      %v152 = vpop.f32.mrb[0].mxu0
      %v153 = vadd.f32 %v54, %v152
      %v154 = vpop.f32.mrb[0].mxu0
      %155 = vmatprep.mubr.f32.mxu0 0.0
      %156 = vmatmul.mubr.f32.gmra.mrb[0].mxu0 %v32
      %v157 = vpop.f32.mrb[0].mxu0
      %v158 = vadd.f32 %v54, %v157
      %v159 = vpop.f32.mrb[0].mxu0
      %160 = vdwg.mxu0
      %161 = vst [vmem:[#allocation2] sm:$0xff] %v123
      %162 = vst [vmem:[#allocation2 + $0x8] sm:$0xff] %v128
      %163 = vst [vmem:[#allocation2 + $0x10] sm:$0xff] %v133
      %164 = vst [vmem:[#allocation2 + $0x18] sm:$0xff] %v138
      %165 = vst [vmem:[#allocation2 + $0x20] sm:$0xff] %v143
      %166 = vst [vmem:[#allocation2 + $0x28] sm:$0xff] %v148
      %167 = vst [vmem:[#allocation2 + $0x30] sm:$0xff] %v153
      %168 = vst [vmem:[#allocation2 + $0x38] sm:$0xff] %v158
    $region25: #{rgcn_ae_forward.9} parent=1 // pred_fallthru
      _
    %v169 = vld [vmem:[#allocation2] sm:$0xff]
    %v170 = vld [vmem:[#allocation2 + $0x8] sm:$0xff]
    %v171 = vld [vmem:[#allocation2 + $0x10] sm:$0xff]
    %v172 = vld [vmem:[#allocation2 + $0x18] sm:$0xff]
    %v173 = vld [vmem:[#allocation2 + $0x20] sm:$0xff]
    %v174 = vld [vmem:[#allocation2 + $0x28] sm:$0xff]
    %v175 = vld [vmem:[#allocation2 + $0x30] sm:$0xff]
    %v176 = vld [vmem:[#allocation2 + $0x38] sm:$0xff]
    %v177 = vld [vmem:[%s3] sm:$0xf]
    %v178 = vld [vmem:[%s3 + $0x4] sm:$0xf]
    %v179 = vld [vmem:[%s3 + $0x8] sm:$0xf]
    %v180 = vld [vmem:[%s3 + $0xc] sm:$0xf]
    %v181 = vld [vmem:[%s3 + $0x10] sm:$0xf]
    %v182 = vld [vmem:[%s3 + $0x14] sm:$0xf]
    %v183 = vld [vmem:[%s3 + $0x18] sm:$0xf]
    %v184 = vld [vmem:[%s3 + $0x1c] sm:$0xf]
    %v185 = vunpack.c.l.bf16 %v177
    %v186 = vunpack.c.l.bf16 %v178
    %v187 = vunpack.c.l.bf16 %v179
    %v188 = vunpack.c.l.bf16 %v180
    %v189 = vunpack.c.l.bf16 %v181
    %v190 = vunpack.c.l.bf16 %v182
    %v191 = vunpack.c.l.bf16 %v183
    %v192 = vunpack.c.l.bf16 %v184
    %v193 = vld [vmem:[%s4] sm:$0xff]
    %v194 = vld [vmem:[%s4 + $0x8] sm:$0xff]
    %v195 = vld [vmem:[%s4 + $0x10] sm:$0xff]
    %v196 = vld [vmem:[%s4 + $0x18] sm:$0xff]
    %v197 = vld [vmem:[%s4 + $0x20] sm:$0xff]
    %v198 = vld [vmem:[%s4 + $0x28] sm:$0xff]
    %v199 = vld [vmem:[%s4 + $0x30] sm:$0xff]
    %v200 = vld [vmem:[%s4 + $0x38] sm:$0xff]
    %v201 = vld [vmem:[%s4 + $0x40] sm:$0xff]
    %v202 = vld [vmem:[%s4 + $0x48] sm:$0xff]
    %v203 = vld [vmem:[%s4 + $0x50] sm:$0xff]
    %v204 = vld [vmem:[%s4 + $0x58] sm:$0xff]
    %v205 = vld [vmem:[%s4 + $0x60] sm:$0xff]
    %v206 = vld [vmem:[%s4 + $0x68] sm:$0xff]
    %v207 = vld [vmem:[%s4 + $0x70] sm:$0xff]
    %v208 = vld [vmem:[%s4 + $0x78] sm:$0xff]
    %209 = vmatprep.subr.mxu0 0.0
    %210 = vmatpush1.msra.mxu0 %v193
    %211 = vmatprep.subr.mxu0 0.0
    %212 = vmatpush1.msra.mxu0 %v194
    %213 = vmatprep.subr.mxu0 0.0
    %214 = vmatpush1.msra.mxu0 %v195
    %215 = vmatprep.subr.mxu0 0.0
    %216 = vmatpush1.msra.mxu0 %v196
    %217 = vmatprep.subr.mxu0 0.0
    %218 = vmatpush1.msra.mxu0 %v197
    %219 = vmatprep.subr.mxu0 0.0
    %220 = vmatpush1.msra.mxu0 %v198
    %221 = vmatprep.subr.mxu0 0.0
    %222 = vmatpush1.msra.mxu0 %v199
    %223 = vmatprep.subr.mxu0 0.0
    %224 = vmatpush1.msra.mxu0 %v200
    %225 = vmatprep.subr.mxu0 0.0
    %226 = vmatpush1.msra.mxu0 %v201
    %227 = vmatprep.subr.mxu0 0.0
    %228 = vmatpush1.msra.mxu0 %v202
    %229 = vmatprep.subr.mxu0 0.0
    %230 = vmatpush1.msra.mxu0 %v203
    %231 = vmatprep.subr.mxu0 0.0
    %232 = vmatpush1.msra.mxu0 %v204
    %233 = vmatprep.subr.mxu0 0.0
    %234 = vmatpush1.msra.mxu0 %v205
    %235 = vmatprep.subr.mxu0 0.0
    %236 = vmatpush1.msra.mxu0 %v206
    %237 = vmatprep.subr.mxu0 0.0
    %238 = vmatpush1.msra.mxu0 %v207
    %239 = vmatprep.subr.mxu0 0.0
    %240 = vmatpush1.msra.mxu0 %v208
    %241 = vmatprep.subr.mxu0 0.0
    %242 = vmatpush1.msra.mxu0 0.0
    %243 = vmatprep.subr.mxu0 0.0
    %244 = vmatpush1.msra.mxu0 0.0
    %245 = vmatprep.subr.mxu0 0.0
    %246 = vmatpush1.msra.mxu0 0.0
    %247 = vmatprep.subr.mxu0 0.0
    %248 = vmatpush1.msra.mxu0 0.0
    %249 = vmatprep.subr.mxu0 0.0
    %250 = vmatpush1.msra.mxu0 0.0
    %251 = vmatprep.subr.mxu0 0.0
    %252 = vmatpush1.msra.mxu0 0.0
    %253 = vmatprep.subr.mxu0 0.0
    %254 = vmatpush1.msra.mxu0 0.0
    %255 = vmatprep.subr.mxu0 0.0
    %256 = vmatpush1.msra.mxu0 0.0
    %257 = vmatprep.subr.mxu0 0.0
    %258 = vmatpush1.msra.mxu0 0.0
    %259 = vmatprep.subr.mxu0 0.0
    %260 = vmatpush1.msra.mxu0 0.0
    %261 = vmatprep.subr.mxu0 0.0
    %262 = vmatpush1.msra.mxu0 0.0
    %263 = vmatprep.subr.mxu0 0.0
    %264 = vmatpush1.msra.mxu0 0.0
    %265 = vmatprep.subr.mxu0 0.0
    %266 = vmatpush1.msra.mxu0 0.0
    %267 = vmatprep.subr.mxu0 0.0
    %268 = vmatpush1.msra.mxu0 0.0
    %269 = vmatprep.subr.mxu0 0.0
    %270 = vmatpush1.msra.mxu0 0.0
    %271 = vmatprep.subr.mxu0 0.0
    %272 = vmatpush1.msra.mxu0 0.0
    %273 = vmatprep.mubr.f32.mxu0 0.0
    %274 = vmatmul.mubr.f32.gmra.mrb[0].mxu0 %v185
    %v275 = vpop.f32.mrb[0].mxu0
    %v276 = vadd.f32 0.0, %v275
    %v277 = vpop.f32.mrb[0].mxu0
    %278 = vmatprep.mubr.f32.mxu0 0.0
    %279 = vmatmul.mubr.f32.gmra.mrb[0].mxu0 %v186
    %v280 = vpop.f32.mrb[0].mxu0
    %v281 = vadd.f32 0.0, %v280
    %v282 = vpop.f32.mrb[0].mxu0
    %283 = vmatprep.mubr.f32.mxu0 0.0
    %284 = vmatmul.mubr.f32.gmra.mrb[0].mxu0 %v187
    %v285 = vpop.f32.mrb[0].mxu0
    %v286 = vadd.f32 0.0, %v285
    %v287 = vpop.f32.mrb[0].mxu0
    %288 = vmatprep.mubr.f32.mxu0 0.0
    %289 = vmatmul.mubr.f32.gmra.mrb[0].mxu0 %v188
    %v290 = vpop.f32.mrb[0].mxu0
    %v291 = vadd.f32 0.0, %v290
    %v292 = vpop.f32.mrb[0].mxu0
    %293 = vmatprep.mubr.f32.mxu0 0.0
    %294 = vmatmul.mubr.f32.gmra.mrb[0].mxu0 %v189
    %v295 = vpop.f32.mrb[0].mxu0
    %v296 = vadd.f32 0.0, %v295
    %v297 = vpop.f32.mrb[0].mxu0
    %298 = vmatprep.mubr.f32.mxu0 0.0
    %299 = vmatmul.mubr.f32.gmra.mrb[0].mxu0 %v190
    %v300 = vpop.f32.mrb[0].mxu0
    %v301 = vadd.f32 0.0, %v300
    %v302 = vpop.f32.mrb[0].mxu0
    %303 = vmatprep.mubr.f32.mxu0 0.0
    %304 = vmatmul.mubr.f32.gmra.mrb[0].mxu0 %v191
    %v305 = vpop.f32.mrb[0].mxu0
    %v306 = vadd.f32 0.0, %v305
    %v307 = vpop.f32.mrb[0].mxu0
    %308 = vmatprep.mubr.f32.mxu0 0.0
    %309 = vmatmul.mubr.f32.gmra.mrb[0].mxu0 %v192
    %v310 = vpop.f32.mrb[0].mxu0
    %v311 = vadd.f32 0.0, %v310
    %v312 = vpop.f32.mrb[0].mxu0
    %313 = vdwg.mxu0
    %v314 = vadd.f32 %v169, %v276
    %v315 = vadd.f32 %v170, %v281
    %v316 = vadd.f32 %v171, %v286
    %v317 = vadd.f32 %v172, %v291
    %v318 = vadd.f32 %v173, %v296
    %v319 = vadd.f32 %v174, %v301
    %v320 = vadd.f32 %v175, %v306
    %v321 = vadd.f32 %v176, %v311
    %322 = vst [vmem:[#allocation2] sm:$0xff] %v314
    %323 = vst [vmem:[#allocation2 + $0x8] sm:$0xff] %v315
    %324 = vst [vmem:[#allocation2 + $0x10] sm:$0xff] %v316
    %325 = vst [vmem:[#allocation2 + $0x18] sm:$0xff] %v317
    %326 = vst [vmem:[#allocation2 + $0x20] sm:$0xff] %v318
    %327 = vst [vmem:[#allocation2 + $0x28] sm:$0xff] %v319
    %328 = vst [vmem:[#allocation2 + $0x30] sm:$0xff] %v320
    %329 = vst [vmem:[#allocation2 + $0x38] sm:$0xff] %v321
    // Predicated region
    $region26: #{rgcn_ae_forward.9} parent=1 // pred_check
      %p330 = pneg %p21
    $region27: #{rgcn_ae_forward.9} parent=1 // pred_check_branch
      %332 = sbr.rel (%p330) target = $region29
    $region28: #{rgcn_ae_forward.9} parent=1 // pred_region
      %v333 = vld [vmem:[#allocation2] sm:$0xff]
      %v334 = vld [vmem:[#allocation2 + $0x8] sm:$0xff]
      %v335 = vld [vmem:[#allocation2 + $0x10] sm:$0xff]
      %v336 = vld [vmem:[#allocation2 + $0x18] sm:$0xff]
      %v337 = vld [vmem:[#allocation2 + $0x20] sm:$0xff]
      %v338 = vld [vmem:[#allocation2 + $0x28] sm:$0xff]
      %v339 = vld [vmem:[#allocation2 + $0x30] sm:$0xff]
      %v340 = vld [vmem:[#allocation2 + $0x38] sm:$0xff]
      %341 = vst [vmem:[#allocation3] sm:$0xff] %v333
      %342 = vst [vmem:[#allocation3 + $0x8] sm:$0xff] %v334
      %343 = vst [vmem:[#allocation3 + $0x10] sm:$0xff] %v335
      %344 = vst [vmem:[#allocation3 + $0x18] sm:$0xff] %v336
      %345 = vst [vmem:[#allocation3 + $0x20] sm:$0xff] %v337
      %346 = vst [vmem:[#allocation3 + $0x28] sm:$0xff] %v338
      %347 = vst [vmem:[#allocation3 + $0x30] sm:$0xff] %v339
      %348 = vst [vmem:[#allocation3 + $0x38] sm:$0xff] %v340
    $region29: #{rgcn_ae_forward.9} parent=1 // pred_fallthru
      _
    // Predicated region
    $region30: #{rgcn_ae_forward.9} parent=1 // pred_check
      _
    $region31: #{rgcn_ae_forward.9} parent=1 // pred_check_branch
      %350 = sbr.rel (0) target = $region33
    $region32: #{rgcn_ae_forward.9} parent=1 // pred_region
      %s352 = ssub.s32 1024, 1024
      %353 = vsyncadd [#allocation4], %s352
      %s354 = sshll.u32 [#allocation3], 4
      %s355 = int_to_ptr.vmem [resolvable:$true] %s354
      %360 = dma.vmem_to_hbm [thread:$0]  %s355, 1024, %s5, [#allocation4], 128, 128, 8
    $region33: #{rgcn_ae_forward.9} parent=1 // pred_fallthru
      _
    // Predicated region
    $region34: #{rgcn_ae_forward.9} parent=1 // pred_check
      _
    $region35: #{rgcn_ae_forward.9} parent=1 // pred_check_branch
      %362 = sbr.rel (0) target = $region37
    $region36: #{rgcn_ae_forward.9} parent=1 // pred_region
      %363 = dma.done [#allocation4], 1024
    $region37: #{rgcn_ae_forward.9} parent=1 // pred_fallthru
      _
    %364 = vsyncpa [#allocation4], 1

</llo_original>
